<compile_context>
chip_gen: v6e
topology: v6e:2x2x1
jax: 0.10.0
libtpu: 0.0.40
codegen_flags: <defaults>
</compile_context>

<pallas_src>
import functools

import jax
import jax.numpy as jnp
from jax.experimental import pallas as pl
from jax.experimental.pallas import tpu as pltpu

# Deterministic stand-in for `(random.random() > 0.5) * 2 - 1` in __init__.
SHIFT_DIRECTION = 1


def _kernel(x_ref, w_ref, nf_ref, nl_ref, rfix_ref, o_ref, *, W, HW, Cout, shift):
    """One block of Bt images, flattened spatially.

    x_ref   : (N, C)          N = Bt*H*W, flat index p = b*H*W + n*W + o
    w_ref   : (3, C, 2*Cout)  w_ref[l, j, k*Cout + i] = w[j, l, k, i]
    nf_ref  : (N, 1) f32      1.0 except 0.0 where o == 0
    nl_ref  : (N, 1) f32      1.0 except 0.0 where o == W-1
    rfix_ref: (N, 1) f32      1.0 at rows needing the H-roll wrap fix
    o_ref   : (N, Cout)       o_ref[p, i] == t_5[m, n, i, o]
    """
    N = x_ref.shape[0]

    def rot(a, s):
        # circular roll along the flat spatial (sublane) axis, np.roll semantics
        return pltpu.roll(a, s % N, axis=0)

    x = x_ref[...]                      # (N, C)
    nf = nf_ref[...]                    # (N, 1)
    nl = nl_ref[...]                    # (N, 1)
    rfix = rfix_ref[...]                # (N, 1)

    # Conv taps l=0 / l=2: shift along the flat axis; every position that
    # would leak across a row (or image) boundary is exactly a zero-padded tap.
    x_m1 = rot(x, 1) * nf               # x[., o-1, .]  (0 at o == 0)
    x_p1 = rot(x, -1) * nl              # x[., o+1, .]  (0 at o == W-1)

    # acc[p, k*Cout + i] = t3[m, n, o, k, i] : three MXU matmuls, N = 2*Cout.
    acc = jnp.dot(x_m1, w_ref[0], preferred_element_type=jnp.float32)
    acc = acc + jnp.dot(x, w_ref[1], preferred_element_type=jnp.float32)
    acc = acc + jnp.dot(x_p1, w_ref[2], preferred_element_type=jnp.float32)
    acc0 = acc[:, :Cout]                # k = 0
    acc1 = acc[:, Cout:]                # k = 1

    # Roll of the interleaved (o, k) axis of length 2W, then pair-sum:
    #   shift=+1: out[o] = acc0[o] + acc1[(o-1) mod W]
    #   shift=-1: out[o] = acc1[o] + acc0[(o+1) mod W]
    # The "mod W" wrap is fixed with the boundary masks.
    if shift == 1:
        out = acc0 + rot(acc1, 1) * nf + rot(acc1, 1 - W) * (1.0 - nf)
    else:
        out = acc1 + rot(acc0, -1) * nl + rot(acc0, W - 1) * (1.0 - nl)

    # Fused row roll (t_5): roll by `shift` along n, circular within each image.
    if shift == 1:
        # rfix == 1.0 at n == 0 rows
        out = rot(out, W) * (1.0 - rfix) + rot(out, W - HW) * rfix
    else:
        # rfix == 1.0 at n == H-1 rows
        out = rot(out, -W) * (1.0 - rfix) + rot(out, HW - W) * rfix

    o_ref[...] = out.astype(o_ref.dtype)


def _pick_batch_tile(B, HW):
    """Largest batch tile <= 8 dividing B with a sublane-aligned block."""
    for bt in (8, 4, 2, 1):
        if B % bt == 0 and (bt * HW) % 8 == 0:
            return bt
    return B  # full batch in one block (block == full dim is always legal)


def kernel_generated_4_forward(x_nchw, w, shift=SHIFT_DIRECTION):
    """x_nchw: (B, C, H, W) float32; w: (C, 3, 2, Cout) float32."""
    B, C, H, W = x_nchw.shape
    Cout = w.shape[-1]
    HW = H * W
    Bt = _pick_batch_tile(B, HW)
    N = Bt * HW

    # ---- XLA-side layout prep (one pass each) -----------------------------
    # NCHW -> flat (B*H*W, C): channels on the lane axis, spatial on sublanes.
    x_flat = jnp.transpose(x_nchw, (0, 2, 3, 1)).reshape(B * HW, C)
    # (C, 3, 2, Cout) -> (3, C, 2*Cout), last axis ordered k*Cout + i.
    w_cat = jnp.transpose(w, (1, 0, 2, 3)).reshape(3, C, 2 * Cout)

    # (N, 1) f32 boundary masks over one block's flat index p = b*HW + n*W + o
    # (identical for every block since Bt*HW is a multiple of HW).
    p = jnp.arange(N, dtype=jnp.int32)
    o_idx = p % W
    n_idx = (p // W) % H
    nf = (o_idx != 0).astype(jnp.float32).reshape(N, 1)
    nl = (o_idx != W - 1).astype(jnp.float32).reshape(N, 1)
    if shift == 1:
        rfix = (n_idx == 0).astype(jnp.float32).reshape(N, 1)
    else:
        rfix = (n_idx == H - 1).astype(jnp.float32).reshape(N, 1)

    out_flat = pl.pallas_call(
        functools.partial(_kernel, W=W, HW=HW, Cout=Cout, shift=shift),
        out_shape=jax.ShapeDtypeStruct((B * HW, Cout), x_nchw.dtype),
        grid=(B // Bt,),
        in_specs=[
            pl.BlockSpec((N, C), lambda b: (b, 0)),
            pl.BlockSpec((3, C, 2 * Cout), lambda b: (0, 0, 0)),
            pl.BlockSpec((N, 1), lambda b: (0, 0)),
            pl.BlockSpec((N, 1), lambda b: (0, 0)),
            pl.BlockSpec((N, 1), lambda b: (0, 0)),
        ],
        out_specs=pl.BlockSpec((N, Cout), lambda b: (b, 0)),
        compiler_params=pltpu.CompilerParams(
            dimension_semantics=("parallel",),
            vmem_limit_bytes=48 * 1024 * 1024,
        ),
    )(x_flat, w_cat, nf, nl, rfix)

    # out_flat[b*HW + n*W + o, i] == t_5[b, n, i, o]; final permute to (m,i,o,n).
    y = jnp.transpose(out_flat.reshape(B, H, W, Cout), (0, 3, 2, 1))
    return y


def _reference(x, w, shift):
    """Pure-JAX replica of the torch forward (generalized shapes)."""
    B, C, H, W = x.shape
    Cout = w.shape[-1]
    xp = jnp.pad(x, ((0, 0), (0, 0), (0, 0), (1, 1)))
    # patches[m, j, n, o, l] = x[m, j, n, o + l - 1]  (zero-padded)
    patches = jnp.stack([xp[:, :, :, l:l + W] for l in range(3)], axis=-1)
    t3 = jnp.einsum('mjnol,jlki->mnoki', patches, w,
                    precision=jax.lax.Precision.HIGHEST)    # (B,H,W,2,Cout)
    t4 = jnp.transpose(t3, (0, 1, 4, 2, 3)).reshape(B, H, Cout, 2 * W)
    t4 = jnp.roll(t4, shift, axis=3)
    t4 = t4.reshape(B, H, Cout, W, 2).sum(axis=4)            # (B,H,Cout,W)
    t5 = jnp.roll(t4, shift, axis=1)
    return jnp.transpose(t5, (0, 2, 3, 1))                   # (B,Cout,W,H)


if __name__ == "__main__":
    # Small shapes consistent with the module's structure
    # (the module itself uses B=128, C=Cout=256, H=W=14 -> Bt=8, grid=16).
    B, C, H, W, Cout = 2, 128, 14, 14, 128

    key = jax.random.PRNGKey(0)
    kx, kw = jax.random.split(key)
    x = jax.random.normal(kx, (B, C, H, W), dtype=jnp.float32)
    w = jax.random.normal(kw, (C, 3, 2, Cout), dtype=jnp.float32)

    fwd = jax.jit(kernel_generated_4_forward, static_argnames="shift")

    for s in (1, -1):
        y = jax.block_until_ready(fwd(x, w, shift=s))
        y_ref = _reference(x, w, s)
        assert y.shape == (B, Cout, W, H), y.shape
        assert jnp.allclose(y, y_ref, rtol=1e-4, atol=1e-4), (
            s, float(jnp.max(jnp.abs(y - y_ref)))
        )
    print("KERNEL_OK")
</pallas_src>

<mosaic_0001>
module attributes {stable_mosaic.version = 11 : i64} {
  func.func @_kernel(%arg0: i32, %arg1: memref<392x128xf32, #tpu.memory_space<vmem>>, %arg2: memref<3x128x256xf32, #tpu.memory_space<vmem>>, %arg3: memref<392x1xf32, #tpu.memory_space<vmem>>, %arg4: memref<392x1xf32, #tpu.memory_space<vmem>>, %arg5: memref<392x1xf32, #tpu.memory_space<vmem>>, %arg6: memref<392x128xf32, #tpu.memory_space<vmem>>) attributes {dimension_semantics = [#tpu.dimension_semantics<parallel>], iteration_bounds = array<i64: 1>, scalar_prefetch = 0 : i64, scratch_operands = 0 : i64, tpu.core_type = #tpu.core_type<tc>, window_params = [{transform_indices = @transform_0, window_bounds = array<i64: 392, 128>}, {pipeline_mode = #tpu.pipeline_mode<synchronous>, transform_indices = @transform_1, window_bounds = array<i64: 3, 128, 256>}, {pipeline_mode = #tpu.pipeline_mode<synchronous>, transform_indices = @transform_2, window_bounds = array<i64: 392, 1>}, {pipeline_mode = #tpu.pipeline_mode<synchronous>, transform_indices = @transform_3, window_bounds = array<i64: 392, 1>}, {pipeline_mode = #tpu.pipeline_mode<synchronous>, transform_indices = @transform_4, window_bounds = array<i64: 392, 1>}, {transform_indices = @transform_5, window_bounds = array<i64: 392, 128>}]} {
    %c0 = arith.constant 0 : index
    %c0_0 = arith.constant 0 : index
    %0 = vector.load %arg1[%c0, %c0_0] : memref<392x128xf32, #tpu.memory_space<vmem>>, vector<392x128xf32>
    %c0_1 = arith.constant 0 : index
    %c0_2 = arith.constant 0 : index
    %1 = vector.load %arg3[%c0_1, %c0_2] : memref<392x1xf32, #tpu.memory_space<vmem>>, vector<392x1xf32>
    %c0_3 = arith.constant 0 : index
    %c0_4 = arith.constant 0 : index
    %2 = vector.load %arg4[%c0_3, %c0_4] : memref<392x1xf32, #tpu.memory_space<vmem>>, vector<392x1xf32>
    %c0_5 = arith.constant 0 : index
    %c0_6 = arith.constant 0 : index
    %3 = vector.load %arg5[%c0_5, %c0_6] : memref<392x1xf32, #tpu.memory_space<vmem>>, vector<392x1xf32>
    %c1_i32 = arith.constant 1 : i32
    %4 = tpu.dynamic_rotate %0 by %c1_i32 dim 0 : vector<392x128xf32>, i32 -> vector<392x128xf32>
    %5 = vector.broadcast %1 : vector<392x1xf32> to vector<392x128xf32>
    %6 = arith.mulf %4, %5 : vector<392x128xf32>
    %c391_i32 = arith.constant 391 : i32
    %7 = tpu.dynamic_rotate %0 by %c391_i32 dim 0 : vector<392x128xf32>, i32 -> vector<392x128xf32>
    %8 = vector.broadcast %2 : vector<392x1xf32> to vector<392x128xf32>
    %9 = arith.mulf %7, %8 : vector<392x128xf32>
    %c0_7 = arith.constant 0 : index
    %c0_8 = arith.constant 0 : index
    %c0_9 = arith.constant 0 : index
    %10 = vector.load %arg2[%c0_7, %c0_8, %c0_9] : memref<3x128x256xf32, #tpu.memory_space<vmem>>, vector<1x128x256xf32>
    %11 = vector.shape_cast %10 : vector<1x128x256xf32> to vector<128x256xf32>
    %cst = arith.constant dense<0.000000e+00> : vector<392x256xf32>
    %12 = tpu.matmul %6, %11, %cst {dimension_numbers = #tpu.dot_dimension_numbers<[1], [0], [0], [1], [0, 0, 1, 1], [], []>} : vector<392x128xf32>, vector<128x256xf32>, vector<392x256xf32> -> vector<392x256xf32>
    %c1 = arith.constant 1 : index
    %c0_10 = arith.constant 0 : index
    %c0_11 = arith.constant 0 : index
    %13 = vector.load %arg2[%c1, %c0_10, %c0_11] : memref<3x128x256xf32, #tpu.memory_space<vmem>>, vector<1x128x256xf32>
    %14 = vector.shape_cast %13 : vector<1x128x256xf32> to vector<128x256xf32>
    %cst_12 = arith.constant dense<0.000000e+00> : vector<392x256xf32>
    %15 = tpu.matmul %0, %14, %cst_12 {dimension_numbers = #tpu.dot_dimension_numbers<[1], [0], [0], [1], [0, 0, 1, 1], [], []>} : vector<392x128xf32>, vector<128x256xf32>, vector<392x256xf32> -> vector<392x256xf32>
    %16 = arith.addf %12, %15 : vector<392x256xf32>
    %c2 = arith.constant 2 : index
    %c0_13 = arith.constant 0 : index
    %c0_14 = arith.constant 0 : index
    %17 = vector.load %arg2[%c2, %c0_13, %c0_14] : memref<3x128x256xf32, #tpu.memory_space<vmem>>, vector<1x128x256xf32>
    %18 = vector.shape_cast %17 : vector<1x128x256xf32> to vector<128x256xf32>
    %cst_15 = arith.constant dense<0.000000e+00> : vector<392x256xf32>
    %19 = tpu.matmul %9, %18, %cst_15 {dimension_numbers = #tpu.dot_dimension_numbers<[1], [0], [0], [1], [0, 0, 1, 1], [], []>} : vector<392x128xf32>, vector<128x256xf32>, vector<392x256xf32> -> vector<392x256xf32>
    %20 = arith.addf %16, %19 : vector<392x256xf32>
    %21 = vector.extract_strided_slice %20 {offsets = [0, 0], sizes = [392, 128], strides = [1, 1]} : vector<392x256xf32> to vector<392x128xf32>
    %22 = vector.extract_strided_slice %20 {offsets = [0, 128], sizes = [392, 128], strides = [1, 1]} : vector<392x256xf32> to vector<392x128xf32>
    %c1_i32_16 = arith.constant 1 : i32
    %23 = tpu.dynamic_rotate %22 by %c1_i32_16 dim 0 : vector<392x128xf32>, i32 -> vector<392x128xf32>
    %24 = vector.broadcast %1 : vector<392x1xf32> to vector<392x128xf32>
    %25 = arith.mulf %23, %24 : vector<392x128xf32>
    %26 = arith.addf %21, %25 : vector<392x128xf32>
    %c379_i32 = arith.constant 379 : i32
    %27 = tpu.dynamic_rotate %22 by %c379_i32 dim 0 : vector<392x128xf32>, i32 -> vector<392x128xf32>
    %cst_17 = arith.constant 1.000000e+00 : f32
    %28 = vector.broadcast %cst_17 : f32 to vector<392x1xf32>
    %29 = arith.subf %28, %1 : vector<392x1xf32>
    %30 = vector.broadcast %29 : vector<392x1xf32> to vector<392x128xf32>
    %31 = arith.mulf %27, %30 : vector<392x128xf32>
    %32 = arith.addf %26, %31 : vector<392x128xf32>
    %c14_i32 = arith.constant 14 : i32
    %33 = tpu.dynamic_rotate %32 by %c14_i32 dim 0 : vector<392x128xf32>, i32 -> vector<392x128xf32>
    %cst_18 = arith.constant 1.000000e+00 : f32
    %34 = vector.broadcast %cst_18 : f32 to vector<392x1xf32>
    %35 = arith.subf %34, %3 : vector<392x1xf32>
    %36 = vector.broadcast %35 : vector<392x1xf32> to vector<392x128xf32>
    %37 = arith.mulf %33, %36 : vector<392x128xf32>
    %c210_i32 = arith.constant 210 : i32
    %38 = tpu.dynamic_rotate %32 by %c210_i32 dim 0 : vector<392x128xf32>, i32 -> vector<392x128xf32>
    %39 = vector.broadcast %3 : vector<392x1xf32> to vector<392x128xf32>
    %40 = arith.mulf %38, %39 : vector<392x128xf32>
    %41 = arith.addf %37, %40 : vector<392x128xf32>
    %c0_19 = arith.constant 0 : index
    %c0_20 = arith.constant 0 : index
    %42 = vector.load %arg6[%c0_19, %c0_20] : memref<392x128xf32, #tpu.memory_space<vmem>>, vector<392x128xf32>
    tpu.vector_store %arg6[%c0_19, %c0_20], %41 {strides = array<i32>} : memref<392x128xf32, #tpu.memory_space<vmem>>, vector<392x128xf32>,
    return
  }
  func.func @transform_0(%arg0: i32) -> (i32, i32) {
    %c0_i32 = arith.constant 0 : i32
    %c0_i32_0 = arith.constant 0 : i32
    return %arg0, %c0_i32 : i32, i32
  }
  func.func @transform_1(%arg0: i32) -> (i32, i32, i32) {
    %c0_i32 = arith.constant 0 : i32
    %c0_i32_0 = arith.constant 0 : i32
    %c0_i32_1 = arith.constant 0 : i32
    %c0_i32_2 = arith.constant 0 : i32
    return %c0_i32, %c0_i32_0, %c0_i32_1 : i32, i32, i32
  }
  func.func @transform_2(%arg0: i32) -> (i32, i32) {
    %c0_i32 = arith.constant 0 : i32
    %c0_i32_0 = arith.constant 0 : i32
    %c0_i32_1 = arith.constant 0 : i32
    return %c0_i32, %c0_i32_0 : i32, i32
  }
  func.func @transform_3(%arg0: i32) -> (i32, i32) {
    %c0_i32 = arith.constant 0 : i32
    %c0_i32_0 = arith.constant 0 : i32
    %c0_i32_1 = arith.constant 0 : i32
    return %c0_i32, %c0_i32_0 : i32, i32
  }
  func.func @transform_4(%arg0: i32) -> (i32, i32) {
    %c0_i32 = arith.constant 0 : i32
    %c0_i32_0 = arith.constant 0 : i32
    %c0_i32_1 = arith.constant 0 : i32
    return %c0_i32, %c0_i32_0 : i32, i32
  }
  func.func @transform_5(%arg0: i32) -> (i32, i32) {
    %c0_i32 = arith.constant 0 : i32
    %c0_i32_0 = arith.constant 0 : i32
    return %arg0, %c0_i32 : i32, i32
  }
}

</mosaic_0001>

<llo_original>
// kernel: kernel_generated_4_forward.1
$region0: #{kernel_generated_4_forward.1}
  #allocation0 [shape = 'u32[]', space=smem, size = 0x4, offset = 0x4, fixed_abs, tag = 'smem constant byte address 0x4 - core index']
  #allocation1 [shape = 'u32[144,128]{1,0:T(1,128)}', space=vmem, size = 0x12000, scoped, tag = 'internal scratch']
  %s0 = inlined_call_operand.vmem [shape: f32[392,128], index: 0, kind: input, shape index: {}]
  %s1 = inlined_call_operand.vmem [shape: f32[3,128,256], index: 1, kind: input, shape index: {}]
  %s2 = inlined_call_operand.vmem [shape: f32[392,1], index: 2, kind: input, shape index: {}]
  %s3 = inlined_call_operand.vmem [shape: f32[392,1], index: 3, kind: input, shape index: {}]
  %s4 = inlined_call_operand.vmem [shape: f32[392,1], index: 4, kind: input, shape index: {}]
  %s5 = inlined_call_operand.vmem [shape: f32[392,128], index: 5, kind: output, shape index: {}]
  %s6 = sld [smem:[#allocation0]]
  $region30: #{kernel_generated_4_forward.1} parent=0
    _
  %s8 = ssub.s32 1, %s6
  %s9 = scalar_select 0, %s8, %s6
  // Predicated region
  $region2: #{kernel_generated_4_forward.1} parent=0 // pred_check
    _
  $region3: #{kernel_generated_4_forward.1} parent=0 // pred_check_branch
    %11 = sbr.rel (0) target = $region5
  $region4: #{kernel_generated_4_forward.1} parent=0 // pred_region
    _
  $region5: #{kernel_generated_4_forward.1} parent=0 // pred_fallthru
    _
  // Predicated region
  $region6: #{kernel_generated_4_forward.1} parent=0 // pred_check
    _
  $region7: #{kernel_generated_4_forward.1} parent=0 // pred_check_branch
    %13 = sbr.rel (0) target = $region9
  $region8: #{kernel_generated_4_forward.1} parent=0 // pred_region
    _
  $region9: #{kernel_generated_4_forward.1} parent=0 // pred_fallthru
    _
  // Predicated region
  $region10: #{kernel_generated_4_forward.1} parent=0 // pred_check
    _
  $region11: #{kernel_generated_4_forward.1} parent=0 // pred_check_branch
    %15 = sbr.rel (0) target = $region13
  $region12: #{kernel_generated_4_forward.1} parent=0 // pred_region
    _
  $region13: #{kernel_generated_4_forward.1} parent=0 // pred_fallthru
    _
  // Predicated region
  $region14: #{kernel_generated_4_forward.1} parent=0 // pred_check
    _
  $region15: #{kernel_generated_4_forward.1} parent=0 // pred_check_branch
    %17 = sbr.rel (0) target = $region17
  $region16: #{kernel_generated_4_forward.1} parent=0 // pred_region
    _
  $region17: #{kernel_generated_4_forward.1} parent=0 // pred_fallthru
    _
  // Predicated region
  $region18: #{kernel_generated_4_forward.1} parent=0 // pred_check
    _
  $region19: #{kernel_generated_4_forward.1} parent=0 // pred_check_branch
    %19 = sbr.rel (0) target = $region21
  $region20: #{kernel_generated_4_forward.1} parent=0 // pred_region
    _
  $region21: #{kernel_generated_4_forward.1} parent=0 // pred_fallthru
    _
  %v20 = vld [vmem:[%s0] sm:$0xff]
  %v21 = vld [vmem:[%s0 + $0x8] sm:$0xff]
  %v22 = vld [vmem:[%s0 + $0x10] sm:$0xff]
  %v23 = vld [vmem:[%s0 + $0x18] sm:$0xff]
  %v24 = vld [vmem:[%s0 + $0x20] sm:$0xff]
  %v25 = vld [vmem:[%s0 + $0x28] sm:$0xff]
  %v26 = vld [vmem:[%s0 + $0x30] sm:$0xff]
  %v27 = vld [vmem:[%s0 + $0x38] sm:$0xff]
  %v28 = vld [vmem:[%s0 + $0x40] sm:$0xff]
  %v29 = vld [vmem:[%s0 + $0x48] sm:$0xff]
  %v30 = vld [vmem:[%s0 + $0x50] sm:$0xff]
  %v31 = vld [vmem:[%s0 + $0x58] sm:$0xff]
  %v32 = vld [vmem:[%s0 + $0x60] sm:$0xff]
  %v33 = vld [vmem:[%s0 + $0x68] sm:$0xff]
  %v34 = vld [vmem:[%s0 + $0x70] sm:$0xff]
  %v35 = vld [vmem:[%s0 + $0x78] sm:$0xff]
  %v36 = vld [vmem:[%s0 + $0x80] sm:$0xff]
  %v37 = vld [vmem:[%s0 + $0x88] sm:$0xff]
  %v38 = vld [vmem:[%s0 + $0x90] sm:$0xff]
  %v39 = vld [vmem:[%s0 + $0x98] sm:$0xff]
  %v40 = vld [vmem:[%s0 + $0xa0] sm:$0xff]
  %v41 = vld [vmem:[%s0 + $0xa8] sm:$0xff]
  %v42 = vld [vmem:[%s0 + $0xb0] sm:$0xff]
  %v43 = vld [vmem:[%s0 + $0xb8] sm:$0xff]
  %v44 = vld [vmem:[%s0 + $0xc0] sm:$0xff]
  %v45 = vld [vmem:[%s0 + $0xc8] sm:$0xff]
  %v46 = vld [vmem:[%s0 + $0xd0] sm:$0xff]
  %v47 = vld [vmem:[%s0 + $0xd8] sm:$0xff]
  %v48 = vld [vmem:[%s0 + $0xe0] sm:$0xff]
  %v49 = vld [vmem:[%s0 + $0xe8] sm:$0xff]
  %v50 = vld [vmem:[%s0 + $0xf0] sm:$0xff]
  %v51 = vld [vmem:[%s0 + $0xf8] sm:$0xff]
  %v52 = vld [vmem:[%s0 + $0x100] sm:$0xff]
  %v53 = vld [vmem:[%s0 + $0x108] sm:$0xff]
  %v54 = vld [vmem:[%s0 + $0x110] sm:$0xff]
  %v55 = vld [vmem:[%s0 + $0x118] sm:$0xff]
  %v56 = vld [vmem:[%s0 + $0x120] sm:$0xff]
  %v57 = vld [vmem:[%s0 + $0x128] sm:$0xff]
  %v58 = vld [vmem:[%s0 + $0x130] sm:$0xff]
  %v59 = vld [vmem:[%s0 + $0x138] sm:$0xff]
  %v60 = vld [vmem:[%s0 + $0x140] sm:$0xff]
  %v61 = vld [vmem:[%s0 + $0x148] sm:$0xff]
  %v62 = vld [vmem:[%s0 + $0x150] sm:$0xff]
  %v63 = vld [vmem:[%s0 + $0x158] sm:$0xff]
  %v64 = vld [vmem:[%s0 + $0x160] sm:$0xff]
  %v65 = vld [vmem:[%s0 + $0x168] sm:$0xff]
  %v66 = vld [vmem:[%s0 + $0x170] sm:$0xff]
  %v67 = vld [vmem:[%s0 + $0x178] sm:$0xff]
  %v68 = vld [vmem:[%s0 + $0x180] sm:$0xff]
  %v69 = vld [vmem:[%s2] sm:$0xff]
  %v70 = vld [vmem:[%s2 + $0x8] sm:$0xff]
  %v71 = vld [vmem:[%s2 + $0x10] sm:$0xff]
  %v72 = vld [vmem:[%s2 + $0x18] sm:$0xff]
  %v73 = vld [vmem:[%s2 + $0x20] sm:$0xff]
  %v74 = vld [vmem:[%s2 + $0x28] sm:$0xff]
  %v75 = vld [vmem:[%s2 + $0x30] sm:$0xff]
  %v76 = vld [vmem:[%s2 + $0x38] sm:$0xff]
  %v77 = vld [vmem:[%s2 + $0x40] sm:$0xff]
  %v78 = vld [vmem:[%s2 + $0x48] sm:$0xff]
  %v79 = vld [vmem:[%s2 + $0x50] sm:$0xff]
  %v80 = vld [vmem:[%s2 + $0x58] sm:$0xff]
  %v81 = vld [vmem:[%s2 + $0x60] sm:$0xff]
  %v82 = vld [vmem:[%s2 + $0x68] sm:$0xff]
  %v83 = vld [vmem:[%s2 + $0x70] sm:$0xff]
  %v84 = vld [vmem:[%s2 + $0x78] sm:$0xff]
  %v85 = vld [vmem:[%s2 + $0x80] sm:$0xff]
  %v86 = vld [vmem:[%s2 + $0x88] sm:$0xff]
  %v87 = vld [vmem:[%s2 + $0x90] sm:$0xff]
  %v88 = vld [vmem:[%s2 + $0x98] sm:$0xff]
  %v89 = vld [vmem:[%s2 + $0xa0] sm:$0xff]
  %v90 = vld [vmem:[%s2 + $0xa8] sm:$0xff]
  %v91 = vld [vmem:[%s2 + $0xb0] sm:$0xff]
  %v92 = vld [vmem:[%s2 + $0xb8] sm:$0xff]
  %v93 = vld [vmem:[%s2 + $0xc0] sm:$0xff]
  %v94 = vld [vmem:[%s2 + $0xc8] sm:$0xff]
  %v95 = vld [vmem:[%s2 + $0xd0] sm:$0xff]
  %v96 = vld [vmem:[%s2 + $0xd8] sm:$0xff]
  %v97 = vld [vmem:[%s2 + $0xe0] sm:$0xff]
  %v98 = vld [vmem:[%s2 + $0xe8] sm:$0xff]
  %v99 = vld [vmem:[%s2 + $0xf0] sm:$0xff]
  %v100 = vld [vmem:[%s2 + $0xf8] sm:$0xff]
  %v101 = vld [vmem:[%s2 + $0x100] sm:$0xff]
  %v102 = vld [vmem:[%s2 + $0x108] sm:$0xff]
  %v103 = vld [vmem:[%s2 + $0x110] sm:$0xff]
  %v104 = vld [vmem:[%s2 + $0x118] sm:$0xff]
  %v105 = vld [vmem:[%s2 + $0x120] sm:$0xff]
  %v106 = vld [vmem:[%s2 + $0x128] sm:$0xff]
  %v107 = vld [vmem:[%s2 + $0x130] sm:$0xff]
  %v108 = vld [vmem:[%s2 + $0x138] sm:$0xff]
  %v109 = vld [vmem:[%s2 + $0x140] sm:$0xff]
  %v110 = vld [vmem:[%s2 + $0x148] sm:$0xff]
  %v111 = vld [vmem:[%s2 + $0x150] sm:$0xff]
  %v112 = vld [vmem:[%s2 + $0x158] sm:$0xff]
  %v113 = vld [vmem:[%s2 + $0x160] sm:$0xff]
  %v114 = vld [vmem:[%s2 + $0x168] sm:$0xff]
  %v115 = vld [vmem:[%s2 + $0x170] sm:$0xff]
  %v116 = vld [vmem:[%s2 + $0x178] sm:$0xff]
  %v117 = vld [vmem:[%s2 + $0x180] sm:$0xff]
  %v118 = vld [vmem:[%s3] sm:$0xff]
  %v119 = vld [vmem:[%s3 + $0x8] sm:$0xff]
  %v120 = vld [vmem:[%s3 + $0x10] sm:$0xff]
  %v121 = vld [vmem:[%s3 + $0x18] sm:$0xff]
  %v122 = vld [vmem:[%s3 + $0x20] sm:$0xff]
  %v123 = vld [vmem:[%s3 + $0x28] sm:$0xff]
  %v124 = vld [vmem:[%s3 + $0x30] sm:$0xff]
  %v125 = vld [vmem:[%s3 + $0x38] sm:$0xff]
  %v126 = vld [vmem:[%s3 + $0x40] sm:$0xff]
  %v127 = vld [vmem:[%s3 + $0x48] sm:$0xff]
  %v128 = vld [vmem:[%s3 + $0x50] sm:$0xff]
  %v129 = vld [vmem:[%s3 + $0x58] sm:$0xff]
  %v130 = vld [vmem:[%s3 + $0x60] sm:$0xff]
  %v131 = vld [vmem:[%s3 + $0x68] sm:$0xff]
  %v132 = vld [vmem:[%s3 + $0x70] sm:$0xff]
  %v133 = vld [vmem:[%s3 + $0x78] sm:$0xff]
  %v134 = vld [vmem:[%s3 + $0x80] sm:$0xff]
  %v135 = vld [vmem:[%s3 + $0x88] sm:$0xff]
  %v136 = vld [vmem:[%s3 + $0x90] sm:$0xff]
  %v137 = vld [vmem:[%s3 + $0x98] sm:$0xff]
  %v138 = vld [vmem:[%s3 + $0xa0] sm:$0xff]
  %v139 = vld [vmem:[%s3 + $0xa8] sm:$0xff]
  %v140 = vld [vmem:[%s3 + $0xb0] sm:$0xff]
  %v141 = vld [vmem:[%s3 + $0xb8] sm:$0xff]
  %v142 = vld [vmem:[%s3 + $0xc0] sm:$0xff]
  %v143 = vld [vmem:[%s3 + $0xc8] sm:$0xff]
  %v144 = vld [vmem:[%s3 + $0xd0] sm:$0xff]
  %v145 = vld [vmem:[%s3 + $0xd8] sm:$0xff]
  %v146 = vld [vmem:[%s3 + $0xe0] sm:$0xff]
  %v147 = vld [vmem:[%s3 + $0xe8] sm:$0xff]
  %v148 = vld [vmem:[%s3 + $0xf0] sm:$0xff]
  %v149 = vld [vmem:[%s3 + $0xf8] sm:$0xff]
  %v150 = vld [vmem:[%s3 + $0x100] sm:$0xff]
  %v151 = vld [vmem:[%s3 + $0x108] sm:$0xff]
  %v152 = vld [vmem:[%s3 + $0x110] sm:$0xff]
  %v153 = vld [vmem:[%s3 + $0x118] sm:$0xff]
  %v154 = vld [vmem:[%s3 + $0x120] sm:$0xff]
  %v155 = vld [vmem:[%s3 + $0x128] sm:$0xff]
  %v156 = vld [vmem:[%s3 + $0x130] sm:$0xff]
  %v157 = vld [vmem:[%s3 + $0x138] sm:$0xff]
  %v158 = vld [vmem:[%s3 + $0x140] sm:$0xff]
  %v159 = vld [vmem:[%s3 + $0x148] sm:$0xff]
  %v160 = vld [vmem:[%s3 + $0x150] sm:$0xff]
  %v161 = vld [vmem:[%s3 + $0x158] sm:$0xff]
  %v162 = vld [vmem:[%s3 + $0x160] sm:$0xff]
  %v163 = vld [vmem:[%s3 + $0x168] sm:$0xff]
  %v164 = vld [vmem:[%s3 + $0x170] sm:$0xff]
  %v165 = vld [vmem:[%s3 + $0x178] sm:$0xff]
  %v166 = vld [vmem:[%s3 + $0x180] sm:$0xff]
  %v167 = vld [vmem:[%s4] sm:$0xff]
  %v168 = vld [vmem:[%s4 + $0x8] sm:$0xff]
  %v169 = vld [vmem:[%s4 + $0x10] sm:$0xff]
  %v170 = vld [vmem:[%s4 + $0x18] sm:$0xff]
  %v171 = vld [vmem:[%s4 + $0x20] sm:$0xff]
  %v172 = vld [vmem:[%s4 + $0x28] sm:$0xff]
  %v173 = vld [vmem:[%s4 + $0x30] sm:$0xff]
  %v174 = vld [vmem:[%s4 + $0x38] sm:$0xff]
  %v175 = vld [vmem:[%s4 + $0x40] sm:$0xff]
  %v176 = vld [vmem:[%s4 + $0x48] sm:$0xff]
  %v177 = vld [vmem:[%s4 + $0x50] sm:$0xff]
  %v178 = vld [vmem:[%s4 + $0x58] sm:$0xff]
  %v179 = vld [vmem:[%s4 + $0x60] sm:$0xff]
  %v180 = vld [vmem:[%s4 + $0x68] sm:$0xff]
  %v181 = vld [vmem:[%s4 + $0x70] sm:$0xff]
  %v182 = vld [vmem:[%s4 + $0x78] sm:$0xff]
  %v183 = vld [vmem:[%s4 + $0x80] sm:$0xff]
  %v184 = vld [vmem:[%s4 + $0x88] sm:$0xff]
  %v185 = vld [vmem:[%s4 + $0x90] sm:$0xff]
  %v186 = vld [vmem:[%s4 + $0x98] sm:$0xff]
  %v187 = vld [vmem:[%s4 + $0xa0] sm:$0xff]
  %v188 = vld [vmem:[%s4 + $0xa8] sm:$0xff]
  %v189 = vld [vmem:[%s4 + $0xb0] sm:$0xff]
  %v190 = vld [vmem:[%s4 + $0xb8] sm:$0xff]
  %v191 = vld [vmem:[%s4 + $0xc0] sm:$0xff]
  %v192 = vld [vmem:[%s4 + $0xc8] sm:$0xff]
  %v193 = vld [vmem:[%s4 + $0xd0] sm:$0xff]
  %v194 = vld [vmem:[%s4 + $0xd8] sm:$0xff]
  %v195 = vld [vmem:[%s4 + $0xe0] sm:$0xff]
  %v196 = vld [vmem:[%s4 + $0xe8] sm:$0xff]
  %v197 = vld [vmem:[%s4 + $0xf0] sm:$0xff]
  %v198 = vld [vmem:[%s4 + $0xf8] sm:$0xff]
  %v199 = vld [vmem:[%s4 + $0x100] sm:$0xff]
  %v200 = vld [vmem:[%s4 + $0x108] sm:$0xff]
  %v201 = vld [vmem:[%s4 + $0x110] sm:$0xff]
  %v202 = vld [vmem:[%s4 + $0x118] sm:$0xff]
  %v203 = vld [vmem:[%s4 + $0x120] sm:$0xff]
  %v204 = vld [vmem:[%s4 + $0x128] sm:$0xff]
  %v205 = vld [vmem:[%s4 + $0x130] sm:$0xff]
  %v206 = vld [vmem:[%s4 + $0x138] sm:$0xff]
  %v207 = vld [vmem:[%s4 + $0x140] sm:$0xff]
  %v208 = vld [vmem:[%s4 + $0x148] sm:$0xff]
  %v209 = vld [vmem:[%s4 + $0x150] sm:$0xff]
  %v210 = vld [vmem:[%s4 + $0x158] sm:$0xff]
  %v211 = vld [vmem:[%s4 + $0x160] sm:$0xff]
  %v212 = vld [vmem:[%s4 + $0x168] sm:$0xff]
  %v213 = vld [vmem:[%s4 + $0x170] sm:$0xff]
  %v214 = vld [vmem:[%s4 + $0x178] sm:$0xff]
  %v215 = vld [vmem:[%s4 + $0x180] sm:$0xff]
  %v216 = vrot.slane %v20, 7
  %v217 = vrot.slane %v21, 7
  %v218 = vrot.slane %v22, 7
  %v219 = vrot.slane %v23, 7
  %v220 = vrot.slane %v24, 7
  %v221 = vrot.slane %v25, 7
  %v222 = vrot.slane %v26, 7
  %v223 = vrot.slane %v27, 7
  %v224 = vrot.slane %v28, 7
  %v225 = vrot.slane %v29, 7
  %v226 = vrot.slane %v30, 7
  %v227 = vrot.slane %v31, 7
  %v228 = vrot.slane %v32, 7
  %v229 = vrot.slane %v33, 7
  %v230 = vrot.slane %v34, 7
  %v231 = vrot.slane %v35, 7
  %v232 = vrot.slane %v36, 7
  %v233 = vrot.slane %v37, 7
  %v234 = vrot.slane %v38, 7
  %v235 = vrot.slane %v39, 7
  %v236 = vrot.slane %v40, 7
  %v237 = vrot.slane %v41, 7
  %v238 = vrot.slane %v42, 7
  %v239 = vrot.slane %v43, 7
  %v240 = vrot.slane %v44, 7
  %v241 = vrot.slane %v45, 7
  %v242 = vrot.slane %v46, 7
  %v243 = vrot.slane %v47, 7
  %v244 = vrot.slane %v48, 7
  %v245 = vrot.slane %v49, 7
  %v246 = vrot.slane %v50, 7
  %v247 = vrot.slane %v51, 7
  %v248 = vrot.slane %v52, 7
  %v249 = vrot.slane %v53, 7
  %v250 = vrot.slane %v54, 7
  %v251 = vrot.slane %v55, 7
  %v252 = vrot.slane %v56, 7
  %v253 = vrot.slane %v57, 7
  %v254 = vrot.slane %v58, 7
  %v255 = vrot.slane %v59, 7
  %v256 = vrot.slane %v60, 7
  %v257 = vrot.slane %v61, 7
  %v258 = vrot.slane %v62, 7
  %v259 = vrot.slane %v63, 7
  %v260 = vrot.slane %v64, 7
  %v261 = vrot.slane %v65, 7
  %v262 = vrot.slane %v66, 7
  %v263 = vrot.slane %v67, 7
  %v264 = vrot.slane %v68, 7
  %v265 = vlaneseq
  %v266 = vshrl.u32 %v265, 7
  %vm267 = vcmp.lt.s32.totalorder %v266, 1
  %v268 = vsel %vm267, %v263, %v264
  %v269 = vsel %vm267, %v262, %v263
  %v270 = vsel %vm267, %v261, %v262
  %v271 = vsel %vm267, %v260, %v261
  %v272 = vsel %vm267, %v259, %v260
  %v273 = vsel %vm267, %v258, %v259
  %v274 = vsel %vm267, %v257, %v258
  %v275 = vsel %vm267, %v256, %v257
  %v276 = vsel %vm267, %v255, %v256
  %v277 = vsel %vm267, %v254, %v255
  %v278 = vsel %vm267, %v253, %v254
  %v279 = vsel %vm267, %v252, %v253
  %v280 = vsel %vm267, %v251, %v252
  %v281 = vsel %vm267, %v250, %v251
  %v282 = vsel %vm267, %v249, %v250
  %v283 = vsel %vm267, %v248, %v249
  %v284 = vsel %vm267, %v247, %v248
  %v285 = vsel %vm267, %v246, %v247
  %v286 = vsel %vm267, %v245, %v246
  %v287 = vsel %vm267, %v244, %v245
  %v288 = vsel %vm267, %v243, %v244
  %v289 = vsel %vm267, %v242, %v243
  %v290 = vsel %vm267, %v241, %v242
  %v291 = vsel %vm267, %v240, %v241
  %v292 = vsel %vm267, %v239, %v240
  %v293 = vsel %vm267, %v238, %v239
  %v294 = vsel %vm267, %v237, %v238
  %v295 = vsel %vm267, %v236, %v237
  %v296 = vsel %vm267, %v235, %v236
  %v297 = vsel %vm267, %v234, %v235
  %v298 = vsel %vm267, %v233, %v234
  %v299 = vsel %vm267, %v232, %v233
  %v300 = vsel %vm267, %v231, %v232
  %v301 = vsel %vm267, %v230, %v231
  %v302 = vsel %vm267, %v229, %v230
  %v303 = vsel %vm267, %v228, %v229
  %v304 = vsel %vm267, %v227, %v228
  %v305 = vsel %vm267, %v226, %v227
  %v306 = vsel %vm267, %v225, %v226
  %v307 = vsel %vm267, %v224, %v225
  %v308 = vsel %vm267, %v223, %v224
  %v309 = vsel %vm267, %v222, %v223
  %v310 = vsel %vm267, %v221, %v222
  %v311 = vsel %vm267, %v220, %v221
  %v312 = vsel %vm267, %v219, %v220
  %v313 = vsel %vm267, %v218, %v219
  %v314 = vsel %vm267, %v217, %v218
  %v315 = vsel %vm267, %v216, %v217
  %v316 = vsel %vm267, %v264, %v216
  %318 = vset.pattern.permute.xlu0 0
  %319 = vperm.xlu0 %318, %v69
  %v320 = vpop.permute.xlu0 %319
  %323 = vset.pattern.permute.xlu0 0
  %324 = vperm.xlu0 %323, %v70
  %v325 = vpop.permute.xlu0 %324
  %328 = vset.pattern.permute.xlu0 0
  %329 = vperm.xlu0 %328, %v71
  %v330 = vpop.permute.xlu0 %329
  %333 = vset.pattern.permute.xlu0 0
  %334 = vperm.xlu0 %333, %v72
  %v335 = vpop.permute.xlu0 %334
  %338 = vset.pattern.permute.xlu0 0
  %339 = vperm.xlu0 %338, %v73
  %v340 = vpop.permute.xlu0 %339
  %343 = vset.pattern.permute.xlu0 0
  %344 = vperm.xlu0 %343, %v74
  %v345 = vpop.permute.xlu0 %344
  %348 = vset.pattern.permute.xlu0 0
  %349 = vperm.xlu0 %348, %v75
  %v350 = vpop.permute.xlu0 %349
  %353 = vset.pattern.permute.xlu0 0
  %354 = vperm.xlu0 %353, %v76
  %v355 = vpop.permute.xlu0 %354
  %358 = vset.pattern.permute.xlu0 0
  %359 = vperm.xlu0 %358, %v77
  %v360 = vpop.permute.xlu0 %359
  %363 = vset.pattern.permute.xlu0 0
  %364 = vperm.xlu0 %363, %v78
  %v365 = vpop.permute.xlu0 %364
  %368 = vset.pattern.permute.xlu0 0
  %369 = vperm.xlu0 %368, %v79
  %v370 = vpop.permute.xlu0 %369
  %373 = vset.pattern.permute.xlu0 0
  %374 = vperm.xlu0 %373, %v80
  %v375 = vpop.permute.xlu0 %374
  %378 = vset.pattern.permute.xlu0 0
  %379 = vperm.xlu0 %378, %v81
  %v380 = vpop.permute.xlu0 %379
  %383 = vset.pattern.permute.xlu0 0
  %384 = vperm.xlu0 %383, %v82
  %v385 = vpop.permute.xlu0 %384
  %388 = vset.pattern.permute.xlu0 0
  %389 = vperm.xlu0 %388, %v83
  %v390 = vpop.permute.xlu0 %389
  %393 = vset.pattern.permute.xlu0 0
  %394 = vperm.xlu0 %393, %v84
  %v395 = vpop.permute.xlu0 %394
  %398 = vset.pattern.permute.xlu0 0
  %399 = vperm.xlu0 %398, %v85
  %v400 = vpop.permute.xlu0 %399
  %403 = vset.pattern.permute.xlu0 0
  %404 = vperm.xlu0 %403, %v86
  %v405 = vpop.permute.xlu0 %404
  %408 = vset.pattern.permute.xlu0 0
  %409 = vperm.xlu0 %408, %v87
  %v410 = vpop.permute.xlu0 %409
  %413 = vset.pattern.permute.xlu0 0
  %414 = vperm.xlu0 %413, %v88
  %v415 = vpop.permute.xlu0 %414
  %418 = vset.pattern.permute.xlu0 0
  %419 = vperm.xlu0 %418, %v89
  %v420 = vpop.permute.xlu0 %419
  %423 = vset.pattern.permute.xlu0 0
  %424 = vperm.xlu0 %423, %v90
  %v425 = vpop.permute.xlu0 %424
  %428 = vset.pattern.permute.xlu0 0
  %429 = vperm.xlu0 %428, %v91
  %v430 = vpop.permute.xlu0 %429
  %433 = vset.pattern.permute.xlu0 0
  %434 = vperm.xlu0 %433, %v92
  %v435 = vpop.permute.xlu0 %434
  %438 = vset.pattern.permute.xlu0 0
  %439 = vperm.xlu0 %438, %v93
  %v440 = vpop.permute.xlu0 %439
  %443 = vset.pattern.permute.xlu0 0
  %444 = vperm.xlu0 %443, %v94
  %v445 = vpop.permute.xlu0 %444
  %448 = vset.pattern.permute.xlu0 0
  %449 = vperm.xlu0 %448, %v95
  %v450 = vpop.permute.xlu0 %449
  %453 = vset.pattern.permute.xlu0 0
  %454 = vperm.xlu0 %453, %v96
  %v455 = vpop.permute.xlu0 %454
  %458 = vset.pattern.permute.xlu0 0
  %459 = vperm.xlu0 %458, %v97
  %v460 = vpop.permute.xlu0 %459
  %463 = vset.pattern.permute.xlu0 0
  %464 = vperm.xlu0 %463, %v98
  %v465 = vpop.permute.xlu0 %464
  %468 = vset.pattern.permute.xlu0 0
  %469 = vperm.xlu0 %468, %v99
  %v470 = vpop.permute.xlu0 %469
  %473 = vset.pattern.permute.xlu0 0
  %474 = vperm.xlu0 %473, %v100
  %v475 = vpop.permute.xlu0 %474
  %478 = vset.pattern.permute.xlu0 0
  %479 = vperm.xlu0 %478, %v101
  %v480 = vpop.permute.xlu0 %479
  %483 = vset.pattern.permute.xlu0 0
  %484 = vperm.xlu0 %483, %v102
  %v485 = vpop.permute.xlu0 %484
  %488 = vset.pattern.permute.xlu0 0
  %489 = vperm.xlu0 %488, %v103
  %v490 = vpop.permute.xlu0 %489
  %493 = vset.pattern.permute.xlu0 0
  %494 = vperm.xlu0 %493, %v104
  %v495 = vpop.permute.xlu0 %494
  %498 = vset.pattern.permute.xlu0 0
  %499 = vperm.xlu0 %498, %v105
  %v500 = vpop.permute.xlu0 %499
  %503 = vset.pattern.permute.xlu0 0
  %504 = vperm.xlu0 %503, %v106
  %v505 = vpop.permute.xlu0 %504
  %508 = vset.pattern.permute.xlu0 0
  %509 = vperm.xlu0 %508, %v107
  %v510 = vpop.permute.xlu0 %509
  %513 = vset.pattern.permute.xlu0 0
  %514 = vperm.xlu0 %513, %v108
  %v515 = vpop.permute.xlu0 %514
  %518 = vset.pattern.permute.xlu0 0
  %519 = vperm.xlu0 %518, %v109
  %v520 = vpop.permute.xlu0 %519
  %523 = vset.pattern.permute.xlu0 0
  %524 = vperm.xlu0 %523, %v110
  %v525 = vpop.permute.xlu0 %524
  %528 = vset.pattern.permute.xlu0 0
  %529 = vperm.xlu0 %528, %v111
  %v530 = vpop.permute.xlu0 %529
  %533 = vset.pattern.permute.xlu0 0
  %534 = vperm.xlu0 %533, %v112
  %v535 = vpop.permute.xlu0 %534
  %538 = vset.pattern.permute.xlu0 0
  %539 = vperm.xlu0 %538, %v113
  %v540 = vpop.permute.xlu0 %539
  %543 = vset.pattern.permute.xlu0 0
  %544 = vperm.xlu0 %543, %v114
  %v545 = vpop.permute.xlu0 %544
  %548 = vset.pattern.permute.xlu0 0
  %549 = vperm.xlu0 %548, %v115
  %v550 = vpop.permute.xlu0 %549
  %553 = vset.pattern.permute.xlu0 0
  %554 = vperm.xlu0 %553, %v116
  %v555 = vpop.permute.xlu0 %554
  %558 = vset.pattern.permute.xlu0 0
  %559 = vperm.xlu0 %558, %v117
  %v560 = vpop.permute.xlu0 %559
  %v562 = vmul.f32 %v316, %v320
  %v563 = vmul.f32 %v315, %v325
  %v564 = vmul.f32 %v314, %v330
  %v565 = vmul.f32 %v313, %v335
  %v566 = vmul.f32 %v312, %v340
  %v567 = vmul.f32 %v311, %v345
  %v568 = vmul.f32 %v310, %v350
  %v569 = vmul.f32 %v309, %v355
  %v570 = vmul.f32 %v308, %v360
  %v571 = vmul.f32 %v307, %v365
  %v572 = vmul.f32 %v306, %v370
  %v573 = vmul.f32 %v305, %v375
  %v574 = vmul.f32 %v304, %v380
  %v575 = vmul.f32 %v303, %v385
  %v576 = vmul.f32 %v302, %v390
  %v577 = vmul.f32 %v301, %v395
  %v578 = vmul.f32 %v300, %v400
  %v579 = vmul.f32 %v299, %v405
  %v580 = vmul.f32 %v298, %v410
  %v581 = vmul.f32 %v297, %v415
  %v582 = vmul.f32 %v296, %v420
  %v583 = vmul.f32 %v295, %v425
  %v584 = vmul.f32 %v294, %v430
  %v585 = vmul.f32 %v293, %v435
  %v586 = vmul.f32 %v292, %v440
  %v587 = vmul.f32 %v291, %v445
  %v588 = vmul.f32 %v290, %v450
  %v589 = vmul.f32 %v289, %v455
  %v590 = vmul.f32 %v288, %v460
  %v591 = vmul.f32 %v287, %v465
  %v592 = vmul.f32 %v286, %v470
  %v593 = vmul.f32 %v285, %v475
  %v594 = vmul.f32 %v284, %v480
  %v595 = vmul.f32 %v283, %v485
  %v596 = vmul.f32 %v282, %v490
  %v597 = vmul.f32 %v281, %v495
  %v598 = vmul.f32 %v280, %v500
  %v599 = vmul.f32 %v279, %v505
  %v600 = vmul.f32 %v278, %v510
  %v601 = vmul.f32 %v277, %v515
  %v602 = vmul.f32 %v276, %v520
  %v603 = vmul.f32 %v275, %v525
  %v604 = vmul.f32 %v274, %v530
  %v605 = vmul.f32 %v273, %v535
  %v606 = vmul.f32 %v272, %v540
  %v607 = vmul.f32 %v271, %v545
  %v608 = vmul.f32 %v270, %v550
  %v609 = vmul.f32 %v269, %v555
  %v610 = vmul.f32 %v268, %v560
  %v611 = vrot.slane %v20, 1
  %v612 = vrot.slane %v21, 1
  %v613 = vrot.slane %v22, 1
  %v614 = vrot.slane %v23, 1
  %v615 = vrot.slane %v24, 1
  %v616 = vrot.slane %v25, 1
  %v617 = vrot.slane %v26, 1
  %v618 = vrot.slane %v27, 1
  %v619 = vrot.slane %v28, 1
  %v620 = vrot.slane %v29, 1
  %v621 = vrot.slane %v30, 1
  %v622 = vrot.slane %v31, 1
  %v623 = vrot.slane %v32, 1
  %v624 = vrot.slane %v33, 1
  %v625 = vrot.slane %v34, 1
  %v626 = vrot.slane %v35, 1
  %v627 = vrot.slane %v36, 1
  %v628 = vrot.slane %v37, 1
  %v629 = vrot.slane %v38, 1
  %v630 = vrot.slane %v39, 1
  %v631 = vrot.slane %v40, 1
  %v632 = vrot.slane %v41, 1
  %v633 = vrot.slane %v42, 1
  %v634 = vrot.slane %v43, 1
  %v635 = vrot.slane %v44, 1
  %v636 = vrot.slane %v45, 1
  %v637 = vrot.slane %v46, 1
  %v638 = vrot.slane %v47, 1
  %v639 = vrot.slane %v48, 1
  %v640 = vrot.slane %v49, 1
  %v641 = vrot.slane %v50, 1
  %v642 = vrot.slane %v51, 1
  %v643 = vrot.slane %v52, 1
  %v644 = vrot.slane %v53, 1
  %v645 = vrot.slane %v54, 1
  %v646 = vrot.slane %v55, 1
  %v647 = vrot.slane %v56, 1
  %v648 = vrot.slane %v57, 1
  %v649 = vrot.slane %v58, 1
  %v650 = vrot.slane %v59, 1
  %v651 = vrot.slane %v60, 1
  %v652 = vrot.slane %v61, 1
  %v653 = vrot.slane %v62, 1
  %v654 = vrot.slane %v63, 1
  %v655 = vrot.slane %v64, 1
  %v656 = vrot.slane %v65, 1
  %v657 = vrot.slane %v66, 1
  %v658 = vrot.slane %v67, 1
  %v659 = vrot.slane %v68, 1
  %vm660 = vcmp.lt.s32.totalorder %v266, 7
  %v661 = vsel %vm660, %v658, %v659
  %v662 = vsel %vm660, %v657, %v658
  %v663 = vsel %vm660, %v656, %v657
  %v664 = vsel %vm660, %v655, %v656
  %v665 = vsel %vm660, %v654, %v655
  %v666 = vsel %vm660, %v653, %v654
  %v667 = vsel %vm660, %v652, %v653
  %v668 = vsel %vm660, %v651, %v652
  %v669 = vsel %vm660, %v650, %v651
  %v670 = vsel %vm660, %v649, %v650
  %v671 = vsel %vm660, %v648, %v649
  %v672 = vsel %vm660, %v647, %v648
  %v673 = vsel %vm660, %v646, %v647
  %v674 = vsel %vm660, %v645, %v646
  %v675 = vsel %vm660, %v644, %v645
  %v676 = vsel %vm660, %v643, %v644
  %v677 = vsel %vm660, %v642, %v643
  %v678 = vsel %vm660, %v641, %v642
  %v679 = vsel %vm660, %v640, %v641
  %v680 = vsel %vm660, %v639, %v640
  %v681 = vsel %vm660, %v638, %v639
  %v682 = vsel %vm660, %v637, %v638
  %v683 = vsel %vm660, %v636, %v637
  %v684 = vsel %vm660, %v635, %v636
  %v685 = vsel %vm660, %v634, %v635
  %v686 = vsel %vm660, %v633, %v634
  %v687 = vsel %vm660, %v632, %v633
  %v688 = vsel %vm660, %v631, %v632
  %v689 = vsel %vm660, %v630, %v631
  %v690 = vsel %vm660, %v629, %v630
  %v691 = vsel %vm660, %v628, %v629
  %v692 = vsel %vm660, %v627, %v628
  %v693 = vsel %vm660, %v626, %v627
  %v694 = vsel %vm660, %v625, %v626
  %v695 = vsel %vm660, %v624, %v625
  %v696 = vsel %vm660, %v623, %v624
  %v697 = vsel %vm660, %v622, %v623
  %v698 = vsel %vm660, %v621, %v622
  %v699 = vsel %vm660, %v620, %v621
  %v700 = vsel %vm660, %v619, %v620
  %v701 = vsel %vm660, %v618, %v619
  %v702 = vsel %vm660, %v617, %v618
  %v703 = vsel %vm660, %v616, %v617
  %v704 = vsel %vm660, %v615, %v616
  %v705 = vsel %vm660, %v614, %v615
  %v706 = vsel %vm660, %v613, %v614
  %v707 = vsel %vm660, %v612, %v613
  %v708 = vsel %vm660, %v611, %v612
  %v709 = vsel %vm660, %v659, %v611
  %711 = vset.pattern.permute.xlu0 0
  %712 = vperm.xlu0 %711, %v118
  %v713 = vpop.permute.xlu0 %712
  %716 = vset.pattern.permute.xlu0 0
  %717 = vperm.xlu0 %716, %v119
  %v718 = vpop.permute.xlu0 %717
  %721 = vset.pattern.permute.xlu0 0
  %722 = vperm.xlu0 %721, %v120
  %v723 = vpop.permute.xlu0 %722
  %726 = vset.pattern.permute.xlu0 0
  %727 = vperm.xlu0 %726, %v121
  %v728 = vpop.permute.xlu0 %727
  %731 = vset.pattern.permute.xlu0 0
  %732 = vperm.xlu0 %731, %v122
  %v733 = vpop.permute.xlu0 %732
  %736 = vset.pattern.permute.xlu0 0
  %737 = vperm.xlu0 %736, %v123
  %v738 = vpop.permute.xlu0 %737
  %741 = vset.pattern.permute.xlu0 0
  %742 = vperm.xlu0 %741, %v124
  %v743 = vpop.permute.xlu0 %742
  %746 = vset.pattern.permute.xlu0 0
  %747 = vperm.xlu0 %746, %v125
  %v748 = vpop.permute.xlu0 %747
  %751 = vset.pattern.permute.xlu0 0
  %752 = vperm.xlu0 %751, %v126
  %v753 = vpop.permute.xlu0 %752
  %756 = vset.pattern.permute.xlu0 0
  %757 = vperm.xlu0 %756, %v127
  %v758 = vpop.permute.xlu0 %757
  %761 = vset.pattern.permute.xlu0 0
  %762 = vperm.xlu0 %761, %v128
  %v763 = vpop.permute.xlu0 %762
  %766 = vset.pattern.permute.xlu0 0
  %767 = vperm.xlu0 %766, %v129
  %v768 = vpop.permute.xlu0 %767
  %771 = vset.pattern.permute.xlu0 0
  %772 = vperm.xlu0 %771, %v130
  %v773 = vpop.permute.xlu0 %772
  %776 = vset.pattern.permute.xlu0 0
  %777 = vperm.xlu0 %776, %v131
  %v778 = vpop.permute.xlu0 %777
  %781 = vset.pattern.permute.xlu0 0
  %782 = vperm.xlu0 %781, %v132
  %v783 = vpop.permute.xlu0 %782
  %786 = vset.pattern.permute.xlu0 0
  %787 = vperm.xlu0 %786, %v133
  %v788 = vpop.permute.xlu0 %787
  %791 = vset.pattern.permute.xlu0 0
  %792 = vperm.xlu0 %791, %v134
  %v793 = vpop.permute.xlu0 %792
  %796 = vset.pattern.permute.xlu0 0
  %797 = vperm.xlu0 %796, %v135
  %v798 = vpop.permute.xlu0 %797
  %801 = vset.pattern.permute.xlu0 0
  %802 = vperm.xlu0 %801, %v136
  %v803 = vpop.permute.xlu0 %802
  %806 = vset.pattern.permute.xlu0 0
  %807 = vperm.xlu0 %806, %v137
  %v808 = vpop.permute.xlu0 %807
  %811 = vset.pattern.permute.xlu0 0
  %812 = vperm.xlu0 %811, %v138
  %v813 = vpop.permute.xlu0 %812
  %816 = vset.pattern.permute.xlu0 0
  %817 = vperm.xlu0 %816, %v139
  %v818 = vpop.permute.xlu0 %817
  %821 = vset.pattern.permute.xlu0 0
  %822 = vperm.xlu0 %821, %v140
  %v823 = vpop.permute.xlu0 %822
  %826 = vset.pattern.permute.xlu0 0
  %827 = vperm.xlu0 %826, %v141
  %v828 = vpop.permute.xlu0 %827
  %831 = vset.pattern.permute.xlu0 0
  %832 = vperm.xlu0 %831, %v142
  %v833 = vpop.permute.xlu0 %832
  %836 = vset.pattern.permute.xlu0 0
  %837 = vperm.xlu0 %836, %v143
  %v838 = vpop.permute.xlu0 %837
  %841 = vset.pattern.permute.xlu0 0
  %842 = vperm.xlu0 %841, %v144
  %v843 = vpop.permute.xlu0 %842
  %846 = vset.pattern.permute.xlu0 0
  %847 = vperm.xlu0 %846, %v145
  %v848 = vpop.permute.xlu0 %847
  %851 = vset.pattern.permute.xlu0 0
  %852 = vperm.xlu0 %851, %v146
  %v853 = vpop.permute.xlu0 %852
  %856 = vset.pattern.permute.xlu0 0
  %857 = vperm.xlu0 %856, %v147
  %v858 = vpop.permute.xlu0 %857
  %861 = vset.pattern.permute.xlu0 0
  %862 = vperm.xlu0 %861, %v148
  %v863 = vpop.permute.xlu0 %862
  %866 = vset.pattern.permute.xlu0 0
  %867 = vperm.xlu0 %866, %v149
  %v868 = vpop.permute.xlu0 %867
  %871 = vset.pattern.permute.xlu0 0
  %872 = vperm.xlu0 %871, %v150
  %v873 = vpop.permute.xlu0 %872
  %876 = vset.pattern.permute.xlu0 0
  %877 = vperm.xlu0 %876, %v151
  %v878 = vpop.permute.xlu0 %877
  %881 = vset.pattern.permute.xlu0 0
  %882 = vperm.xlu0 %881, %v152
  %v883 = vpop.permute.xlu0 %882
  %886 = vset.pattern.permute.xlu0 0
  %887 = vperm.xlu0 %886, %v153
  %v888 = vpop.permute.xlu0 %887
  %891 = vset.pattern.permute.xlu0 0
  %892 = vperm.xlu0 %891, %v154
  %v893 = vpop.permute.xlu0 %892
  %896 = vset.pattern.permute.xlu0 0
  %897 = vperm.xlu0 %896, %v155
  %v898 = vpop.permute.xlu0 %897
  %901 = vset.pattern.permute.xlu0 0
  %902 = vperm.xlu0 %901, %v156
  %v903 = vpop.permute.xlu0 %902
  %906 = vset.pattern.permute.xlu0 0
  %907 = vperm.xlu0 %906, %v157
  %v908 = vpop.permute.xlu0 %907
  %911 = vset.pattern.permute.xlu0 0
  %912 = vperm.xlu0 %911, %v158
  %v913 = vpop.permute.xlu0 %912
  %916 = vset.pattern.permute.xlu0 0
  %917 = vperm.xlu0 %916, %v159
  %v918 = vpop.permute.xlu0 %917
  %921 = vset.pattern.permute.xlu0 0
  %922 = vperm.xlu0 %921, %v160
  %v923 = vpop.permute.xlu0 %922
  %926 = vset.pattern.permute.xlu0 0
  %927 = vperm.xlu0 %926, %v161
  %v928 = vpop.permute.xlu0 %927
  %931 = vset.pattern.permute.xlu0 0
  %932 = vperm.xlu0 %931, %v162
  %v933 = vpop.permute.xlu0 %932
  %936 = vset.pattern.permute.xlu0 0
  %937 = vperm.xlu0 %936, %v163
  %v938 = vpop.permute.xlu0 %937
  %941 = vset.pattern.permute.xlu0 0
  %942 = vperm.xlu0 %941, %v164
  %v943 = vpop.permute.xlu0 %942
  %946 = vset.pattern.permute.xlu0 0
  %947 = vperm.xlu0 %946, %v165
  %v948 = vpop.permute.xlu0 %947
  %951 = vset.pattern.permute.xlu0 0
  %952 = vperm.xlu0 %951, %v166
  %v953 = vpop.permute.xlu0 %952
  %v955 = vmul.f32 %v708, %v713
  %v956 = vmul.f32 %v707, %v718
  %v957 = vmul.f32 %v706, %v723
  %v958 = vmul.f32 %v705, %v728
  %v959 = vmul.f32 %v704, %v733
  %v960 = vmul.f32 %v703, %v738
  %v961 = vmul.f32 %v702, %v743
  %v962 = vmul.f32 %v701, %v748
  %v963 = vmul.f32 %v700, %v753
  %v964 = vmul.f32 %v699, %v758
  %v965 = vmul.f32 %v698, %v763
  %v966 = vmul.f32 %v697, %v768
  %v967 = vmul.f32 %v696, %v773
  %v968 = vmul.f32 %v695, %v778
  %v969 = vmul.f32 %v694, %v783
  %v970 = vmul.f32 %v693, %v788
  %v971 = vmul.f32 %v692, %v793
  %v972 = vmul.f32 %v691, %v798
  %v973 = vmul.f32 %v690, %v803
  %v974 = vmul.f32 %v689, %v808
  %v975 = vmul.f32 %v688, %v813
  %v976 = vmul.f32 %v687, %v818
  %v977 = vmul.f32 %v686, %v823
  %v978 = vmul.f32 %v685, %v828
  %v979 = vmul.f32 %v684, %v833
  %v980 = vmul.f32 %v683, %v838
  %v981 = vmul.f32 %v682, %v843
  %v982 = vmul.f32 %v681, %v848
  %v983 = vmul.f32 %v680, %v853
  %v984 = vmul.f32 %v679, %v858
  %v985 = vmul.f32 %v678, %v863
  %v986 = vmul.f32 %v677, %v868
  %v987 = vmul.f32 %v676, %v873
  %v988 = vmul.f32 %v675, %v878
  %v989 = vmul.f32 %v674, %v883
  %v990 = vmul.f32 %v673, %v888
  %v991 = vmul.f32 %v672, %v893
  %v992 = vmul.f32 %v671, %v898
  %v993 = vmul.f32 %v670, %v903
  %v994 = vmul.f32 %v669, %v908
  %v995 = vmul.f32 %v668, %v913
  %v996 = vmul.f32 %v667, %v918
  %v997 = vmul.f32 %v666, %v923
  %v998 = vmul.f32 %v665, %v928
  %v999 = vmul.f32 %v664, %v933
  %v1000 = vmul.f32 %v663, %v938
  %v1001 = vmul.f32 %v662, %v943
  %v1002 = vmul.f32 %v661, %v948
  %v1003 = vmul.f32 %v709, %v953
  %v1004 = vld [vmem:[%s1] sm:$0xff]
  %v1005 = vld [vmem:[%s1 + $0x8] sm:$0xff]
  %v1006 = vld [vmem:[%s1 + $0x10] sm:$0xff]
  %v1007 = vld [vmem:[%s1 + $0x18] sm:$0xff]
  %v1008 = vld [vmem:[%s1 + $0x20] sm:$0xff]
  %v1009 = vld [vmem:[%s1 + $0x28] sm:$0xff]
  %v1010 = vld [vmem:[%s1 + $0x30] sm:$0xff]
  %v1011 = vld [vmem:[%s1 + $0x38] sm:$0xff]
  %v1012 = vld [vmem:[%s1 + $0x40] sm:$0xff]
  %v1013 = vld [vmem:[%s1 + $0x48] sm:$0xff]
  %v1014 = vld [vmem:[%s1 + $0x50] sm:$0xff]
  %v1015 = vld [vmem:[%s1 + $0x58] sm:$0xff]
  %v1016 = vld [vmem:[%s1 + $0x60] sm:$0xff]
  %v1017 = vld [vmem:[%s1 + $0x68] sm:$0xff]
  %v1018 = vld [vmem:[%s1 + $0x70] sm:$0xff]
  %v1019 = vld [vmem:[%s1 + $0x78] sm:$0xff]
  %v1020 = vld [vmem:[%s1 + $0x80] sm:$0xff]
  %v1021 = vld [vmem:[%s1 + $0x88] sm:$0xff]
  %v1022 = vld [vmem:[%s1 + $0x90] sm:$0xff]
  %v1023 = vld [vmem:[%s1 + $0x98] sm:$0xff]
  %v1024 = vld [vmem:[%s1 + $0xa0] sm:$0xff]
  %v1025 = vld [vmem:[%s1 + $0xa8] sm:$0xff]
  %v1026 = vld [vmem:[%s1 + $0xb0] sm:$0xff]
  %v1027 = vld [vmem:[%s1 + $0xb8] sm:$0xff]
  %v1028 = vld [vmem:[%s1 + $0xc0] sm:$0xff]
  %v1029 = vld [vmem:[%s1 + $0xc8] sm:$0xff]
  %v1030 = vld [vmem:[%s1 + $0xd0] sm:$0xff]
  %v1031 = vld [vmem:[%s1 + $0xd8] sm:$0xff]
  %v1032 = vld [vmem:[%s1 + $0xe0] sm:$0xff]
  %v1033 = vld [vmem:[%s1 + $0xe8] sm:$0xff]
  %v1034 = vld [vmem:[%s1 + $0xf0] sm:$0xff]
  %v1035 = vld [vmem:[%s1 + $0xf8] sm:$0xff]
  %s1036 = scalar_lea.vmem %s1, 256
  %v1037 = vld [vmem:[%s1036] sm:$0xff]
  %v1038 = vld [vmem:[%s1036 + $0x8] sm:$0xff]
  %v1039 = vld [vmem:[%s1036 + $0x10] sm:$0xff]
  %v1040 = vld [vmem:[%s1036 + $0x18] sm:$0xff]
  %v1041 = vld [vmem:[%s1036 + $0x20] sm:$0xff]
  %v1042 = vld [vmem:[%s1036 + $0x28] sm:$0xff]
  %v1043 = vld [vmem:[%s1036 + $0x30] sm:$0xff]
  %v1044 = vld [vmem:[%s1036 + $0x38] sm:$0xff]
  %v1045 = vld [vmem:[%s1036 + $0x40] sm:$0xff]
  %v1046 = vld [vmem:[%s1036 + $0x48] sm:$0xff]
  %v1047 = vld [vmem:[%s1036 + $0x50] sm:$0xff]
  %v1048 = vld [vmem:[%s1036 + $0x58] sm:$0xff]
  %v1049 = vld [vmem:[%s1036 + $0x60] sm:$0xff]
  %v1050 = vld [vmem:[%s1036 + $0x68] sm:$0xff]
  %v1051 = vld [vmem:[%s1036 + $0x70] sm:$0xff]
  %v1052 = vld [vmem:[%s1036 + $0x78] sm:$0xff]
  %v1053 = vld [vmem:[%s1036 + $0x80] sm:$0xff]
  %v1054 = vld [vmem:[%s1036 + $0x88] sm:$0xff]
  %v1055 = vld [vmem:[%s1036 + $0x90] sm:$0xff]
  %v1056 = vld [vmem:[%s1036 + $0x98] sm:$0xff]
  %v1057 = vld [vmem:[%s1036 + $0xa0] sm:$0xff]
  %v1058 = vld [vmem:[%s1036 + $0xa8] sm:$0xff]
  %v1059 = vld [vmem:[%s1036 + $0xb0] sm:$0xff]
  %v1060 = vld [vmem:[%s1036 + $0xb8] sm:$0xff]
  %v1061 = vld [vmem:[%s1036 + $0xc0] sm:$0xff]
  %v1062 = vld [vmem:[%s1036 + $0xc8] sm:$0xff]
  %v1063 = vld [vmem:[%s1036 + $0xd0] sm:$0xff]
  %v1064 = vld [vmem:[%s1036 + $0xd8] sm:$0xff]
  %v1065 = vld [vmem:[%s1036 + $0xe0] sm:$0xff]
  %v1066 = vld [vmem:[%s1036 + $0xe8] sm:$0xff]
  %v1067 = vld [vmem:[%s1036 + $0xf0] sm:$0xff]
  %v1068 = vld [vmem:[%s1036 + $0xf8] sm:$0xff]
  %1069 = vmatprep.subr.mxu0 %v1068
  %1070 = vmatpush1.msra.mxu0 %v1067
  %1071 = vmatprep.subr.mxu0 %v1066
  %1072 = vmatpush1.msra.mxu0 %v1065
  %1073 = vmatprep.subr.mxu0 %v1064
  %1074 = vmatpush1.msra.mxu0 %v1063
  %1075 = vmatprep.subr.mxu0 %v1062
  %1076 = vmatpush1.msra.mxu0 %v1061
  %1077 = vmatprep.subr.mxu0 %v1060
  %1078 = vmatpush1.msra.mxu0 %v1059
  %1079 = vmatprep.subr.mxu0 %v1058
  %1080 = vmatpush1.msra.mxu0 %v1057
  %1081 = vmatprep.subr.mxu0 %v1056
  %1082 = vmatpush1.msra.mxu0 %v1055
  %1083 = vmatprep.subr.mxu0 %v1054
  %1084 = vmatpush1.msra.mxu0 %v1053
  %1085 = vmatprep.subr.mxu0 %v1052
  %1086 = vmatpush1.msra.mxu0 %v1051
  %1087 = vmatprep.subr.mxu0 %v1050
  %1088 = vmatpush1.msra.mxu0 %v1049
  %1089 = vmatprep.subr.mxu0 %v1048
  %1090 = vmatpush1.msra.mxu0 %v1047
  %1091 = vmatprep.subr.mxu0 %v1046
  %1092 = vmatpush1.msra.mxu0 %v1045
  %1093 = vmatprep.subr.mxu0 %v1044
  %1094 = vmatpush1.msra.mxu0 %v1043
  %1095 = vmatprep.subr.mxu0 %v1042
  %1096 = vmatpush1.msra.mxu0 %v1041
  %1097 = vmatprep.subr.mxu0 %v1040
  %1098 = vmatpush1.msra.mxu0 %v1039
  %1099 = vmatprep.subr.mxu0 %v1038
  %1100 = vmatpush1.msra.mxu0 %v1037
  %1101 = vmatprep.subr.mxu0 0.0
  %1102 = vmatpush2.msra.mxu0 0.0
  %1103 = vmatprep.subr.mxu0 0.0
  %1104 = vmatpush2.msra.mxu0 0.0
  %1105 = vmatprep.subr.mxu0 0.0
  %1106 = vmatpush2.msra.mxu0 0.0
  %1107 = vmatprep.subr.mxu0 0.0
  %1108 = vmatpush2.msra.mxu0 0.0
  %1109 = vmatprep.subr.mxu0 0.0
  %1110 = vmatpush2.msra.mxu0 0.0
  %1111 = vmatprep.subr.mxu0 0.0
  %1112 = vmatpush2.msra.mxu0 0.0
  %1113 = vmatprep.subr.mxu0 0.0
  %1114 = vmatpush2.msra.mxu0 0.0
  %1115 = vmatprep.subr.mxu0 0.0
  %1116 = vmatpush2.msra.mxu0 0.0
  %1117 = vmatprep.subr.mxu0 0.0
  %1118 = vmatpush2.msra.mxu0 0.0
  %1119 = vmatprep.subr.mxu0 0.0
  %1120 = vmatpush2.msra.mxu0 0.0
  %1121 = vmatprep.subr.mxu0 0.0
  %1122 = vmatpush2.msra.mxu0 0.0
  %1123 = vmatprep.subr.mxu0 0.0
  %1124 = vmatpush2.msra.mxu0 0.0
  %1125 = vmatprep.subr.mxu0 0.0
  %1126 = vmatpush2.msra.mxu0 0.0
  %1127 = vmatprep.subr.mxu0 0.0
  %1128 = vmatpush2.msra.mxu0 0.0
  %1129 = vmatprep.subr.mxu0 0.0
  %1130 = vmatpush2.msra.mxu0 0.0
  %1131 = vmatprep.subr.mxu0 0.0
  %1132 = vmatpush2.msra.mxu0 0.0
  %1133 = vmatprep.mubr.f32.mxu0 0.0
  %1134 = vmatmul.mubr.f32.gmra.mxu0 %v20
  %v1135 = vpop.f32.mrf.mxu0
  %v1136 = vadd.f32 0.0, %v1135
  %v1137 = vpop.f32.mrf.mxu0
  %v1138 = vadd.f32 0.0, %v1137
  %1139 = vmatprep.mubr.f32.mxu0 0.0
  %1140 = vmatmul.mubr.f32.gmra.mxu0 %v21
  %v1141 = vpop.f32.mrf.mxu0
  %v1142 = vadd.f32 0.0, %v1141
  %v1143 = vpop.f32.mrf.mxu0
  %v1144 = vadd.f32 0.0, %v1143
  %1145 = vmatprep.mubr.f32.mxu0 0.0
  %1146 = vmatmul.mubr.f32.gmra.mxu0 %v22
  %v1147 = vpop.f32.mrf.mxu0
  %v1148 = vadd.f32 0.0, %v1147
  %v1149 = vpop.f32.mrf.mxu0
  %v1150 = vadd.f32 0.0, %v1149
  %1151 = vmatprep.mubr.f32.mxu0 0.0
  %1152 = vmatmul.mubr.f32.gmra.mxu0 %v23
  %v1153 = vpop.f32.mrf.mxu0
  %v1154 = vadd.f32 0.0, %v1153
  %v1155 = vpop.f32.mrf.mxu0
  %v1156 = vadd.f32 0.0, %v1155
  %1157 = vmatprep.mubr.f32.mxu0 0.0
  %1158 = vmatmul.mubr.f32.gmra.mxu0 %v24
  %v1159 = vpop.f32.mrf.mxu0
  %v1160 = vadd.f32 0.0, %v1159
  %v1161 = vpop.f32.mrf.mxu0
  %v1162 = vadd.f32 0.0, %v1161
  %1163 = vmatprep.mubr.f32.mxu0 0.0
  %1164 = vmatmul.mubr.f32.gmra.mxu0 %v25
  %v1165 = vpop.f32.mrf.mxu0
  %v1166 = vadd.f32 0.0, %v1165
  %v1167 = vpop.f32.mrf.mxu0
  %v1168 = vadd.f32 0.0, %v1167
  %1169 = vmatprep.mubr.f32.mxu0 0.0
  %1170 = vmatmul.mubr.f32.gmra.mxu0 %v26
  %v1171 = vpop.f32.mrf.mxu0
  %v1172 = vadd.f32 0.0, %v1171
  %v1173 = vpop.f32.mrf.mxu0
  %v1174 = vadd.f32 0.0, %v1173
  %1175 = vmatprep.mubr.f32.mxu0 0.0
  %1176 = vmatmul.mubr.f32.gmra.mxu0 %v27
  %v1177 = vpop.f32.mrf.mxu0
  %v1178 = vadd.f32 0.0, %v1177
  %v1179 = vpop.f32.mrf.mxu0
  %v1180 = vadd.f32 0.0, %v1179
  %1181 = vmatprep.mubr.f32.mxu0 0.0
  %1182 = vmatmul.mubr.f32.gmra.mxu0 %v28
  %v1183 = vpop.f32.mrf.mxu0
  %v1184 = vadd.f32 0.0, %v1183
  %v1185 = vpop.f32.mrf.mxu0
  %v1186 = vadd.f32 0.0, %v1185
  %1187 = vmatprep.mubr.f32.mxu0 0.0
  %1188 = vmatmul.mubr.f32.gmra.mxu0 %v29
  %v1189 = vpop.f32.mrf.mxu0
  %v1190 = vadd.f32 0.0, %v1189
  %v1191 = vpop.f32.mrf.mxu0
  %v1192 = vadd.f32 0.0, %v1191
  %1193 = vmatprep.mubr.f32.mxu0 0.0
  %1194 = vmatmul.mubr.f32.gmra.mxu0 %v30
  %v1195 = vpop.f32.mrf.mxu0
  %v1196 = vadd.f32 0.0, %v1195
  %v1197 = vpop.f32.mrf.mxu0
  %v1198 = vadd.f32 0.0, %v1197
  %1199 = vmatprep.mubr.f32.mxu0 0.0
  %1200 = vmatmul.mubr.f32.gmra.mxu0 %v31
  %v1201 = vpop.f32.mrf.mxu0
  %v1202 = vadd.f32 0.0, %v1201
  %v1203 = vpop.f32.mrf.mxu0
  %v1204 = vadd.f32 0.0, %v1203
  %1205 = vmatprep.mubr.f32.mxu0 0.0
  %1206 = vmatmul.mubr.f32.gmra.mxu0 %v32
  %v1207 = vpop.f32.mrf.mxu0
  %v1208 = vadd.f32 0.0, %v1207
  %v1209 = vpop.f32.mrf.mxu0
  %v1210 = vadd.f32 0.0, %v1209
  %1211 = vmatprep.mubr.f32.mxu0 0.0
  %1212 = vmatmul.mubr.f32.gmra.mxu0 %v33
  %v1213 = vpop.f32.mrf.mxu0
  %v1214 = vadd.f32 0.0, %v1213
  %v1215 = vpop.f32.mrf.mxu0
  %v1216 = vadd.f32 0.0, %v1215
  %1217 = vmatprep.mubr.f32.mxu0 0.0
  %1218 = vmatmul.mubr.f32.gmra.mxu0 %v34
  %v1219 = vpop.f32.mrf.mxu0
  %v1220 = vadd.f32 0.0, %v1219
  %v1221 = vpop.f32.mrf.mxu0
  %v1222 = vadd.f32 0.0, %v1221
  %1223 = vmatprep.mubr.f32.mxu0 0.0
  %1224 = vmatmul.mubr.f32.gmra.mxu0 %v35
  %v1225 = vpop.f32.mrf.mxu0
  %v1226 = vadd.f32 0.0, %v1225
  %v1227 = vpop.f32.mrf.mxu0
  %v1228 = vadd.f32 0.0, %v1227
  %1229 = vmatprep.mubr.f32.mxu0 0.0
  %1230 = vmatmul.mubr.f32.gmra.mxu0 %v36
  %v1231 = vpop.f32.mrf.mxu0
  %v1232 = vadd.f32 0.0, %v1231
  %v1233 = vpop.f32.mrf.mxu0
  %v1234 = vadd.f32 0.0, %v1233
  %1235 = vmatprep.mubr.f32.mxu0 0.0
  %1236 = vmatmul.mubr.f32.gmra.mxu0 %v37
  %v1237 = vpop.f32.mrf.mxu0
  %v1238 = vadd.f32 0.0, %v1237
  %v1239 = vpop.f32.mrf.mxu0
  %v1240 = vadd.f32 0.0, %v1239
  %1241 = vmatprep.mubr.f32.mxu0 0.0
  %1242 = vmatmul.mubr.f32.gmra.mxu0 %v38
  %v1243 = vpop.f32.mrf.mxu0
  %v1244 = vadd.f32 0.0, %v1243
  %v1245 = vpop.f32.mrf.mxu0
  %v1246 = vadd.f32 0.0, %v1245
  %1247 = vmatprep.mubr.f32.mxu0 0.0
  %1248 = vmatmul.mubr.f32.gmra.mxu0 %v39
  %v1249 = vpop.f32.mrf.mxu0
  %v1250 = vadd.f32 0.0, %v1249
  %v1251 = vpop.f32.mrf.mxu0
  %v1252 = vadd.f32 0.0, %v1251
  %1253 = vmatprep.mubr.f32.mxu0 0.0
  %1254 = vmatmul.mubr.f32.gmra.mxu0 %v40
  %v1255 = vpop.f32.mrf.mxu0
  %v1256 = vadd.f32 0.0, %v1255
  %v1257 = vpop.f32.mrf.mxu0
  %v1258 = vadd.f32 0.0, %v1257
  %1259 = vmatprep.mubr.f32.mxu0 0.0
  %1260 = vmatmul.mubr.f32.gmra.mxu0 %v41
  %v1261 = vpop.f32.mrf.mxu0
  %v1262 = vadd.f32 0.0, %v1261
  %v1263 = vpop.f32.mrf.mxu0
  %v1264 = vadd.f32 0.0, %v1263
  %1265 = vmatprep.mubr.f32.mxu0 0.0
  %1266 = vmatmul.mubr.f32.gmra.mxu0 %v42
  %v1267 = vpop.f32.mrf.mxu0
  %v1268 = vadd.f32 0.0, %v1267
  %v1269 = vpop.f32.mrf.mxu0
  %v1270 = vadd.f32 0.0, %v1269
  %1271 = vmatprep.mubr.f32.mxu0 0.0
  %1272 = vmatmul.mubr.f32.gmra.mxu0 %v43
  %v1273 = vpop.f32.mrf.mxu0
  %v1274 = vadd.f32 0.0, %v1273
  %v1275 = vpop.f32.mrf.mxu0
  %v1276 = vadd.f32 0.0, %v1275
  %1277 = vmatprep.mubr.f32.mxu0 0.0
  %1278 = vmatmul.mubr.f32.gmra.mxu0 %v44
  %v1279 = vpop.f32.mrf.mxu0
  %v1280 = vadd.f32 0.0, %v1279
  %v1281 = vpop.f32.mrf.mxu0
  %v1282 = vadd.f32 0.0, %v1281
  %1283 = vmatprep.mubr.f32.mxu0 0.0
  %1284 = vmatmul.mubr.f32.gmra.mxu0 %v45
  %v1285 = vpop.f32.mrf.mxu0
  %v1286 = vadd.f32 0.0, %v1285
  %v1287 = vpop.f32.mrf.mxu0
  %v1288 = vadd.f32 0.0, %v1287
  %1289 = vmatprep.mubr.f32.mxu0 0.0
  %1290 = vmatmul.mubr.f32.gmra.mxu0 %v46
  %v1291 = vpop.f32.mrf.mxu0
  %v1292 = vadd.f32 0.0, %v1291
  %v1293 = vpop.f32.mrf.mxu0
  %v1294 = vadd.f32 0.0, %v1293
  %1295 = vmatprep.mubr.f32.mxu0 0.0
  %1296 = vmatmul.mubr.f32.gmra.mxu0 %v47
  %v1297 = vpop.f32.mrf.mxu0
  %v1298 = vadd.f32 0.0, %v1297
  %v1299 = vpop.f32.mrf.mxu0
  %v1300 = vadd.f32 0.0, %v1299
  %1301 = vmatprep.mubr.f32.mxu0 0.0
  %1302 = vmatmul.mubr.f32.gmra.mxu0 %v48
  %v1303 = vpop.f32.mrf.mxu0
  %v1304 = vadd.f32 0.0, %v1303
  %v1305 = vpop.f32.mrf.mxu0
  %v1306 = vadd.f32 0.0, %v1305
  %1307 = vmatprep.mubr.f32.mxu0 0.0
  %1308 = vmatmul.mubr.f32.gmra.mxu0 %v49
  %v1309 = vpop.f32.mrf.mxu0
  %v1310 = vadd.f32 0.0, %v1309
  %v1311 = vpop.f32.mrf.mxu0
  %v1312 = vadd.f32 0.0, %v1311
  %1313 = vmatprep.mubr.f32.mxu0 0.0
  %1314 = vmatmul.mubr.f32.gmra.mxu0 %v50
  %v1315 = vpop.f32.mrf.mxu0
  %v1316 = vadd.f32 0.0, %v1315
  %v1317 = vpop.f32.mrf.mxu0
  %v1318 = vadd.f32 0.0, %v1317
  %1319 = vmatprep.mubr.f32.mxu0 0.0
  %1320 = vmatmul.mubr.f32.gmra.mxu0 %v51
  %v1321 = vpop.f32.mrf.mxu0
  %v1322 = vadd.f32 0.0, %v1321
  %v1323 = vpop.f32.mrf.mxu0
  %v1324 = vadd.f32 0.0, %v1323
  %1325 = vmatprep.mubr.f32.mxu0 0.0
  %1326 = vmatmul.mubr.f32.gmra.mxu0 %v52
  %v1327 = vpop.f32.mrf.mxu0
  %v1328 = vadd.f32 0.0, %v1327
  %v1329 = vpop.f32.mrf.mxu0
  %v1330 = vadd.f32 0.0, %v1329
  %1331 = vmatprep.mubr.f32.mxu0 0.0
  %1332 = vmatmul.mubr.f32.gmra.mxu0 %v53
  %v1333 = vpop.f32.mrf.mxu0
  %v1334 = vadd.f32 0.0, %v1333
  %v1335 = vpop.f32.mrf.mxu0
  %v1336 = vadd.f32 0.0, %v1335
  %1337 = vmatprep.mubr.f32.mxu0 0.0
  %1338 = vmatmul.mubr.f32.gmra.mxu0 %v54
  %v1339 = vpop.f32.mrf.mxu0
  %v1340 = vadd.f32 0.0, %v1339
  %v1341 = vpop.f32.mrf.mxu0
  %v1342 = vadd.f32 0.0, %v1341
  %1343 = vmatprep.mubr.f32.mxu0 0.0
  %1344 = vmatmul.mubr.f32.gmra.mxu0 %v55
  %v1345 = vpop.f32.mrf.mxu0
  %v1346 = vadd.f32 0.0, %v1345
  %v1347 = vpop.f32.mrf.mxu0
  %v1348 = vadd.f32 0.0, %v1347
  %1349 = vmatprep.mubr.f32.mxu0 0.0
  %1350 = vmatmul.mubr.f32.gmra.mxu0 %v56
  %v1351 = vpop.f32.mrf.mxu0
  %v1352 = vadd.f32 0.0, %v1351
  %v1353 = vpop.f32.mrf.mxu0
  %v1354 = vadd.f32 0.0, %v1353
  %1355 = vmatprep.mubr.f32.mxu0 0.0
  %1356 = vmatmul.mubr.f32.gmra.mxu0 %v57
  %v1357 = vpop.f32.mrf.mxu0
  %v1358 = vadd.f32 0.0, %v1357
  %v1359 = vpop.f32.mrf.mxu0
  %v1360 = vadd.f32 0.0, %v1359
  %1361 = vmatprep.mubr.f32.mxu0 0.0
  %1362 = vmatmul.mubr.f32.gmra.mxu0 %v58
  %v1363 = vpop.f32.mrf.mxu0
  %v1364 = vadd.f32 0.0, %v1363
  %v1365 = vpop.f32.mrf.mxu0
  %v1366 = vadd.f32 0.0, %v1365
  %1367 = vmatprep.mubr.f32.mxu0 0.0
  %1368 = vmatmul.mubr.f32.gmra.mxu0 %v59
  %v1369 = vpop.f32.mrf.mxu0
  %v1370 = vadd.f32 0.0, %v1369
  %v1371 = vpop.f32.mrf.mxu0
  %v1372 = vadd.f32 0.0, %v1371
  %1373 = vmatprep.mubr.f32.mxu0 0.0
  %1374 = vmatmul.mubr.f32.gmra.mxu0 %v60
  %v1375 = vpop.f32.mrf.mxu0
  %v1376 = vadd.f32 0.0, %v1375
  %v1377 = vpop.f32.mrf.mxu0
  %v1378 = vadd.f32 0.0, %v1377
  %1379 = vmatprep.mubr.f32.mxu0 0.0
  %1380 = vmatmul.mubr.f32.gmra.mxu0 %v61
  %v1381 = vpop.f32.mrf.mxu0
  %v1382 = vadd.f32 0.0, %v1381
  %v1383 = vpop.f32.mrf.mxu0
  %v1384 = vadd.f32 0.0, %v1383
  %1385 = vmatprep.mubr.f32.mxu0 0.0
  %1386 = vmatmul.mubr.f32.gmra.mxu0 %v62
  %v1387 = vpop.f32.mrf.mxu0
  %v1388 = vadd.f32 0.0, %v1387
  %v1389 = vpop.f32.mrf.mxu0
  %v1390 = vadd.f32 0.0, %v1389
  %1391 = vmatprep.mubr.f32.mxu0 0.0
  %1392 = vmatmul.mubr.f32.gmra.mxu0 %v63
  %v1393 = vpop.f32.mrf.mxu0
  %v1394 = vadd.f32 0.0, %v1393
  %v1395 = vpop.f32.mrf.mxu0
  %v1396 = vadd.f32 0.0, %v1395
  %1397 = vmatprep.mubr.f32.mxu0 0.0
  %1398 = vmatmul.mubr.f32.gmra.mxu0 %v64
  %v1399 = vpop.f32.mrf.mxu0
  %v1400 = vadd.f32 0.0, %v1399
  %v1401 = vpop.f32.mrf.mxu0
  %v1402 = vadd.f32 0.0, %v1401
  %1403 = vmatprep.mubr.f32.mxu0 0.0
  %1404 = vmatmul.mubr.f32.gmra.mxu0 %v65
  %v1405 = vpop.f32.mrf.mxu0
  %v1406 = vadd.f32 0.0, %v1405
  %v1407 = vpop.f32.mrf.mxu0
  %v1408 = vadd.f32 0.0, %v1407
  %1409 = vmatprep.mubr.f32.mxu0 0.0
  %1410 = vmatmul.mubr.f32.gmra.mxu0 %v66
  %v1411 = vpop.f32.mrf.mxu0
  %v1412 = vadd.f32 0.0, %v1411
  %v1413 = vpop.f32.mrf.mxu0
  %v1414 = vadd.f32 0.0, %v1413
  %1415 = vmatprep.mubr.f32.mxu0 0.0
  %1416 = vmatmul.mubr.f32.gmra.mxu0 %v67
  %v1417 = vpop.f32.mrf.mxu0
  %v1418 = vadd.f32 0.0, %v1417
  %v1419 = vpop.f32.mrf.mxu0
  %v1420 = vadd.f32 0.0, %v1419
  %1421 = vmatprep.mubr.f32.mxu0 0.0
  %1422 = vmatmul.mubr.f32.gmra.mxu0 %v68
  %v1423 = vpop.f32.mrf.mxu0
  %v1424 = vadd.f32 0.0, %v1423
  %v1425 = vpop.f32.mrf.mxu0
  %v1426 = vadd.f32 0.0, %v1425
  %1427 = vdwg.mxu0
  %1428 = vmatprep.subr.mxu0 %v1035
  %1429 = vmatpush1.msra.mxu0 %v1034
  %1430 = vmatprep.subr.mxu0 %v1033
  %1431 = vmatpush1.msra.mxu0 %v1032
  %1432 = vmatprep.subr.mxu0 %v1031
  %1433 = vmatpush1.msra.mxu0 %v1030
  %1434 = vmatprep.subr.mxu0 %v1029
  %1435 = vmatpush1.msra.mxu0 %v1028
  %1436 = vmatprep.subr.mxu0 %v1027
  %1437 = vmatpush1.msra.mxu0 %v1026
  %1438 = vmatprep.subr.mxu0 %v1025
  %1439 = vmatpush1.msra.mxu0 %v1024
  %1440 = vmatprep.subr.mxu0 %v1023
  %1441 = vmatpush1.msra.mxu0 %v1022
  %1442 = vmatprep.subr.mxu0 %v1021
  %1443 = vmatpush1.msra.mxu0 %v1020
  %1444 = vmatprep.subr.mxu0 %v1019
  %1445 = vmatpush1.msra.mxu0 %v1018
  %1446 = vmatprep.subr.mxu0 %v1017
  %1447 = vmatpush1.msra.mxu0 %v1016
  %1448 = vmatprep.subr.mxu0 %v1015
  %1449 = vmatpush1.msra.mxu0 %v1014
  %1450 = vmatprep.subr.mxu0 %v1013
  %1451 = vmatpush1.msra.mxu0 %v1012
  %1452 = vmatprep.subr.mxu0 %v1011
  %1453 = vmatpush1.msra.mxu0 %v1010
  %1454 = vmatprep.subr.mxu0 %v1009
  %1455 = vmatpush1.msra.mxu0 %v1008
  %1456 = vmatprep.subr.mxu0 %v1007
  %1457 = vmatpush1.msra.mxu0 %v1006
  %1458 = vmatprep.subr.mxu0 %v1005
  %1459 = vmatpush1.msra.mxu0 %v1004
  %1460 = vmatprep.subr.mxu0 0.0
  %1461 = vmatpush2.msra.mxu0 0.0
  %1462 = vmatprep.subr.mxu0 0.0
  %1463 = vmatpush2.msra.mxu0 0.0
  %1464 = vmatprep.subr.mxu0 0.0
  %1465 = vmatpush2.msra.mxu0 0.0
  %1466 = vmatprep.subr.mxu0 0.0
  %1467 = vmatpush2.msra.mxu0 0.0
  %1468 = vmatprep.subr.mxu0 0.0
  %1469 = vmatpush2.msra.mxu0 0.0
  %1470 = vmatprep.subr.mxu0 0.0
  %1471 = vmatpush2.msra.mxu0 0.0
  %1472 = vmatprep.subr.mxu0 0.0
  %1473 = vmatpush2.msra.mxu0 0.0
  %1474 = vmatprep.subr.mxu0 0.0
  %1475 = vmatpush2.msra.mxu0 0.0
  %1476 = vmatprep.subr.mxu0 0.0
  %1477 = vmatpush2.msra.mxu0 0.0
  %1478 = vmatprep.subr.mxu0 0.0
  %1479 = vmatpush2.msra.mxu0 0.0
  %1480 = vmatprep.subr.mxu0 0.0
  %1481 = vmatpush2.msra.mxu0 0.0
  %1482 = vmatprep.subr.mxu0 0.0
  %1483 = vmatpush2.msra.mxu0 0.0
  %1484 = vmatprep.subr.mxu0 0.0
  %1485 = vmatpush2.msra.mxu0 0.0
  %1486 = vmatprep.subr.mxu0 0.0
  %1487 = vmatpush2.msra.mxu0 0.0
  %1488 = vmatprep.subr.mxu0 0.0
  %1489 = vmatpush2.msra.mxu0 0.0
  %1490 = vmatprep.subr.mxu0 0.0
  %1491 = vmatpush2.msra.mxu0 0.0
  %1492 = vmatprep.mubr.f32.mxu0 0.0
  %1493 = vmatmul.mubr.f32.gmra.mxu0 %v562
  %v1494 = vpop.f32.mrf.mxu0
  %v1495 = vadd.f32 %v1136, %v1494
  %v1496 = vpop.f32.mrf.mxu0
  %v1497 = vadd.f32 %v1138, %v1496
  %1498 = vmatprep.mubr.f32.mxu0 0.0
  %1499 = vmatmul.mubr.f32.gmra.mxu0 %v563
  %v1500 = vpop.f32.mrf.mxu0
  %v1501 = vadd.f32 %v1142, %v1500
  %v1502 = vpop.f32.mrf.mxu0
  %v1503 = vadd.f32 %v1144, %v1502
  %1504 = vmatprep.mubr.f32.mxu0 0.0
  %1505 = vmatmul.mubr.f32.gmra.mxu0 %v564
  %v1506 = vpop.f32.mrf.mxu0
  %v1507 = vadd.f32 %v1148, %v1506
  %v1508 = vpop.f32.mrf.mxu0
  %v1509 = vadd.f32 %v1150, %v1508
  %1510 = vmatprep.mubr.f32.mxu0 0.0
  %1511 = vmatmul.mubr.f32.gmra.mxu0 %v565
  %v1512 = vpop.f32.mrf.mxu0
  %v1513 = vadd.f32 %v1154, %v1512
  %v1514 = vpop.f32.mrf.mxu0
  %v1515 = vadd.f32 %v1156, %v1514
  %1516 = vmatprep.mubr.f32.mxu0 0.0
  %1517 = vmatmul.mubr.f32.gmra.mxu0 %v566
  %v1518 = vpop.f32.mrf.mxu0
  %v1519 = vadd.f32 %v1160, %v1518
  %v1520 = vpop.f32.mrf.mxu0
  %v1521 = vadd.f32 %v1162, %v1520
  %1522 = vmatprep.mubr.f32.mxu0 0.0
  %1523 = vmatmul.mubr.f32.gmra.mxu0 %v567
  %v1524 = vpop.f32.mrf.mxu0
  %v1525 = vadd.f32 %v1166, %v1524
  %v1526 = vpop.f32.mrf.mxu0
  %v1527 = vadd.f32 %v1168, %v1526
  %1528 = vmatprep.mubr.f32.mxu0 0.0
  %1529 = vmatmul.mubr.f32.gmra.mxu0 %v568
  %v1530 = vpop.f32.mrf.mxu0
  %v1531 = vadd.f32 %v1172, %v1530
  %v1532 = vpop.f32.mrf.mxu0
  %v1533 = vadd.f32 %v1174, %v1532
  %1534 = vmatprep.mubr.f32.mxu0 0.0
  %1535 = vmatmul.mubr.f32.gmra.mxu0 %v569
  %v1536 = vpop.f32.mrf.mxu0
  %v1537 = vadd.f32 %v1178, %v1536
  %v1538 = vpop.f32.mrf.mxu0
  %v1539 = vadd.f32 %v1180, %v1538
  %1540 = vmatprep.mubr.f32.mxu0 0.0
  %1541 = vmatmul.mubr.f32.gmra.mxu0 %v570
  %v1542 = vpop.f32.mrf.mxu0
  %v1543 = vadd.f32 %v1184, %v1542
  %v1544 = vpop.f32.mrf.mxu0
  %v1545 = vadd.f32 %v1186, %v1544
  %1546 = vmatprep.mubr.f32.mxu0 0.0
  %1547 = vmatmul.mubr.f32.gmra.mxu0 %v571
  %v1548 = vpop.f32.mrf.mxu0
  %v1549 = vadd.f32 %v1190, %v1548
  %v1550 = vpop.f32.mrf.mxu0
  %v1551 = vadd.f32 %v1192, %v1550
  %1552 = vmatprep.mubr.f32.mxu0 0.0
  %1553 = vmatmul.mubr.f32.gmra.mxu0 %v572
  %v1554 = vpop.f32.mrf.mxu0
  %v1555 = vadd.f32 %v1196, %v1554
  %v1556 = vpop.f32.mrf.mxu0
  %v1557 = vadd.f32 %v1198, %v1556
  %1558 = vmatprep.mubr.f32.mxu0 0.0
  %1559 = vmatmul.mubr.f32.gmra.mxu0 %v573
  %v1560 = vpop.f32.mrf.mxu0
  %v1561 = vadd.f32 %v1202, %v1560
  %v1562 = vpop.f32.mrf.mxu0
  %v1563 = vadd.f32 %v1204, %v1562
  %1564 = vmatprep.mubr.f32.mxu0 0.0
  %1565 = vmatmul.mubr.f32.gmra.mxu0 %v574
  %v1566 = vpop.f32.mrf.mxu0
  %v1567 = vadd.f32 %v1208, %v1566
  %v1568 = vpop.f32.mrf.mxu0
  %v1569 = vadd.f32 %v1210, %v1568
  %1570 = vmatprep.mubr.f32.mxu0 0.0
  %1571 = vmatmul.mubr.f32.gmra.mxu0 %v575
  %v1572 = vpop.f32.mrf.mxu0
  %v1573 = vadd.f32 %v1214, %v1572
  %v1574 = vpop.f32.mrf.mxu0
  %v1575 = vadd.f32 %v1216, %v1574
  %1576 = vmatprep.mubr.f32.mxu0 0.0
  %1577 = vmatmul.mubr.f32.gmra.mxu0 %v576
  %v1578 = vpop.f32.mrf.mxu0
  %v1579 = vadd.f32 %v1220, %v1578
  %v1580 = vpop.f32.mrf.mxu0
  %v1581 = vadd.f32 %v1222, %v1580
  %1582 = vmatprep.mubr.f32.mxu0 0.0
  %1583 = vmatmul.mubr.f32.gmra.mxu0 %v577
  %v1584 = vpop.f32.mrf.mxu0
  %v1585 = vadd.f32 %v1226, %v1584
  %v1586 = vpop.f32.mrf.mxu0
  %v1587 = vadd.f32 %v1228, %v1586
  %1588 = vmatprep.mubr.f32.mxu0 0.0
  %1589 = vmatmul.mubr.f32.gmra.mxu0 %v578
  %v1590 = vpop.f32.mrf.mxu0
  %v1591 = vadd.f32 %v1232, %v1590
  %v1592 = vpop.f32.mrf.mxu0
  %v1593 = vadd.f32 %v1234, %v1592
  %1594 = vmatprep.mubr.f32.mxu0 0.0
  %1595 = vmatmul.mubr.f32.gmra.mxu0 %v579
  %v1596 = vpop.f32.mrf.mxu0
  %v1597 = vadd.f32 %v1238, %v1596
  %v1598 = vpop.f32.mrf.mxu0
  %v1599 = vadd.f32 %v1240, %v1598
  %1600 = vmatprep.mubr.f32.mxu0 0.0
  %1601 = vmatmul.mubr.f32.gmra.mxu0 %v580
  %v1602 = vpop.f32.mrf.mxu0
  %v1603 = vadd.f32 %v1244, %v1602
  %v1604 = vpop.f32.mrf.mxu0
  %v1605 = vadd.f32 %v1246, %v1604
  %1606 = vmatprep.mubr.f32.mxu0 0.0
  %1607 = vmatmul.mubr.f32.gmra.mxu0 %v581
  %v1608 = vpop.f32.mrf.mxu0
  %v1609 = vadd.f32 %v1250, %v1608
  %v1610 = vpop.f32.mrf.mxu0
  %v1611 = vadd.f32 %v1252, %v1610
  %1612 = vmatprep.mubr.f32.mxu0 0.0
  %1613 = vmatmul.mubr.f32.gmra.mxu0 %v582
  %v1614 = vpop.f32.mrf.mxu0
  %v1615 = vadd.f32 %v1256, %v1614
  %v1616 = vpop.f32.mrf.mxu0
  %v1617 = vadd.f32 %v1258, %v1616
  %1618 = vmatprep.mubr.f32.mxu0 0.0
  %1619 = vmatmul.mubr.f32.gmra.mxu0 %v583
  %v1620 = vpop.f32.mrf.mxu0
  %v1621 = vadd.f32 %v1262, %v1620
  %v1622 = vpop.f32.mrf.mxu0
  %v1623 = vadd.f32 %v1264, %v1622
  %1624 = vmatprep.mubr.f32.mxu0 0.0
  %1625 = vmatmul.mubr.f32.gmra.mxu0 %v584
  %v1626 = vpop.f32.mrf.mxu0
  %v1627 = vadd.f32 %v1268, %v1626
  %v1628 = vpop.f32.mrf.mxu0
  %v1629 = vadd.f32 %v1270, %v1628
  %1630 = vmatprep.mubr.f32.mxu0 0.0
  %1631 = vmatmul.mubr.f32.gmra.mxu0 %v585
  %v1632 = vpop.f32.mrf.mxu0
  %v1633 = vadd.f32 %v1274, %v1632
  %v1634 = vpop.f32.mrf.mxu0
  %v1635 = vadd.f32 %v1276, %v1634
  %1636 = vmatprep.mubr.f32.mxu0 0.0
  %1637 = vmatmul.mubr.f32.gmra.mxu0 %v586
  %v1638 = vpop.f32.mrf.mxu0
  %v1639 = vadd.f32 %v1280, %v1638
  %v1640 = vpop.f32.mrf.mxu0
  %v1641 = vadd.f32 %v1282, %v1640
  %1642 = vmatprep.mubr.f32.mxu0 0.0
  %1643 = vmatmul.mubr.f32.gmra.mxu0 %v587
  %v1644 = vpop.f32.mrf.mxu0
  %v1645 = vadd.f32 %v1286, %v1644
  %v1646 = vpop.f32.mrf.mxu0
  %v1647 = vadd.f32 %v1288, %v1646
  %1648 = vmatprep.mubr.f32.mxu0 0.0
  %1649 = vmatmul.mubr.f32.gmra.mxu0 %v588
  %v1650 = vpop.f32.mrf.mxu0
  %v1651 = vadd.f32 %v1292, %v1650
  %v1652 = vpop.f32.mrf.mxu0
  %v1653 = vadd.f32 %v1294, %v1652
  %1654 = vmatprep.mubr.f32.mxu0 0.0
  %1655 = vmatmul.mubr.f32.gmra.mxu0 %v589
  %v1656 = vpop.f32.mrf.mxu0
  %v1657 = vadd.f32 %v1298, %v1656
  %v1658 = vpop.f32.mrf.mxu0
  %v1659 = vadd.f32 %v1300, %v1658
  %1660 = vmatprep.mubr.f32.mxu0 0.0
  %1661 = vmatmul.mubr.f32.gmra.mxu0 %v590
  %v1662 = vpop.f32.mrf.mxu0
  %v1663 = vadd.f32 %v1304, %v1662
  %v1664 = vpop.f32.mrf.mxu0
  %v1665 = vadd.f32 %v1306, %v1664
  %1666 = vmatprep.mubr.f32.mxu0 0.0
  %1667 = vmatmul.mubr.f32.gmra.mxu0 %v591
  %v1668 = vpop.f32.mrf.mxu0
  %v1669 = vadd.f32 %v1310, %v1668
  %v1670 = vpop.f32.mrf.mxu0
  %v1671 = vadd.f32 %v1312, %v1670
  %1672 = vmatprep.mubr.f32.mxu0 0.0
  %1673 = vmatmul.mubr.f32.gmra.mxu0 %v592
  %v1674 = vpop.f32.mrf.mxu0
  %v1675 = vadd.f32 %v1316, %v1674
  %v1676 = vpop.f32.mrf.mxu0
  %v1677 = vadd.f32 %v1318, %v1676
  %1678 = vmatprep.mubr.f32.mxu0 0.0
  %1679 = vmatmul.mubr.f32.gmra.mxu0 %v593
  %v1680 = vpop.f32.mrf.mxu0
  %v1681 = vadd.f32 %v1322, %v1680
  %v1682 = vpop.f32.mrf.mxu0
  %v1683 = vadd.f32 %v1324, %v1682
  %1684 = vmatprep.mubr.f32.mxu0 0.0
  %1685 = vmatmul.mubr.f32.gmra.mxu0 %v594
  %v1686 = vpop.f32.mrf.mxu0
  %v1687 = vadd.f32 %v1328, %v1686
  %v1688 = vpop.f32.mrf.mxu0
  %v1689 = vadd.f32 %v1330, %v1688
  %1690 = vmatprep.mubr.f32.mxu0 0.0
  %1691 = vmatmul.mubr.f32.gmra.mxu0 %v595
  %v1692 = vpop.f32.mrf.mxu0
  %v1693 = vadd.f32 %v1334, %v1692
  %v1694 = vpop.f32.mrf.mxu0
  %v1695 = vadd.f32 %v1336, %v1694
  %1696 = vmatprep.mubr.f32.mxu0 0.0
  %1697 = vmatmul.mubr.f32.gmra.mxu0 %v596
  %v1698 = vpop.f32.mrf.mxu0
  %v1699 = vadd.f32 %v1340, %v1698
  %v1700 = vpop.f32.mrf.mxu0
  %v1701 = vadd.f32 %v1342, %v1700
  %1702 = vmatprep.mubr.f32.mxu0 0.0
  %1703 = vmatmul.mubr.f32.gmra.mxu0 %v597
  %v1704 = vpop.f32.mrf.mxu0
  %v1705 = vadd.f32 %v1346, %v1704
  %v1706 = vpop.f32.mrf.mxu0
  %v1707 = vadd.f32 %v1348, %v1706
  %1708 = vmatprep.mubr.f32.mxu0 0.0
  %1709 = vmatmul.mubr.f32.gmra.mxu0 %v598
  %v1710 = vpop.f32.mrf.mxu0
  %v1711 = vadd.f32 %v1352, %v1710
  %v1712 = vpop.f32.mrf.mxu0
  %v1713 = vadd.f32 %v1354, %v1712
  %1714 = vmatprep.mubr.f32.mxu0 0.0
  %1715 = vmatmul.mubr.f32.gmra.mxu0 %v599
  %v1716 = vpop.f32.mrf.mxu0
  %v1717 = vadd.f32 %v1358, %v1716
  %v1718 = vpop.f32.mrf.mxu0
  %v1719 = vadd.f32 %v1360, %v1718
  %1720 = vmatprep.mubr.f32.mxu0 0.0
  %1721 = vmatmul.mubr.f32.gmra.mxu0 %v600
  %v1722 = vpop.f32.mrf.mxu0
  %v1723 = vadd.f32 %v1364, %v1722
  %v1724 = vpop.f32.mrf.mxu0
  %v1725 = vadd.f32 %v1366, %v1724
  %1726 = vmatprep.mubr.f32.mxu0 0.0
  %1727 = vmatmul.mubr.f32.gmra.mxu0 %v601
  %v1728 = vpop.f32.mrf.mxu0
  %v1729 = vadd.f32 %v1370, %v1728
  %v1730 = vpop.f32.mrf.mxu0
  %v1731 = vadd.f32 %v1372, %v1730
  %1732 = vmatprep.mubr.f32.mxu0 0.0
  %1733 = vmatmul.mubr.f32.gmra.mxu0 %v602
  %v1734 = vpop.f32.mrf.mxu0
  %v1735 = vadd.f32 %v1376, %v1734
  %v1736 = vpop.f32.mrf.mxu0
  %v1737 = vadd.f32 %v1378, %v1736
  %1738 = vmatprep.mubr.f32.mxu0 0.0
  %1739 = vmatmul.mubr.f32.gmra.mxu0 %v603
  %v1740 = vpop.f32.mrf.mxu0
  %v1741 = vadd.f32 %v1382, %v1740
  %v1742 = vpop.f32.mrf.mxu0
  %v1743 = vadd.f32 %v1384, %v1742
  %1744 = vmatprep.mubr.f32.mxu0 0.0
  %1745 = vmatmul.mubr.f32.gmra.mxu0 %v604
  %v1746 = vpop.f32.mrf.mxu0
  %v1747 = vadd.f32 %v1388, %v1746
  %v1748 = vpop.f32.mrf.mxu0
  %v1749 = vadd.f32 %v1390, %v1748
  %1750 = vmatprep.mubr.f32.mxu0 0.0
  %1751 = vmatmul.mubr.f32.gmra.mxu0 %v605
  %v1752 = vpop.f32.mrf.mxu0
  %v1753 = vadd.f32 %v1394, %v1752
  %v1754 = vpop.f32.mrf.mxu0
  %v1755 = vadd.f32 %v1396, %v1754
  %1756 = vmatprep.mubr.f32.mxu0 0.0
  %1757 = vmatmul.mubr.f32.gmra.mxu0 %v606
  %v1758 = vpop.f32.mrf.mxu0
  %v1759 = vadd.f32 %v1400, %v1758
  %v1760 = vpop.f32.mrf.mxu0
  %v1761 = vadd.f32 %v1402, %v1760
  %1762 = vmatprep.mubr.f32.mxu0 0.0
  %1763 = vmatmul.mubr.f32.gmra.mxu0 %v607
  %v1764 = vpop.f32.mrf.mxu0
  %v1765 = vadd.f32 %v1406, %v1764
  %v1766 = vpop.f32.mrf.mxu0
  %v1767 = vadd.f32 %v1408, %v1766
  %1768 = vmatprep.mubr.f32.mxu0 0.0
  %1769 = vmatmul.mubr.f32.gmra.mxu0 %v608
  %v1770 = vpop.f32.mrf.mxu0
  %v1771 = vadd.f32 %v1412, %v1770
  %v1772 = vpop.f32.mrf.mxu0
  %v1773 = vadd.f32 %v1414, %v1772
  %1774 = vmatprep.mubr.f32.mxu0 0.0
  %1775 = vmatmul.mubr.f32.gmra.mxu0 %v609
  %v1776 = vpop.f32.mrf.mxu0
  %v1777 = vadd.f32 %v1418, %v1776
  %v1778 = vpop.f32.mrf.mxu0
  %v1779 = vadd.f32 %v1420, %v1778
  %1780 = vmatprep.mubr.f32.mxu0 0.0
  %1781 = vmatmul.mubr.f32.gmra.mxu0 %v610
  %v1782 = vpop.f32.mrf.mxu0
  %v1783 = vadd.f32 %v1424, %v1782
  %v1784 = vpop.f32.mrf.mxu0
  %v1785 = vadd.f32 %v1426, %v1784
  %1786 = vdwg.mxu0
  %s1787 = scalar_lea.vmem %s1, 512
  %v1788 = vld [vmem:[%s1787] sm:$0xff]
  %v1789 = vld [vmem:[%s1787 + $0x8] sm:$0xff]
  %v1790 = vld [vmem:[%s1787 + $0x10] sm:$0xff]
  %v1791 = vld [vmem:[%s1787 + $0x18] sm:$0xff]
  %v1792 = vld [vmem:[%s1787 + $0x20] sm:$0xff]
  %v1793 = vld [vmem:[%s1787 + $0x28] sm:$0xff]
  %v1794 = vld [vmem:[%s1787 + $0x30] sm:$0xff]
  %v1795 = vld [vmem:[%s1787 + $0x38] sm:$0xff]
  %v1796 = vld [vmem:[%s1787 + $0x40] sm:$0xff]
  %v1797 = vld [vmem:[%s1787 + $0x48] sm:$0xff]
  %v1798 = vld [vmem:[%s1787 + $0x50] sm:$0xff]
  %v1799 = vld [vmem:[%s1787 + $0x58] sm:$0xff]
  %v1800 = vld [vmem:[%s1787 + $0x60] sm:$0xff]
  %v1801 = vld [vmem:[%s1787 + $0x68] sm:$0xff]
  %v1802 = vld [vmem:[%s1787 + $0x70] sm:$0xff]
  %v1803 = vld [vmem:[%s1787 + $0x78] sm:$0xff]
  %v1804 = vld [vmem:[%s1787 + $0x80] sm:$0xff]
  %v1805 = vld [vmem:[%s1787 + $0x88] sm:$0xff]
  %v1806 = vld [vmem:[%s1787 + $0x90] sm:$0xff]
  %v1807 = vld [vmem:[%s1787 + $0x98] sm:$0xff]
  %v1808 = vld [vmem:[%s1787 + $0xa0] sm:$0xff]
  %v1809 = vld [vmem:[%s1787 + $0xa8] sm:$0xff]
  %v1810 = vld [vmem:[%s1787 + $0xb0] sm:$0xff]
  %v1811 = vld [vmem:[%s1787 + $0xb8] sm:$0xff]
  %v1812 = vld [vmem:[%s1787 + $0xc0] sm:$0xff]
  %v1813 = vld [vmem:[%s1787 + $0xc8] sm:$0xff]
  %v1814 = vld [vmem:[%s1787 + $0xd0] sm:$0xff]
  %v1815 = vld [vmem:[%s1787 + $0xd8] sm:$0xff]
  %v1816 = vld [vmem:[%s1787 + $0xe0] sm:$0xff]
  %v1817 = vld [vmem:[%s1787 + $0xe8] sm:$0xff]
  %v1818 = vld [vmem:[%s1787 + $0xf0] sm:$0xff]
  %v1819 = vld [vmem:[%s1787 + $0xf8] sm:$0xff]
  %1820 = vmatprep.subr.mxu0 %v1819
  %1821 = vmatpush1.msra.mxu0 %v1818
  %1822 = vmatprep.subr.mxu0 %v1817
  %1823 = vmatpush1.msra.mxu0 %v1816
  %1824 = vmatprep.subr.mxu0 %v1815
  %1825 = vmatpush1.msra.mxu0 %v1814
  %1826 = vmatprep.subr.mxu0 %v1813
  %1827 = vmatpush1.msra.mxu0 %v1812
  %1828 = vmatprep.subr.mxu0 %v1811
  %1829 = vmatpush1.msra.mxu0 %v1810
  %1830 = vmatprep.subr.mxu0 %v1809
  %1831 = vmatpush1.msra.mxu0 %v1808
  %1832 = vmatprep.subr.mxu0 %v1807
  %1833 = vmatpush1.msra.mxu0 %v1806
  %1834 = vmatprep.subr.mxu0 %v1805
  %1835 = vmatpush1.msra.mxu0 %v1804
  %1836 = vmatprep.subr.mxu0 %v1803
  %1837 = vmatpush1.msra.mxu0 %v1802
  %1838 = vmatprep.subr.mxu0 %v1801
  %1839 = vmatpush1.msra.mxu0 %v1800
  %1840 = vmatprep.subr.mxu0 %v1799
  %1841 = vmatpush1.msra.mxu0 %v1798
  %1842 = vmatprep.subr.mxu0 %v1797
  %1843 = vmatpush1.msra.mxu0 %v1796
  %1844 = vmatprep.subr.mxu0 %v1795
  %1845 = vmatpush1.msra.mxu0 %v1794
  %1846 = vmatprep.subr.mxu0 %v1793
  %1847 = vmatpush1.msra.mxu0 %v1792
  %1848 = vmatprep.subr.mxu0 %v1791
  %1849 = vmatpush1.msra.mxu0 %v1790
  %1850 = vmatprep.subr.mxu0 %v1789
  %1851 = vmatpush1.msra.mxu0 %v1788
  %1852 = vmatprep.subr.mxu0 0.0
  %1853 = vmatpush2.msra.mxu0 0.0
  %1854 = vmatprep.subr.mxu0 0.0
  %1855 = vmatpush2.msra.mxu0 0.0
  %1856 = vmatprep.subr.mxu0 0.0
  %1857 = vmatpush2.msra.mxu0 0.0
  %1858 = vmatprep.subr.mxu0 0.0
  %1859 = vmatpush2.msra.mxu0 0.0
  %1860 = vmatprep.subr.mxu0 0.0
  %1861 = vmatpush2.msra.mxu0 0.0
  %1862 = vmatprep.subr.mxu0 0.0
  %1863 = vmatpush2.msra.mxu0 0.0
  %1864 = vmatprep.subr.mxu0 0.0
  %1865 = vmatpush2.msra.mxu0 0.0
  %1866 = vmatprep.subr.mxu0 0.0
  %1867 = vmatpush2.msra.mxu0 0.0
  %1868 = vmatprep.subr.mxu0 0.0
  %1869 = vmatpush2.msra.mxu0 0.0
  %1870 = vmatprep.subr.mxu0 0.0
  %1871 = vmatpush2.msra.mxu0 0.0
  %1872 = vmatprep.subr.mxu0 0.0
  %1873 = vmatpush2.msra.mxu0 0.0
  %1874 = vmatprep.subr.mxu0 0.0
  %1875 = vmatpush2.msra.mxu0 0.0
  %1876 = vmatprep.subr.mxu0 0.0
  %1877 = vmatpush2.msra.mxu0 0.0
  %1878 = vmatprep.subr.mxu0 0.0
  %1879 = vmatpush2.msra.mxu0 0.0
  %1880 = vmatprep.subr.mxu0 0.0
  %1881 = vmatpush2.msra.mxu0 0.0
  %1882 = vmatprep.subr.mxu0 0.0
  %1883 = vmatpush2.msra.mxu0 0.0
  %1884 = vmatprep.mubr.f32.mxu0 0.0
  %1885 = vmatmul.mubr.f32.gmra.mxu0 %v955
  %v1886 = vpop.f32.mrf.mxu0
  %v1887 = vadd.f32 0.0, %v1886
  %v1888 = vpop.f32.mrf.mxu0
  %v1889 = vadd.f32 0.0, %v1888
  %1890 = vmatprep.mubr.f32.mxu0 0.0
  %1891 = vmatmul.mubr.f32.gmra.mxu0 %v956
  %v1892 = vpop.f32.mrf.mxu0
  %v1893 = vadd.f32 0.0, %v1892
  %v1894 = vpop.f32.mrf.mxu0
  %v1895 = vadd.f32 0.0, %v1894
  %1896 = vmatprep.mubr.f32.mxu0 0.0
  %1897 = vmatmul.mubr.f32.gmra.mxu0 %v957
  %v1898 = vpop.f32.mrf.mxu0
  %v1899 = vadd.f32 0.0, %v1898
  %v1900 = vpop.f32.mrf.mxu0
  %v1901 = vadd.f32 0.0, %v1900
  %1902 = vmatprep.mubr.f32.mxu0 0.0
  %1903 = vmatmul.mubr.f32.gmra.mxu0 %v958
  %v1904 = vpop.f32.mrf.mxu0
  %v1905 = vadd.f32 0.0, %v1904
  %v1906 = vpop.f32.mrf.mxu0
  %v1907 = vadd.f32 0.0, %v1906
  %1908 = vmatprep.mubr.f32.mxu0 0.0
  %1909 = vmatmul.mubr.f32.gmra.mxu0 %v959
  %v1910 = vpop.f32.mrf.mxu0
  %v1911 = vadd.f32 0.0, %v1910
  %v1912 = vpop.f32.mrf.mxu0
  %v1913 = vadd.f32 0.0, %v1912
  %1914 = vmatprep.mubr.f32.mxu0 0.0
  %1915 = vmatmul.mubr.f32.gmra.mxu0 %v960
  %v1916 = vpop.f32.mrf.mxu0
  %v1917 = vadd.f32 0.0, %v1916
  %v1918 = vpop.f32.mrf.mxu0
  %v1919 = vadd.f32 0.0, %v1918
  %1920 = vmatprep.mubr.f32.mxu0 0.0
  %1921 = vmatmul.mubr.f32.gmra.mxu0 %v961
  %v1922 = vpop.f32.mrf.mxu0
  %v1923 = vadd.f32 0.0, %v1922
  %v1924 = vpop.f32.mrf.mxu0
  %v1925 = vadd.f32 0.0, %v1924
  %1926 = vmatprep.mubr.f32.mxu0 0.0
  %1927 = vmatmul.mubr.f32.gmra.mxu0 %v962
  %v1928 = vpop.f32.mrf.mxu0
  %v1929 = vadd.f32 0.0, %v1928
  %v1930 = vpop.f32.mrf.mxu0
  %v1931 = vadd.f32 0.0, %v1930
  %1932 = vmatprep.mubr.f32.mxu0 0.0
  %1933 = vmatmul.mubr.f32.gmra.mxu0 %v963
  %v1934 = vpop.f32.mrf.mxu0
  %v1935 = vadd.f32 0.0, %v1934
  %v1936 = vpop.f32.mrf.mxu0
  %v1937 = vadd.f32 0.0, %v1936
  %1938 = vmatprep.mubr.f32.mxu0 0.0
  %1939 = vmatmul.mubr.f32.gmra.mxu0 %v964
  %v1940 = vpop.f32.mrf.mxu0
  %v1941 = vadd.f32 0.0, %v1940
  %v1942 = vpop.f32.mrf.mxu0
  %v1943 = vadd.f32 0.0, %v1942
  %1944 = vmatprep.mubr.f32.mxu0 0.0
  %1945 = vmatmul.mubr.f32.gmra.mxu0 %v965
  %v1946 = vpop.f32.mrf.mxu0
  %v1947 = vadd.f32 0.0, %v1946
  %v1948 = vpop.f32.mrf.mxu0
  %v1949 = vadd.f32 0.0, %v1948
  %1950 = vmatprep.mubr.f32.mxu0 0.0
  %1951 = vmatmul.mubr.f32.gmra.mxu0 %v966
  %v1952 = vpop.f32.mrf.mxu0
  %v1953 = vadd.f32 0.0, %v1952
  %v1954 = vpop.f32.mrf.mxu0
  %v1955 = vadd.f32 0.0, %v1954
  %1956 = vmatprep.mubr.f32.mxu0 0.0
  %1957 = vmatmul.mubr.f32.gmra.mxu0 %v967
  %v1958 = vpop.f32.mrf.mxu0
  %v1959 = vadd.f32 0.0, %v1958
  %v1960 = vpop.f32.mrf.mxu0
  %v1961 = vadd.f32 0.0, %v1960
  %1962 = vmatprep.mubr.f32.mxu0 0.0
  %1963 = vmatmul.mubr.f32.gmra.mxu0 %v968
  %v1964 = vpop.f32.mrf.mxu0
  %v1965 = vadd.f32 0.0, %v1964
  %v1966 = vpop.f32.mrf.mxu0
  %v1967 = vadd.f32 0.0, %v1966
  %1968 = vmatprep.mubr.f32.mxu0 0.0
  %1969 = vmatmul.mubr.f32.gmra.mxu0 %v969
  %v1970 = vpop.f32.mrf.mxu0
  %v1971 = vadd.f32 0.0, %v1970
  %v1972 = vpop.f32.mrf.mxu0
  %v1973 = vadd.f32 0.0, %v1972
  %1974 = vmatprep.mubr.f32.mxu0 0.0
  %1975 = vmatmul.mubr.f32.gmra.mxu0 %v970
  %v1976 = vpop.f32.mrf.mxu0
  %v1977 = vadd.f32 0.0, %v1976
  %v1978 = vpop.f32.mrf.mxu0
  %v1979 = vadd.f32 0.0, %v1978
  %1980 = vmatprep.mubr.f32.mxu0 0.0
  %1981 = vmatmul.mubr.f32.gmra.mxu0 %v971
  %v1982 = vpop.f32.mrf.mxu0
  %v1983 = vadd.f32 0.0, %v1982
  %v1984 = vpop.f32.mrf.mxu0
  %v1985 = vadd.f32 0.0, %v1984
  %1986 = vmatprep.mubr.f32.mxu0 0.0
  %1987 = vmatmul.mubr.f32.gmra.mxu0 %v972
  %v1988 = vpop.f32.mrf.mxu0
  %v1989 = vadd.f32 0.0, %v1988
  %v1990 = vpop.f32.mrf.mxu0
  %v1991 = vadd.f32 0.0, %v1990
  %1992 = vmatprep.mubr.f32.mxu0 0.0
  %1993 = vmatmul.mubr.f32.gmra.mxu0 %v973
  %v1994 = vpop.f32.mrf.mxu0
  %v1995 = vadd.f32 0.0, %v1994
  %v1996 = vpop.f32.mrf.mxu0
  %v1997 = vadd.f32 0.0, %v1996
  %1998 = vmatprep.mubr.f32.mxu0 0.0
  %1999 = vmatmul.mubr.f32.gmra.mxu0 %v974
  %v2000 = vpop.f32.mrf.mxu0
  %v2001 = vadd.f32 0.0, %v2000
  %v2002 = vpop.f32.mrf.mxu0
  %v2003 = vadd.f32 0.0, %v2002
  %2004 = vmatprep.mubr.f32.mxu0 0.0
  %2005 = vmatmul.mubr.f32.gmra.mxu0 %v975
  %v2006 = vpop.f32.mrf.mxu0
  %v2007 = vadd.f32 0.0, %v2006
  %v2008 = vpop.f32.mrf.mxu0
  %v2009 = vadd.f32 0.0, %v2008
  %2010 = vmatprep.mubr.f32.mxu0 0.0
  %2011 = vmatmul.mubr.f32.gmra.mxu0 %v976
  %v2012 = vpop.f32.mrf.mxu0
  %v2013 = vadd.f32 0.0, %v2012
  %v2014 = vpop.f32.mrf.mxu0
  %v2015 = vadd.f32 0.0, %v2014
  %2016 = vmatprep.mubr.f32.mxu0 0.0
  %2017 = vmatmul.mubr.f32.gmra.mxu0 %v977
  %v2018 = vpop.f32.mrf.mxu0
  %v2019 = vadd.f32 0.0, %v2018
  %v2020 = vpop.f32.mrf.mxu0
  %v2021 = vadd.f32 0.0, %v2020
  %2022 = vmatprep.mubr.f32.mxu0 0.0
  %2023 = vmatmul.mubr.f32.gmra.mxu0 %v978
  %v2024 = vpop.f32.mrf.mxu0
  %v2025 = vadd.f32 0.0, %v2024
  %v2026 = vpop.f32.mrf.mxu0
  %v2027 = vadd.f32 0.0, %v2026
  %2028 = vmatprep.mubr.f32.mxu0 0.0
  %2029 = vmatmul.mubr.f32.gmra.mxu0 %v979
  %v2030 = vpop.f32.mrf.mxu0
  %v2031 = vadd.f32 0.0, %v2030
  %v2032 = vpop.f32.mrf.mxu0
  %v2033 = vadd.f32 0.0, %v2032
  %2034 = vmatprep.mubr.f32.mxu0 0.0
  %2035 = vmatmul.mubr.f32.gmra.mxu0 %v980
  %v2036 = vpop.f32.mrf.mxu0
  %v2037 = vadd.f32 0.0, %v2036
  %v2038 = vpop.f32.mrf.mxu0
  %v2039 = vadd.f32 0.0, %v2038
  %2040 = vmatprep.mubr.f32.mxu0 0.0
  %2041 = vmatmul.mubr.f32.gmra.mxu0 %v981
  %v2042 = vpop.f32.mrf.mxu0
  %v2043 = vadd.f32 0.0, %v2042
  %v2044 = vpop.f32.mrf.mxu0
  %v2045 = vadd.f32 0.0, %v2044
  %2046 = vmatprep.mubr.f32.mxu0 0.0
  %2047 = vmatmul.mubr.f32.gmra.mxu0 %v982
  %v2048 = vpop.f32.mrf.mxu0
  %v2049 = vadd.f32 0.0, %v2048
  %v2050 = vpop.f32.mrf.mxu0
  %v2051 = vadd.f32 0.0, %v2050
  %2052 = vmatprep.mubr.f32.mxu0 0.0
  %2053 = vmatmul.mubr.f32.gmra.mxu0 %v983
  %v2054 = vpop.f32.mrf.mxu0
  %v2055 = vadd.f32 0.0, %v2054
  %v2056 = vpop.f32.mrf.mxu0
  %v2057 = vadd.f32 0.0, %v2056
  %2058 = vmatprep.mubr.f32.mxu0 0.0
  %2059 = vmatmul.mubr.f32.gmra.mxu0 %v984
  %v2060 = vpop.f32.mrf.mxu0
  %v2061 = vadd.f32 0.0, %v2060
  %v2062 = vpop.f32.mrf.mxu0
  %v2063 = vadd.f32 0.0, %v2062
  %2064 = vmatprep.mubr.f32.mxu0 0.0
  %2065 = vmatmul.mubr.f32.gmra.mxu0 %v985
  %v2066 = vpop.f32.mrf.mxu0
  %v2067 = vadd.f32 0.0, %v2066
  %v2068 = vpop.f32.mrf.mxu0
  %v2069 = vadd.f32 0.0, %v2068
  %2070 = vmatprep.mubr.f32.mxu0 0.0
  %2071 = vmatmul.mubr.f32.gmra.mxu0 %v986
  %v2072 = vpop.f32.mrf.mxu0
  %v2073 = vadd.f32 0.0, %v2072
  %v2074 = vpop.f32.mrf.mxu0
  %v2075 = vadd.f32 0.0, %v2074
  %2076 = vmatprep.mubr.f32.mxu0 0.0
  %2077 = vmatmul.mubr.f32.gmra.mxu0 %v987
  %v2078 = vpop.f32.mrf.mxu0
  %v2079 = vadd.f32 0.0, %v2078
  %v2080 = vpop.f32.mrf.mxu0
  %v2081 = vadd.f32 0.0, %v2080
  %2082 = vmatprep.mubr.f32.mxu0 0.0
  %2083 = vmatmul.mubr.f32.gmra.mxu0 %v988
  %v2084 = vpop.f32.mrf.mxu0
  %v2085 = vadd.f32 0.0, %v2084
  %v2086 = vpop.f32.mrf.mxu0
  %v2087 = vadd.f32 0.0, %v2086
  %2088 = vmatprep.mubr.f32.mxu0 0.0
  %2089 = vmatmul.mubr.f32.gmra.mxu0 %v989
  %v2090 = vpop.f32.mrf.mxu0
  %v2091 = vadd.f32 0.0, %v2090
  %v2092 = vpop.f32.mrf.mxu0
  %v2093 = vadd.f32 0.0, %v2092
  %2094 = vmatprep.mubr.f32.mxu0 0.0
  %2095 = vmatmul.mubr.f32.gmra.mxu0 %v990
  %v2096 = vpop.f32.mrf.mxu0
  %v2097 = vadd.f32 0.0, %v2096
  %v2098 = vpop.f32.mrf.mxu0
  %v2099 = vadd.f32 0.0, %v2098
  %2100 = vmatprep.mubr.f32.mxu0 0.0
  %2101 = vmatmul.mubr.f32.gmra.mxu0 %v991
  %v2102 = vpop.f32.mrf.mxu0
  %v2103 = vadd.f32 0.0, %v2102
  %v2104 = vpop.f32.mrf.mxu0
  %v2105 = vadd.f32 0.0, %v2104
  %2106 = vmatprep.mubr.f32.mxu0 0.0
  %2107 = vmatmul.mubr.f32.gmra.mxu0 %v992
  %v2108 = vpop.f32.mrf.mxu0
  %v2109 = vadd.f32 0.0, %v2108
  %v2110 = vpop.f32.mrf.mxu0
  %v2111 = vadd.f32 0.0, %v2110
  %2112 = vmatprep.mubr.f32.mxu0 0.0
  %2113 = vmatmul.mubr.f32.gmra.mxu0 %v993
  %v2114 = vpop.f32.mrf.mxu0
  %v2115 = vadd.f32 0.0, %v2114
  %v2116 = vpop.f32.mrf.mxu0
  %v2117 = vadd.f32 0.0, %v2116
  %2118 = vmatprep.mubr.f32.mxu0 0.0
  %2119 = vmatmul.mubr.f32.gmra.mxu0 %v994
  %v2120 = vpop.f32.mrf.mxu0
  %v2121 = vadd.f32 0.0, %v2120
  %v2122 = vpop.f32.mrf.mxu0
  %v2123 = vadd.f32 0.0, %v2122
  %2124 = vmatprep.mubr.f32.mxu0 0.0
  %2125 = vmatmul.mubr.f32.gmra.mxu0 %v995
  %v2126 = vpop.f32.mrf.mxu0
  %v2127 = vadd.f32 0.0, %v2126
  %v2128 = vpop.f32.mrf.mxu0
  %v2129 = vadd.f32 0.0, %v2128
  %2130 = vmatprep.mubr.f32.mxu0 0.0
  %2131 = vmatmul.mubr.f32.gmra.mxu0 %v996
  %v2132 = vpop.f32.mrf.mxu0
  %v2133 = vadd.f32 0.0, %v2132
  %v2134 = vpop.f32.mrf.mxu0
  %v2135 = vadd.f32 0.0, %v2134
  %2136 = vmatprep.mubr.f32.mxu0 0.0
  %2137 = vmatmul.mubr.f32.gmra.mxu0 %v997
  %v2138 = vpop.f32.mrf.mxu0
  %v2139 = vadd.f32 0.0, %v2138
  %v2140 = vpop.f32.mrf.mxu0
  %v2141 = vadd.f32 0.0, %v2140
  %2142 = vmatprep.mubr.f32.mxu0 0.0
  %2143 = vmatmul.mubr.f32.gmra.mxu0 %v998
  %v2144 = vpop.f32.mrf.mxu0
  %v2145 = vadd.f32 0.0, %v2144
  %v2146 = vpop.f32.mrf.mxu0
  %v2147 = vadd.f32 0.0, %v2146
  %2148 = vmatprep.mubr.f32.mxu0 0.0
  %2149 = vmatmul.mubr.f32.gmra.mxu0 %v999
  %v2150 = vpop.f32.mrf.mxu0
  %v2151 = vadd.f32 0.0, %v2150
  %v2152 = vpop.f32.mrf.mxu0
  %v2153 = vadd.f32 0.0, %v2152
  %2154 = vmatprep.mubr.f32.mxu0 0.0
  %2155 = vmatmul.mubr.f32.gmra.mxu0 %v1000
  %v2156 = vpop.f32.mrf.mxu0
  %v2157 = vadd.f32 0.0, %v2156
  %v2158 = vpop.f32.mrf.mxu0
  %v2159 = vadd.f32 0.0, %v2158
  %2160 = vmatprep.mubr.f32.mxu0 0.0
  %2161 = vmatmul.mubr.f32.gmra.mxu0 %v1001
  %v2162 = vpop.f32.mrf.mxu0
  %v2163 = vadd.f32 0.0, %v2162
  %v2164 = vpop.f32.mrf.mxu0
  %v2165 = vadd.f32 0.0, %v2164
  %2166 = vmatprep.mubr.f32.mxu0 0.0
  %2167 = vmatmul.mubr.f32.gmra.mxu0 %v1002
  %v2168 = vpop.f32.mrf.mxu0
  %v2169 = vadd.f32 0.0, %v2168
  %v2170 = vpop.f32.mrf.mxu0
  %v2171 = vadd.f32 0.0, %v2170
  %2172 = vmatprep.mubr.f32.mxu0 0.0
  %2173 = vmatmul.mubr.f32.gmra.mxu0 %v1003
  %v2174 = vpop.f32.mrf.mxu0
  %v2175 = vadd.f32 0.0, %v2174
  %v2176 = vpop.f32.mrf.mxu0
  %v2177 = vadd.f32 0.0, %v2176
  %2178 = vdwg.mxu0
  %v2179 = vadd.f32 %v1495, %v1887
  %v2180 = vadd.f32 %v1497, %v1889
  %v2181 = vadd.f32 %v1501, %v1893
  %v2182 = vadd.f32 %v1503, %v1895
  %v2183 = vadd.f32 %v1507, %v1899
  %v2184 = vadd.f32 %v1509, %v1901
  %v2185 = vadd.f32 %v1513, %v1905
  %v2186 = vadd.f32 %v1515, %v1907
  %v2187 = vadd.f32 %v1519, %v1911
  %v2188 = vadd.f32 %v1521, %v1913
  %v2189 = vadd.f32 %v1525, %v1917
  %v2190 = vadd.f32 %v1527, %v1919
  %v2191 = vadd.f32 %v1531, %v1923
  %v2192 = vadd.f32 %v1533, %v1925
  %v2193 = vadd.f32 %v1537, %v1929
  %v2194 = vadd.f32 %v1539, %v1931
  %v2195 = vadd.f32 %v1543, %v1935
  %v2196 = vadd.f32 %v1545, %v1937
  %v2197 = vadd.f32 %v1549, %v1941
  %v2198 = vadd.f32 %v1551, %v1943
  %v2199 = vadd.f32 %v1555, %v1947
  %v2200 = vadd.f32 %v1557, %v1949
  %v2201 = vadd.f32 %v1561, %v1953
  %v2202 = vadd.f32 %v1563, %v1955
  %v2203 = vadd.f32 %v1567, %v1959
  %v2204 = vadd.f32 %v1569, %v1961
  %v2205 = vadd.f32 %v1573, %v1965
  %v2206 = vadd.f32 %v1575, %v1967
  %v2207 = vadd.f32 %v1579, %v1971
  %v2208 = vadd.f32 %v1581, %v1973
  %v2209 = vadd.f32 %v1585, %v1977
  %v2210 = vadd.f32 %v1587, %v1979
  %v2211 = vadd.f32 %v1591, %v1983
  %v2212 = vadd.f32 %v1593, %v1985
  %v2213 = vadd.f32 %v1597, %v1989
  %v2214 = vadd.f32 %v1599, %v1991
  %v2215 = vadd.f32 %v1603, %v1995
  %v2216 = vadd.f32 %v1605, %v1997
  %v2217 = vadd.f32 %v1609, %v2001
  %v2218 = vadd.f32 %v1611, %v2003
  %v2219 = vadd.f32 %v1615, %v2007
  %v2220 = vadd.f32 %v1617, %v2009
  %v2221 = vadd.f32 %v1621, %v2013
  %v2222 = vadd.f32 %v1623, %v2015
  %v2223 = vadd.f32 %v1627, %v2019
  %v2224 = vadd.f32 %v1629, %v2021
  %v2225 = vadd.f32 %v1633, %v2025
  %v2226 = vadd.f32 %v1635, %v2027
  %v2227 = vadd.f32 %v1639, %v2031
  %v2228 = vadd.f32 %v1641, %v2033
  %v2229 = vadd.f32 %v1645, %v2037
  %v2230 = vadd.f32 %v1647, %v2039
  %v2231 = vadd.f32 %v1651, %v2043
  %v2232 = vadd.f32 %v1653, %v2045
  %v2233 = vadd.f32 %v1657, %v2049
  %v2234 = vadd.f32 %v1659, %v2051
  %v2235 = vadd.f32 %v1663, %v2055
  %v2236 = vadd.f32 %v1665, %v2057
  %v2237 = vadd.f32 %v1669, %v2061
  %v2238 = vadd.f32 %v1671, %v2063
  %v2239 = vadd.f32 %v1675, %v2067
  %v2240 = vadd.f32 %v1677, %v2069
  %v2241 = vadd.f32 %v1681, %v2073
  %v2242 = vadd.f32 %v1683, %v2075
  %v2243 = vadd.f32 %v1687, %v2079
  %v2244 = vadd.f32 %v1689, %v2081
  %v2245 = vadd.f32 %v1693, %v2085
  %v2246 = vadd.f32 %v1695, %v2087
  %v2247 = vadd.f32 %v1699, %v2091
  %v2248 = vadd.f32 %v1701, %v2093
  %v2249 = vadd.f32 %v1705, %v2097
  %v2250 = vadd.f32 %v1707, %v2099
  %v2251 = vadd.f32 %v1711, %v2103
  %v2252 = vadd.f32 %v1713, %v2105
  %v2253 = vadd.f32 %v1717, %v2109
  %v2254 = vadd.f32 %v1719, %v2111
  %v2255 = vadd.f32 %v1723, %v2115
  %v2256 = vadd.f32 %v1725, %v2117
  %v2257 = vadd.f32 %v1729, %v2121
  %v2258 = vadd.f32 %v1731, %v2123
  %v2259 = vadd.f32 %v1735, %v2127
  %v2260 = vadd.f32 %v1737, %v2129
  %v2261 = vadd.f32 %v1741, %v2133
  %v2262 = vadd.f32 %v1743, %v2135
  %v2263 = vadd.f32 %v1747, %v2139
  %v2264 = vadd.f32 %v1749, %v2141
  %v2265 = vadd.f32 %v1753, %v2145
  %v2266 = vadd.f32 %v1755, %v2147
  %v2267 = vadd.f32 %v1759, %v2151
  %v2268 = vadd.f32 %v1761, %v2153
  %v2269 = vadd.f32 %v1765, %v2157
  %v2270 = vadd.f32 %v1767, %v2159
  %v2271 = vadd.f32 %v1771, %v2163
  %v2272 = vadd.f32 %v1773, %v2165
  %v2273 = vadd.f32 %v1777, %v2169
  %v2274 = vadd.f32 %v1779, %v2171
  %v2275 = vadd.f32 %v1783, %v2175
  %v2276 = vadd.f32 %v1785, %v2177
  %v2277 = vrot.slane %v2180, 7
  %v2278 = vrot.slane %v2182, 7
  %v2279 = vrot.slane %v2184, 7
  %v2280 = vrot.slane %v2186, 7
  %v2281 = vrot.slane %v2188, 7
  %v2282 = vrot.slane %v2190, 7
  %v2283 = vrot.slane %v2192, 7
  %v2284 = vrot.slane %v2194, 7
  %v2285 = vrot.slane %v2196, 7
  %v2286 = vrot.slane %v2198, 7
  %v2287 = vrot.slane %v2200, 7
  %v2288 = vrot.slane %v2202, 7
  %v2289 = vrot.slane %v2204, 7
  %v2290 = vrot.slane %v2206, 7
  %v2291 = vrot.slane %v2208, 7
  %v2292 = vrot.slane %v2210, 7
  %v2293 = vrot.slane %v2212, 7
  %v2294 = vrot.slane %v2214, 7
  %v2295 = vrot.slane %v2216, 7
  %v2296 = vrot.slane %v2218, 7
  %v2297 = vrot.slane %v2220, 7
  %v2298 = vrot.slane %v2222, 7
  %v2299 = vrot.slane %v2224, 7
  %v2300 = vrot.slane %v2226, 7
  %v2301 = vrot.slane %v2228, 7
  %v2302 = vrot.slane %v2230, 7
  %v2303 = vrot.slane %v2232, 7
  %v2304 = vrot.slane %v2234, 7
  %v2305 = vrot.slane %v2236, 7
  %v2306 = vrot.slane %v2238, 7
  %v2307 = vrot.slane %v2240, 7
  %v2308 = vrot.slane %v2242, 7
  %v2309 = vrot.slane %v2244, 7
  %v2310 = vrot.slane %v2246, 7
  %v2311 = vrot.slane %v2248, 7
  %v2312 = vrot.slane %v2250, 7
  %v2313 = vrot.slane %v2252, 7
  %v2314 = vrot.slane %v2254, 7
  %v2315 = vrot.slane %v2256, 7
  %v2316 = vrot.slane %v2258, 7
  %v2317 = vrot.slane %v2260, 7
  %v2318 = vrot.slane %v2262, 7
  %v2319 = vrot.slane %v2264, 7
  %v2320 = vrot.slane %v2266, 7
  %v2321 = vrot.slane %v2268, 7
  %v2322 = vrot.slane %v2270, 7
  %v2323 = vrot.slane %v2272, 7
  %v2324 = vrot.slane %v2274, 7
  %v2325 = vrot.slane %v2276, 7
  %v2326 = vsel %vm267, %v2324, %v2325
  %v2327 = vsel %vm267, %v2323, %v2324
  %v2328 = vsel %vm267, %v2322, %v2323
  %v2329 = vsel %vm267, %v2321, %v2322
  %v2330 = vsel %vm267, %v2320, %v2321
  %v2331 = vsel %vm267, %v2319, %v2320
  %v2332 = vsel %vm267, %v2318, %v2319
  %v2333 = vsel %vm267, %v2317, %v2318
  %v2334 = vsel %vm267, %v2316, %v2317
  %v2335 = vsel %vm267, %v2315, %v2316
  %v2336 = vsel %vm267, %v2314, %v2315
  %v2337 = vsel %vm267, %v2313, %v2314
  %v2338 = vsel %vm267, %v2312, %v2313
  %v2339 = vsel %vm267, %v2311, %v2312
  %v2340 = vsel %vm267, %v2310, %v2311
  %v2341 = vsel %vm267, %v2309, %v2310
  %v2342 = vsel %vm267, %v2308, %v2309
  %v2343 = vsel %vm267, %v2307, %v2308
  %v2344 = vsel %vm267, %v2306, %v2307
  %v2345 = vsel %vm267, %v2305, %v2306
  %v2346 = vsel %vm267, %v2304, %v2305
  %v2347 = vsel %vm267, %v2303, %v2304
  %v2348 = vsel %vm267, %v2302, %v2303
  %v2349 = vsel %vm267, %v2301, %v2302
  %v2350 = vsel %vm267, %v2300, %v2301
  %v2351 = vsel %vm267, %v2299, %v2300
  %v2352 = vsel %vm267, %v2298, %v2299
  %v2353 = vsel %vm267, %v2297, %v2298
  %v2354 = vsel %vm267, %v2296, %v2297
  %v2355 = vsel %vm267, %v2295, %v2296
  %v2356 = vsel %vm267, %v2294, %v2295
  %v2357 = vsel %vm267, %v2293, %v2294
  %v2358 = vsel %vm267, %v2292, %v2293
  %v2359 = vsel %vm267, %v2291, %v2292
  %v2360 = vsel %vm267, %v2290, %v2291
  %v2361 = vsel %vm267, %v2289, %v2290
  %v2362 = vsel %vm267, %v2288, %v2289
  %v2363 = vsel %vm267, %v2287, %v2288
  %v2364 = vsel %vm267, %v2286, %v2287
  %v2365 = vsel %vm267, %v2285, %v2286
  %v2366 = vsel %vm267, %v2284, %v2285
  %v2367 = vsel %vm267, %v2283, %v2284
  %v2368 = vsel %vm267, %v2282, %v2283
  %v2369 = vsel %vm267, %v2281, %v2282
  %v2370 = vsel %vm267, %v2280, %v2281
  %v2371 = vsel %vm267, %v2279, %v2280
  %v2372 = vsel %vm267, %v2278, %v2279
  %v2373 = vsel %vm267, %v2277, %v2278
  %v2374 = vsel %vm267, %v2325, %v2277
  %v2375 = vmul.f32 %v2374, %v320
  %v2376 = vmul.f32 %v2373, %v325
  %v2377 = vmul.f32 %v2372, %v330
  %v2378 = vmul.f32 %v2371, %v335
  %v2379 = vmul.f32 %v2370, %v340
  %v2380 = vmul.f32 %v2369, %v345
  %v2381 = vmul.f32 %v2368, %v350
  %v2382 = vmul.f32 %v2367, %v355
  %v2383 = vmul.f32 %v2366, %v360
  %v2384 = vmul.f32 %v2365, %v365
  %v2385 = vmul.f32 %v2364, %v370
  %v2386 = vmul.f32 %v2363, %v375
  %v2387 = vmul.f32 %v2362, %v380
  %v2388 = vmul.f32 %v2361, %v385
  %v2389 = vmul.f32 %v2360, %v390
  %v2390 = vmul.f32 %v2359, %v395
  %v2391 = vmul.f32 %v2358, %v400
  %v2392 = vmul.f32 %v2357, %v405
  %v2393 = vmul.f32 %v2356, %v410
  %v2394 = vmul.f32 %v2355, %v415
  %v2395 = vmul.f32 %v2354, %v420
  %v2396 = vmul.f32 %v2353, %v425
  %v2397 = vmul.f32 %v2352, %v430
  %v2398 = vmul.f32 %v2351, %v435
  %v2399 = vmul.f32 %v2350, %v440
  %v2400 = vmul.f32 %v2349, %v445
  %v2401 = vmul.f32 %v2348, %v450
  %v2402 = vmul.f32 %v2347, %v455
  %v2403 = vmul.f32 %v2346, %v460
  %v2404 = vmul.f32 %v2345, %v465
  %v2405 = vmul.f32 %v2344, %v470
  %v2406 = vmul.f32 %v2343, %v475
  %v2407 = vmul.f32 %v2342, %v480
  %v2408 = vmul.f32 %v2341, %v485
  %v2409 = vmul.f32 %v2340, %v490
  %v2410 = vmul.f32 %v2339, %v495
  %v2411 = vmul.f32 %v2338, %v500
  %v2412 = vmul.f32 %v2337, %v505
  %v2413 = vmul.f32 %v2336, %v510
  %v2414 = vmul.f32 %v2335, %v515
  %v2415 = vmul.f32 %v2334, %v520
  %v2416 = vmul.f32 %v2333, %v525
  %v2417 = vmul.f32 %v2332, %v530
  %v2418 = vmul.f32 %v2331, %v535
  %v2419 = vmul.f32 %v2330, %v540
  %v2420 = vmul.f32 %v2329, %v545
  %v2421 = vmul.f32 %v2328, %v550
  %v2422 = vmul.f32 %v2327, %v555
  %v2423 = vmul.f32 %v2326, %v560
  %v2424 = vadd.f32 %v2179, %v2375
  %v2425 = vadd.f32 %v2181, %v2376
  %v2426 = vadd.f32 %v2183, %v2377
  %v2427 = vadd.f32 %v2185, %v2378
  %v2428 = vadd.f32 %v2187, %v2379
  %v2429 = vadd.f32 %v2189, %v2380
  %v2430 = vadd.f32 %v2191, %v2381
  %v2431 = vadd.f32 %v2193, %v2382
  %v2432 = vadd.f32 %v2195, %v2383
  %v2433 = vadd.f32 %v2197, %v2384
  %v2434 = vadd.f32 %v2199, %v2385
  %v2435 = vadd.f32 %v2201, %v2386
  %v2436 = vadd.f32 %v2203, %v2387
  %v2437 = vadd.f32 %v2205, %v2388
  %v2438 = vadd.f32 %v2207, %v2389
  %v2439 = vadd.f32 %v2209, %v2390
  %v2440 = vadd.f32 %v2211, %v2391
  %v2441 = vadd.f32 %v2213, %v2392
  %v2442 = vadd.f32 %v2215, %v2393
  %v2443 = vadd.f32 %v2217, %v2394
  %v2444 = vadd.f32 %v2219, %v2395
  %v2445 = vadd.f32 %v2221, %v2396
  %v2446 = vadd.f32 %v2223, %v2397
  %v2447 = vadd.f32 %v2225, %v2398
  %v2448 = vadd.f32 %v2227, %v2399
  %v2449 = vadd.f32 %v2229, %v2400
  %v2450 = vadd.f32 %v2231, %v2401
  %v2451 = vadd.f32 %v2233, %v2402
  %v2452 = vadd.f32 %v2235, %v2403
  %v2453 = vadd.f32 %v2237, %v2404
  %v2454 = vadd.f32 %v2239, %v2405
  %v2455 = vadd.f32 %v2241, %v2406
  %v2456 = vadd.f32 %v2243, %v2407
  %v2457 = vadd.f32 %v2245, %v2408
  %v2458 = vadd.f32 %v2247, %v2409
  %v2459 = vadd.f32 %v2249, %v2410
  %v2460 = vadd.f32 %v2251, %v2411
  %v2461 = vadd.f32 %v2253, %v2412
  %v2462 = vadd.f32 %v2255, %v2413
  %v2463 = vadd.f32 %v2257, %v2414
  %v2464 = vadd.f32 %v2259, %v2415
  %v2465 = vadd.f32 %v2261, %v2416
  %v2466 = vadd.f32 %v2263, %v2417
  %v2467 = vadd.f32 %v2265, %v2418
  %v2468 = vadd.f32 %v2267, %v2419
  %v2469 = vadd.f32 %v2269, %v2420
  %v2470 = vadd.f32 %v2271, %v2421
  %v2471 = vadd.f32 %v2273, %v2422
  %v2472 = vadd.f32 %v2275, %v2423
  %v2473 = vrot.slane %v2180, 5
  %v2474 = vrot.slane %v2182, 5
  %v2475 = vrot.slane %v2184, 5
  %v2476 = vrot.slane %v2186, 5
  %v2477 = vrot.slane %v2188, 5
  %v2478 = vrot.slane %v2190, 5
  %v2479 = vrot.slane %v2192, 5
  %v2480 = vrot.slane %v2194, 5
  %v2481 = vrot.slane %v2196, 5
  %v2482 = vrot.slane %v2198, 5
  %v2483 = vrot.slane %v2200, 5
  %v2484 = vrot.slane %v2202, 5
  %v2485 = vrot.slane %v2204, 5
  %v2486 = vrot.slane %v2206, 5
  %v2487 = vrot.slane %v2208, 5
  %v2488 = vrot.slane %v2210, 5
  %v2489 = vrot.slane %v2212, 5
  %v2490 = vrot.slane %v2214, 5
  %v2491 = vrot.slane %v2216, 5
  %v2492 = vrot.slane %v2218, 5
  %v2493 = vrot.slane %v2220, 5
  %v2494 = vrot.slane %v2222, 5
  %v2495 = vrot.slane %v2224, 5
  %v2496 = vrot.slane %v2226, 5
  %v2497 = vrot.slane %v2228, 5
  %v2498 = vrot.slane %v2230, 5
  %v2499 = vrot.slane %v2232, 5
  %v2500 = vrot.slane %v2234, 5
  %v2501 = vrot.slane %v2236, 5
  %v2502 = vrot.slane %v2238, 5
  %v2503 = vrot.slane %v2240, 5
  %v2504 = vrot.slane %v2242, 5
  %v2505 = vrot.slane %v2244, 5
  %v2506 = vrot.slane %v2246, 5
  %v2507 = vrot.slane %v2248, 5
  %v2508 = vrot.slane %v2250, 5
  %v2509 = vrot.slane %v2252, 5
  %v2510 = vrot.slane %v2254, 5
  %v2511 = vrot.slane %v2256, 5
  %v2512 = vrot.slane %v2258, 5
  %v2513 = vrot.slane %v2260, 5
  %v2514 = vrot.slane %v2262, 5
  %v2515 = vrot.slane %v2264, 5
  %v2516 = vrot.slane %v2266, 5
  %v2517 = vrot.slane %v2268, 5
  %v2518 = vrot.slane %v2270, 5
  %v2519 = vrot.slane %v2272, 5
  %v2520 = vrot.slane %v2274, 5
  %v2521 = vrot.slane %v2276, 5
  %vm2522 = vcmp.lt.s32.totalorder %v266, 3
  %v2523 = vsel %vm2522, %v2520, %v2521
  %v2524 = vsel %vm2522, %v2519, %v2520
  %v2525 = vsel %vm2522, %v2518, %v2519
  %v2526 = vsel %vm2522, %v2517, %v2518
  %v2527 = vsel %vm2522, %v2516, %v2517
  %v2528 = vsel %vm2522, %v2515, %v2516
  %v2529 = vsel %vm2522, %v2514, %v2515
  %v2530 = vsel %vm2522, %v2513, %v2514
  %v2531 = vsel %vm2522, %v2512, %v2513
  %v2532 = vsel %vm2522, %v2511, %v2512
  %v2533 = vsel %vm2522, %v2510, %v2511
  %v2534 = vsel %vm2522, %v2509, %v2510
  %v2535 = vsel %vm2522, %v2508, %v2509
  %v2536 = vsel %vm2522, %v2507, %v2508
  %v2537 = vsel %vm2522, %v2506, %v2507
  %v2538 = vsel %vm2522, %v2505, %v2506
  %v2539 = vsel %vm2522, %v2504, %v2505
  %v2540 = vsel %vm2522, %v2503, %v2504
  %v2541 = vsel %vm2522, %v2502, %v2503
  %v2542 = vsel %vm2522, %v2501, %v2502
  %v2543 = vsel %vm2522, %v2500, %v2501
  %v2544 = vsel %vm2522, %v2499, %v2500
  %v2545 = vsel %vm2522, %v2498, %v2499
  %v2546 = vsel %vm2522, %v2497, %v2498
  %v2547 = vsel %vm2522, %v2496, %v2497
  %v2548 = vsel %vm2522, %v2495, %v2496
  %v2549 = vsel %vm2522, %v2494, %v2495
  %v2550 = vsel %vm2522, %v2493, %v2494
  %v2551 = vsel %vm2522, %v2492, %v2493
  %v2552 = vsel %vm2522, %v2491, %v2492
  %v2553 = vsel %vm2522, %v2490, %v2491
  %v2554 = vsel %vm2522, %v2489, %v2490
  %v2555 = vsel %vm2522, %v2488, %v2489
  %v2556 = vsel %vm2522, %v2487, %v2488
  %v2557 = vsel %vm2522, %v2486, %v2487
  %v2558 = vsel %vm2522, %v2485, %v2486
  %v2559 = vsel %vm2522, %v2484, %v2485
  %v2560 = vsel %vm2522, %v2483, %v2484
  %v2561 = vsel %vm2522, %v2482, %v2483
  %v2562 = vsel %vm2522, %v2481, %v2482
  %v2563 = vsel %vm2522, %v2480, %v2481
  %v2564 = vsel %vm2522, %v2479, %v2480
  %v2565 = vsel %vm2522, %v2478, %v2479
  %v2566 = vsel %vm2522, %v2477, %v2478
  %v2567 = vsel %vm2522, %v2476, %v2477
  %v2568 = vsel %vm2522, %v2475, %v2476
  %v2569 = vsel %vm2522, %v2474, %v2475
  %v2570 = vsel %vm2522, %v2473, %v2474
  %v2571 = vsel %vm2522, %v2521, %v2473
  %v2572 = vsub.f32 1.0, %v69
  %v2573 = vsub.f32 1.0, %v70
  %v2574 = vsub.f32 1.0, %v71
  %v2575 = vsub.f32 1.0, %v72
  %v2576 = vsub.f32 1.0, %v73
  %v2577 = vsub.f32 1.0, %v74
  %v2578 = vsub.f32 1.0, %v75
  %v2579 = vsub.f32 1.0, %v76
  %v2580 = vsub.f32 1.0, %v77
  %v2581 = vsub.f32 1.0, %v78
  %v2582 = vsub.f32 1.0, %v79
  %v2583 = vsub.f32 1.0, %v80
  %v2584 = vsub.f32 1.0, %v81
  %v2585 = vsub.f32 1.0, %v82
  %v2586 = vsub.f32 1.0, %v83
  %v2587 = vsub.f32 1.0, %v84
  %v2588 = vsub.f32 1.0, %v85
  %v2589 = vsub.f32 1.0, %v86
  %v2590 = vsub.f32 1.0, %v87
  %v2591 = vsub.f32 1.0, %v88
  %v2592 = vsub.f32 1.0, %v89
  %v2593 = vsub.f32 1.0, %v90
  %v2594 = vsub.f32 1.0, %v91
  %v2595 = vsub.f32 1.0, %v92
  %v2596 = vsub.f32 1.0, %v93
  %v2597 = vsub.f32 1.0, %v94
  %v2598 = vsub.f32 1.0, %v95
  %v2599 = vsub.f32 1.0, %v96
  %v2600 = vsub.f32 1.0, %v97
  %v2601 = vsub.f32 1.0, %v98
  %v2602 = vsub.f32 1.0, %v99
  %v2603 = vsub.f32 1.0, %v100
  %v2604 = vsub.f32 1.0, %v101
  %v2605 = vsub.f32 1.0, %v102
  %v2606 = vsub.f32 1.0, %v103
  %v2607 = vsub.f32 1.0, %v104
  %v2608 = vsub.f32 1.0, %v105
  %v2609 = vsub.f32 1.0, %v106
  %v2610 = vsub.f32 1.0, %v107
  %v2611 = vsub.f32 1.0, %v108
  %v2612 = vsub.f32 1.0, %v109
  %v2613 = vsub.f32 1.0, %v110
  %v2614 = vsub.f32 1.0, %v111
  %v2615 = vsub.f32 1.0, %v112
  %v2616 = vsub.f32 1.0, %v113
  %v2617 = vsub.f32 1.0, %v114
  %v2618 = vsub.f32 1.0, %v115
  %v2619 = vsub.f32 1.0, %v116
  %v2620 = vsub.f32 1.0, %v117
  %2622 = vset.pattern.permute.xlu0 0
  %2623 = vperm.xlu0 %2622, %v2572
  %v2624 = vpop.permute.xlu0 %2623
  %2627 = vset.pattern.permute.xlu0 0
  %2628 = vperm.xlu0 %2627, %v2573
  %v2629 = vpop.permute.xlu0 %2628
  %2632 = vset.pattern.permute.xlu0 0
  %2633 = vperm.xlu0 %2632, %v2574
  %v2634 = vpop.permute.xlu0 %2633
  %2637 = vset.pattern.permute.xlu0 0
  %2638 = vperm.xlu0 %2637, %v2575
  %v2639 = vpop.permute.xlu0 %2638
  %2642 = vset.pattern.permute.xlu0 0
  %2643 = vperm.xlu0 %2642, %v2576
  %v2644 = vpop.permute.xlu0 %2643
  %2647 = vset.pattern.permute.xlu0 0
  %2648 = vperm.xlu0 %2647, %v2577
  %v2649 = vpop.permute.xlu0 %2648
  %2652 = vset.pattern.permute.xlu0 0
  %2653 = vperm.xlu0 %2652, %v2578
  %v2654 = vpop.permute.xlu0 %2653
  %2657 = vset.pattern.permute.xlu0 0
  %2658 = vperm.xlu0 %2657, %v2579
  %v2659 = vpop.permute.xlu0 %2658
  %2662 = vset.pattern.permute.xlu0 0
  %2663 = vperm.xlu0 %2662, %v2580
  %v2664 = vpop.permute.xlu0 %2663
  %2667 = vset.pattern.permute.xlu0 0
  %2668 = vperm.xlu0 %2667, %v2581
  %v2669 = vpop.permute.xlu0 %2668
  %2672 = vset.pattern.permute.xlu0 0
  %2673 = vperm.xlu0 %2672, %v2582
  %v2674 = vpop.permute.xlu0 %2673
  %2677 = vset.pattern.permute.xlu0 0
  %2678 = vperm.xlu0 %2677, %v2583
  %v2679 = vpop.permute.xlu0 %2678
  %2682 = vset.pattern.permute.xlu0 0
  %2683 = vperm.xlu0 %2682, %v2584
  %v2684 = vpop.permute.xlu0 %2683
  %2687 = vset.pattern.permute.xlu0 0
  %2688 = vperm.xlu0 %2687, %v2585
  %v2689 = vpop.permute.xlu0 %2688
  %2692 = vset.pattern.permute.xlu0 0
  %2693 = vperm.xlu0 %2692, %v2586
  %v2694 = vpop.permute.xlu0 %2693
  %2697 = vset.pattern.permute.xlu0 0
  %2698 = vperm.xlu0 %2697, %v2587
  %v2699 = vpop.permute.xlu0 %2698
  %2702 = vset.pattern.permute.xlu0 0
  %2703 = vperm.xlu0 %2702, %v2588
  %v2704 = vpop.permute.xlu0 %2703
  %2707 = vset.pattern.permute.xlu0 0
  %2708 = vperm.xlu0 %2707, %v2589
  %v2709 = vpop.permute.xlu0 %2708
  %2712 = vset.pattern.permute.xlu0 0
  %2713 = vperm.xlu0 %2712, %v2590
  %v2714 = vpop.permute.xlu0 %2713
  %2717 = vset.pattern.permute.xlu0 0
  %2718 = vperm.xlu0 %2717, %v2591
  %v2719 = vpop.permute.xlu0 %2718
  %2722 = vset.pattern.permute.xlu0 0
  %2723 = vperm.xlu0 %2722, %v2592
  %v2724 = vpop.permute.xlu0 %2723
  %2727 = vset.pattern.permute.xlu0 0
  %2728 = vperm.xlu0 %2727, %v2593
  %v2729 = vpop.permute.xlu0 %2728
  %2732 = vset.pattern.permute.xlu0 0
  %2733 = vperm.xlu0 %2732, %v2594
  %v2734 = vpop.permute.xlu0 %2733
  %2737 = vset.pattern.permute.xlu0 0
  %2738 = vperm.xlu0 %2737, %v2595
  %v2739 = vpop.permute.xlu0 %2738
  %2742 = vset.pattern.permute.xlu0 0
  %2743 = vperm.xlu0 %2742, %v2596
  %v2744 = vpop.permute.xlu0 %2743
  %2747 = vset.pattern.permute.xlu0 0
  %2748 = vperm.xlu0 %2747, %v2597
  %v2749 = vpop.permute.xlu0 %2748
  %2752 = vset.pattern.permute.xlu0 0
  %2753 = vperm.xlu0 %2752, %v2598
  %v2754 = vpop.permute.xlu0 %2753
  %2757 = vset.pattern.permute.xlu0 0
  %2758 = vperm.xlu0 %2757, %v2599
  %v2759 = vpop.permute.xlu0 %2758
  %2762 = vset.pattern.permute.xlu0 0
  %2763 = vperm.xlu0 %2762, %v2600
  %v2764 = vpop.permute.xlu0 %2763
  %2767 = vset.pattern.permute.xlu0 0
  %2768 = vperm.xlu0 %2767, %v2601
  %v2769 = vpop.permute.xlu0 %2768
  %2772 = vset.pattern.permute.xlu0 0
  %2773 = vperm.xlu0 %2772, %v2602
  %v2774 = vpop.permute.xlu0 %2773
  %2777 = vset.pattern.permute.xlu0 0
  %2778 = vperm.xlu0 %2777, %v2603
  %v2779 = vpop.permute.xlu0 %2778
  %2782 = vset.pattern.permute.xlu0 0
  %2783 = vperm.xlu0 %2782, %v2604
  %v2784 = vpop.permute.xlu0 %2783
  %2787 = vset.pattern.permute.xlu0 0
  %2788 = vperm.xlu0 %2787, %v2605
  %v2789 = vpop.permute.xlu0 %2788
  %2792 = vset.pattern.permute.xlu0 0
  %2793 = vperm.xlu0 %2792, %v2606
  %v2794 = vpop.permute.xlu0 %2793
  %2797 = vset.pattern.permute.xlu0 0
  %2798 = vperm.xlu0 %2797, %v2607
  %v2799 = vpop.permute.xlu0 %2798
  %2802 = vset.pattern.permute.xlu0 0
  %2803 = vperm.xlu0 %2802, %v2608
  %v2804 = vpop.permute.xlu0 %2803
  %2807 = vset.pattern.permute.xlu0 0
  %2808 = vperm.xlu0 %2807, %v2609
  %v2809 = vpop.permute.xlu0 %2808
  %2812 = vset.pattern.permute.xlu0 0
  %2813 = vperm.xlu0 %2812, %v2610
  %v2814 = vpop.permute.xlu0 %2813
  %2817 = vset.pattern.permute.xlu0 0
  %2818 = vperm.xlu0 %2817, %v2611
  %v2819 = vpop.permute.xlu0 %2818
  %2822 = vset.pattern.permute.xlu0 0
  %2823 = vperm.xlu0 %2822, %v2612
  %v2824 = vpop.permute.xlu0 %2823
  %2827 = vset.pattern.permute.xlu0 0
  %2828 = vperm.xlu0 %2827, %v2613
  %v2829 = vpop.permute.xlu0 %2828
  %2832 = vset.pattern.permute.xlu0 0
  %2833 = vperm.xlu0 %2832, %v2614
  %v2834 = vpop.permute.xlu0 %2833
  %2837 = vset.pattern.permute.xlu0 0
  %2838 = vperm.xlu0 %2837, %v2615
  %v2839 = vpop.permute.xlu0 %2838
  %2842 = vset.pattern.permute.xlu0 0
  %2843 = vperm.xlu0 %2842, %v2616
  %v2844 = vpop.permute.xlu0 %2843
  %2847 = vset.pattern.permute.xlu0 0
  %2848 = vperm.xlu0 %2847, %v2617
  %v2849 = vpop.permute.xlu0 %2848
  %2852 = vset.pattern.permute.xlu0 0
  %2853 = vperm.xlu0 %2852, %v2618
  %v2854 = vpop.permute.xlu0 %2853
  %2857 = vset.pattern.permute.xlu0 0
  %2858 = vperm.xlu0 %2857, %v2619
  %v2859 = vpop.permute.xlu0 %2858
  %2862 = vset.pattern.permute.xlu0 0
  %2863 = vperm.xlu0 %2862, %v2620
  %v2864 = vpop.permute.xlu0 %2863
  %v2866 = vmul.f32 %v2569, %v2624
  %v2867 = vmul.f32 %v2568, %v2629
  %v2868 = vmul.f32 %v2567, %v2634
  %v2869 = vmul.f32 %v2566, %v2639
  %v2870 = vmul.f32 %v2565, %v2644
  %v2871 = vmul.f32 %v2564, %v2649
  %v2872 = vmul.f32 %v2563, %v2654
  %v2873 = vmul.f32 %v2562, %v2659
  %v2874 = vmul.f32 %v2561, %v2664
  %v2875 = vmul.f32 %v2560, %v2669
  %v2876 = vmul.f32 %v2559, %v2674
  %v2877 = vmul.f32 %v2558, %v2679
  %v2878 = vmul.f32 %v2557, %v2684
  %v2879 = vmul.f32 %v2556, %v2689
  %v2880 = vmul.f32 %v2555, %v2694
  %v2881 = vmul.f32 %v2554, %v2699
  %v2882 = vmul.f32 %v2553, %v2704
  %v2883 = vmul.f32 %v2552, %v2709
  %v2884 = vmul.f32 %v2551, %v2714
  %v2885 = vmul.f32 %v2550, %v2719
  %v2886 = vmul.f32 %v2549, %v2724
  %v2887 = vmul.f32 %v2548, %v2729
  %v2888 = vmul.f32 %v2547, %v2734
  %v2889 = vmul.f32 %v2546, %v2739
  %v2890 = vmul.f32 %v2545, %v2744
  %v2891 = vmul.f32 %v2544, %v2749
  %v2892 = vmul.f32 %v2543, %v2754
  %v2893 = vmul.f32 %v2542, %v2759
  %v2894 = vmul.f32 %v2541, %v2764
  %v2895 = vmul.f32 %v2540, %v2769
  %v2896 = vmul.f32 %v2539, %v2774
  %v2897 = vmul.f32 %v2538, %v2779
  %v2898 = vmul.f32 %v2537, %v2784
  %v2899 = vmul.f32 %v2536, %v2789
  %v2900 = vmul.f32 %v2535, %v2794
  %v2901 = vmul.f32 %v2534, %v2799
  %v2902 = vmul.f32 %v2533, %v2804
  %v2903 = vmul.f32 %v2532, %v2809
  %v2904 = vmul.f32 %v2531, %v2814
  %v2905 = vmul.f32 %v2530, %v2819
  %v2906 = vmul.f32 %v2529, %v2824
  %v2907 = vmul.f32 %v2528, %v2829
  %v2908 = vmul.f32 %v2527, %v2834
  %v2909 = vmul.f32 %v2526, %v2839
  %v2910 = vmul.f32 %v2525, %v2844
  %v2911 = vmul.f32 %v2524, %v2849
  %v2912 = vmul.f32 %v2523, %v2854
  %v2913 = vmul.f32 %v2571, %v2859
  %v2914 = vmul.f32 %v2570, %v2864
  %v2915 = vadd.f32 %v2424, %v2866
  %v2916 = vadd.f32 %v2425, %v2867
  %v2917 = vadd.f32 %v2426, %v2868
  %v2918 = vadd.f32 %v2427, %v2869
  %v2919 = vadd.f32 %v2428, %v2870
  %v2920 = vadd.f32 %v2429, %v2871
  %v2921 = vadd.f32 %v2430, %v2872
  %v2922 = vadd.f32 %v2431, %v2873
  %v2923 = vadd.f32 %v2432, %v2874
  %v2924 = vadd.f32 %v2433, %v2875
  %v2925 = vadd.f32 %v2434, %v2876
  %v2926 = vadd.f32 %v2435, %v2877
  %v2927 = vadd.f32 %v2436, %v2878
  %v2928 = vadd.f32 %v2437, %v2879
  %v2929 = vadd.f32 %v2438, %v2880
  %v2930 = vadd.f32 %v2439, %v2881
  %v2931 = vadd.f32 %v2440, %v2882
  %v2932 = vadd.f32 %v2441, %v2883
  %v2933 = vadd.f32 %v2442, %v2884
  %v2934 = vadd.f32 %v2443, %v2885
  %v2935 = vadd.f32 %v2444, %v2886
  %v2936 = vadd.f32 %v2445, %v2887
  %v2937 = vadd.f32 %v2446, %v2888
  %v2938 = vadd.f32 %v2447, %v2889
  %v2939 = vadd.f32 %v2448, %v2890
  %v2940 = vadd.f32 %v2449, %v2891
  %v2941 = vadd.f32 %v2450, %v2892
  %v2942 = vadd.f32 %v2451, %v2893
  %v2943 = vadd.f32 %v2452, %v2894
  %v2944 = vadd.f32 %v2453, %v2895
  %v2945 = vadd.f32 %v2454, %v2896
  %v2946 = vadd.f32 %v2455, %v2897
  %v2947 = vadd.f32 %v2456, %v2898
  %v2948 = vadd.f32 %v2457, %v2899
  %v2949 = vadd.f32 %v2458, %v2900
  %v2950 = vadd.f32 %v2459, %v2901
  %v2951 = vadd.f32 %v2460, %v2902
  %v2952 = vadd.f32 %v2461, %v2903
  %v2953 = vadd.f32 %v2462, %v2904
  %v2954 = vadd.f32 %v2463, %v2905
  %v2955 = vadd.f32 %v2464, %v2906
  %v2956 = vadd.f32 %v2465, %v2907
  %v2957 = vadd.f32 %v2466, %v2908
  %v2958 = vadd.f32 %v2467, %v2909
  %v2959 = vadd.f32 %v2468, %v2910
  %v2960 = vadd.f32 %v2469, %v2911
  %v2961 = vadd.f32 %v2470, %v2912
  %v2962 = vadd.f32 %v2471, %v2913
  %v2963 = vadd.f32 %v2472, %v2914
  %v2964 = vrot.slane %v2915, 2
  %v2965 = vrot.slane %v2916, 2
  %v2966 = vrot.slane %v2917, 2
  %v2967 = vrot.slane %v2918, 2
  %v2968 = vrot.slane %v2919, 2
  %v2969 = vrot.slane %v2920, 2
  %v2970 = vrot.slane %v2921, 2
  %v2971 = vrot.slane %v2922, 2
  %v2972 = vrot.slane %v2923, 2
  %v2973 = vrot.slane %v2924, 2
  %v2974 = vrot.slane %v2925, 2
  %v2975 = vrot.slane %v2926, 2
  %v2976 = vrot.slane %v2927, 2
  %v2977 = vrot.slane %v2928, 2
  %v2978 = vrot.slane %v2929, 2
  %v2979 = vrot.slane %v2930, 2
  %v2980 = vrot.slane %v2931, 2
  %v2981 = vrot.slane %v2932, 2
  %v2982 = vrot.slane %v2933, 2
  %v2983 = vrot.slane %v2934, 2
  %v2984 = vrot.slane %v2935, 2
  %v2985 = vrot.slane %v2936, 2
  %v2986 = vrot.slane %v2937, 2
  %v2987 = vrot.slane %v2938, 2
  %v2988 = vrot.slane %v2939, 2
  %v2989 = vrot.slane %v2940, 2
  %v2990 = vrot.slane %v2941, 2
  %v2991 = vrot.slane %v2942, 2
  %v2992 = vrot.slane %v2943, 2
  %v2993 = vrot.slane %v2944, 2
  %v2994 = vrot.slane %v2945, 2
  %v2995 = vrot.slane %v2946, 2
  %v2996 = vrot.slane %v2947, 2
  %v2997 = vrot.slane %v2948, 2
  %v2998 = vrot.slane %v2949, 2
  %v2999 = vrot.slane %v2950, 2
  %v3000 = vrot.slane %v2951, 2
  %v3001 = vrot.slane %v2952, 2
  %v3002 = vrot.slane %v2953, 2
  %v3003 = vrot.slane %v2954, 2
  %v3004 = vrot.slane %v2955, 2
  %v3005 = vrot.slane %v2956, 2
  %v3006 = vrot.slane %v2957, 2
  %v3007 = vrot.slane %v2958, 2
  %v3008 = vrot.slane %v2959, 2
  %v3009 = vrot.slane %v2960, 2
  %v3010 = vrot.slane %v2961, 2
  %v3011 = vrot.slane %v2962, 2
  %v3012 = vrot.slane %v2963, 2
  %vm3013 = vcmp.lt.s32.totalorder %v266, 6
  %v3014 = vsel %vm3013, %v3011, %v3012
  %v3015 = vsel %vm3013, %v3010, %v3011
  %v3016 = vsel %vm3013, %v3009, %v3010
  %v3017 = vsel %vm3013, %v3008, %v3009
  %v3018 = vsel %vm3013, %v3007, %v3008
  %v3019 = vsel %vm3013, %v3006, %v3007
  %v3020 = vsel %vm3013, %v3005, %v3006
  %v3021 = vsel %vm3013, %v3004, %v3005
  %v3022 = vsel %vm3013, %v3003, %v3004
  %v3023 = vsel %vm3013, %v3002, %v3003
  %v3024 = vsel %vm3013, %v3001, %v3002
  %v3025 = vsel %vm3013, %v3000, %v3001
  %v3026 = vsel %vm3013, %v2999, %v3000
  %v3027 = vsel %vm3013, %v2998, %v2999
  %v3028 = vsel %vm3013, %v2997, %v2998
  %v3029 = vsel %vm3013, %v2996, %v2997
  %v3030 = vsel %vm3013, %v2995, %v2996
  %v3031 = vsel %vm3013, %v2994, %v2995
  %v3032 = vsel %vm3013, %v2993, %v2994
  %v3033 = vsel %vm3013, %v2992, %v2993
  %v3034 = vsel %vm3013, %v2991, %v2992
  %v3035 = vsel %vm3013, %v2990, %v2991
  %v3036 = vsel %vm3013, %v2989, %v2990
  %v3037 = vsel %vm3013, %v2988, %v2989
  %v3038 = vsel %vm3013, %v2987, %v2988
  %v3039 = vsel %vm3013, %v2986, %v2987
  %v3040 = vsel %vm3013, %v2985, %v2986
  %v3041 = vsel %vm3013, %v2984, %v2985
  %v3042 = vsel %vm3013, %v2983, %v2984
  %v3043 = vsel %vm3013, %v2982, %v2983
  %v3044 = vsel %vm3013, %v2981, %v2982
  %v3045 = vsel %vm3013, %v2980, %v2981
  %v3046 = vsel %vm3013, %v2979, %v2980
  %v3047 = vsel %vm3013, %v2978, %v2979
  %v3048 = vsel %vm3013, %v2977, %v2978
  %v3049 = vsel %vm3013, %v2976, %v2977
  %v3050 = vsel %vm3013, %v2975, %v2976
  %v3051 = vsel %vm3013, %v2974, %v2975
  %v3052 = vsel %vm3013, %v2973, %v2974
  %v3053 = vsel %vm3013, %v2972, %v2973
  %v3054 = vsel %vm3013, %v2971, %v2972
  %v3055 = vsel %vm3013, %v2970, %v2971
  %v3056 = vsel %vm3013, %v2969, %v2970
  %v3057 = vsel %vm3013, %v2968, %v2969
  %v3058 = vsel %vm3013, %v2967, %v2968
  %v3059 = vsel %vm3013, %v2966, %v2967
  %v3060 = vsel %vm3013, %v2965, %v2966
  %v3061 = vsel %vm3013, %v2964, %v2965
  %v3062 = vsel %vm3013, %v3012, %v2964
  %v3063 = vsub.f32 1.0, %v167
  %v3064 = vsub.f32 1.0, %v168
  %v3065 = vsub.f32 1.0, %v169
  %v3066 = vsub.f32 1.0, %v170
  %v3067 = vsub.f32 1.0, %v171
  %v3068 = vsub.f32 1.0, %v172
  %v3069 = vsub.f32 1.0, %v173
  %v3070 = vsub.f32 1.0, %v174
  %v3071 = vsub.f32 1.0, %v175
  %v3072 = vsub.f32 1.0, %v176
  %v3073 = vsub.f32 1.0, %v177
  %v3074 = vsub.f32 1.0, %v178
  %v3075 = vsub.f32 1.0, %v179
  %v3076 = vsub.f32 1.0, %v180
  %v3077 = vsub.f32 1.0, %v181
  %v3078 = vsub.f32 1.0, %v182
  %v3079 = vsub.f32 1.0, %v183
  %v3080 = vsub.f32 1.0, %v184
  %v3081 = vsub.f32 1.0, %v185
  %v3082 = vsub.f32 1.0, %v186
  %v3083 = vsub.f32 1.0, %v187
  %v3084 = vsub.f32 1.0, %v188
  %v3085 = vsub.f32 1.0, %v189
  %v3086 = vsub.f32 1.0, %v190
  %v3087 = vsub.f32 1.0, %v191
  %v3088 = vsub.f32 1.0, %v192
  %v3089 = vsub.f32 1.0, %v193
  %v3090 = vsub.f32 1.0, %v194
  %v3091 = vsub.f32 1.0, %v195
  %v3092 = vsub.f32 1.0, %v196
  %v3093 = vsub.f32 1.0, %v197
  %v3094 = vsub.f32 1.0, %v198
  %v3095 = vsub.f32 1.0, %v199
  %v3096 = vsub.f32 1.0, %v200
  %v3097 = vsub.f32 1.0, %v201
  %v3098 = vsub.f32 1.0, %v202
  %v3099 = vsub.f32 1.0, %v203
  %v3100 = vsub.f32 1.0, %v204
  %v3101 = vsub.f32 1.0, %v205
  %v3102 = vsub.f32 1.0, %v206
  %v3103 = vsub.f32 1.0, %v207
  %v3104 = vsub.f32 1.0, %v208
  %v3105 = vsub.f32 1.0, %v209
  %v3106 = vsub.f32 1.0, %v210
  %v3107 = vsub.f32 1.0, %v211
  %v3108 = vsub.f32 1.0, %v212
  %v3109 = vsub.f32 1.0, %v213
  %v3110 = vsub.f32 1.0, %v214
  %v3111 = vsub.f32 1.0, %v215
  %3113 = vset.pattern.permute.xlu0 0
  %3114 = vperm.xlu0 %3113, %v3063
  %v3115 = vpop.permute.xlu0 %3114
  %3118 = vset.pattern.permute.xlu0 0
  %3119 = vperm.xlu0 %3118, %v3064
  %v3120 = vpop.permute.xlu0 %3119
  %3123 = vset.pattern.permute.xlu0 0
  %3124 = vperm.xlu0 %3123, %v3065
  %v3125 = vpop.permute.xlu0 %3124
  %3128 = vset.pattern.permute.xlu0 0
  %3129 = vperm.xlu0 %3128, %v3066
  %v3130 = vpop.permute.xlu0 %3129
  %3133 = vset.pattern.permute.xlu0 0
  %3134 = vperm.xlu0 %3133, %v3067
  %v3135 = vpop.permute.xlu0 %3134
  %3138 = vset.pattern.permute.xlu0 0
  %3139 = vperm.xlu0 %3138, %v3068
  %v3140 = vpop.permute.xlu0 %3139
  %3143 = vset.pattern.permute.xlu0 0
  %3144 = vperm.xlu0 %3143, %v3069
  %v3145 = vpop.permute.xlu0 %3144
  %3148 = vset.pattern.permute.xlu0 0
  %3149 = vperm.xlu0 %3148, %v3070
  %v3150 = vpop.permute.xlu0 %3149
  %3153 = vset.pattern.permute.xlu0 0
  %3154 = vperm.xlu0 %3153, %v3071
  %v3155 = vpop.permute.xlu0 %3154
  %3158 = vset.pattern.permute.xlu0 0
  %3159 = vperm.xlu0 %3158, %v3072
  %v3160 = vpop.permute.xlu0 %3159
  %3163 = vset.pattern.permute.xlu0 0
  %3164 = vperm.xlu0 %3163, %v3073
  %v3165 = vpop.permute.xlu0 %3164
  %3168 = vset.pattern.permute.xlu0 0
  %3169 = vperm.xlu0 %3168, %v3074
  %v3170 = vpop.permute.xlu0 %3169
  %3173 = vset.pattern.permute.xlu0 0
  %3174 = vperm.xlu0 %3173, %v3075
  %v3175 = vpop.permute.xlu0 %3174
  %3178 = vset.pattern.permute.xlu0 0
  %3179 = vperm.xlu0 %3178, %v3076
  %v3180 = vpop.permute.xlu0 %3179
  %3183 = vset.pattern.permute.xlu0 0
  %3184 = vperm.xlu0 %3183, %v3077
  %v3185 = vpop.permute.xlu0 %3184
  %3188 = vset.pattern.permute.xlu0 0
  %3189 = vperm.xlu0 %3188, %v3078
  %v3190 = vpop.permute.xlu0 %3189
  %3193 = vset.pattern.permute.xlu0 0
  %3194 = vperm.xlu0 %3193, %v3079
  %v3195 = vpop.permute.xlu0 %3194
  %3198 = vset.pattern.permute.xlu0 0
  %3199 = vperm.xlu0 %3198, %v3080
  %v3200 = vpop.permute.xlu0 %3199
  %3203 = vset.pattern.permute.xlu0 0
  %3204 = vperm.xlu0 %3203, %v3081
  %v3205 = vpop.permute.xlu0 %3204
  %3208 = vset.pattern.permute.xlu0 0
  %3209 = vperm.xlu0 %3208, %v3082
  %v3210 = vpop.permute.xlu0 %3209
  %3213 = vset.pattern.permute.xlu0 0
  %3214 = vperm.xlu0 %3213, %v3083
  %v3215 = vpop.permute.xlu0 %3214
  %3218 = vset.pattern.permute.xlu0 0
  %3219 = vperm.xlu0 %3218, %v3084
  %v3220 = vpop.permute.xlu0 %3219
  %3223 = vset.pattern.permute.xlu0 0
  %3224 = vperm.xlu0 %3223, %v3085
  %v3225 = vpop.permute.xlu0 %3224
  %3228 = vset.pattern.permute.xlu0 0
  %3229 = vperm.xlu0 %3228, %v3086
  %v3230 = vpop.permute.xlu0 %3229
  %3233 = vset.pattern.permute.xlu0 0
  %3234 = vperm.xlu0 %3233, %v3087
  %v3235 = vpop.permute.xlu0 %3234
  %3238 = vset.pattern.permute.xlu0 0
  %3239 = vperm.xlu0 %3238, %v3088
  %v3240 = vpop.permute.xlu0 %3239
  %3243 = vset.pattern.permute.xlu0 0
  %3244 = vperm.xlu0 %3243, %v3089
  %v3245 = vpop.permute.xlu0 %3244
  %3248 = vset.pattern.permute.xlu0 0
  %3249 = vperm.xlu0 %3248, %v3090
  %v3250 = vpop.permute.xlu0 %3249
  %3253 = vset.pattern.permute.xlu0 0
  %3254 = vperm.xlu0 %3253, %v3091
  %v3255 = vpop.permute.xlu0 %3254
  %3258 = vset.pattern.permute.xlu0 0
  %3259 = vperm.xlu0 %3258, %v3092
  %v3260 = vpop.permute.xlu0 %3259
  %3263 = vset.pattern.permute.xlu0 0
  %3264 = vperm.xlu0 %3263, %v3093
  %v3265 = vpop.permute.xlu0 %3264
  %3268 = vset.pattern.permute.xlu0 0
  %3269 = vperm.xlu0 %3268, %v3094
  %v3270 = vpop.permute.xlu0 %3269
  %3273 = vset.pattern.permute.xlu0 0
  %3274 = vperm.xlu0 %3273, %v3095
  %v3275 = vpop.permute.xlu0 %3274
  %3278 = vset.pattern.permute.xlu0 0
  %3279 = vperm.xlu0 %3278, %v3096
  %v3280 = vpop.permute.xlu0 %3279
  %3283 = vset.pattern.permute.xlu0 0
  %3284 = vperm.xlu0 %3283, %v3097
  %v3285 = vpop.permute.xlu0 %3284
  %3288 = vset.pattern.permute.xlu0 0
  %3289 = vperm.xlu0 %3288, %v3098
  %v3290 = vpop.permute.xlu0 %3289
  %3293 = vset.pattern.permute.xlu0 0
  %3294 = vperm.xlu0 %3293, %v3099
  %v3295 = vpop.permute.xlu0 %3294
  %3298 = vset.pattern.permute.xlu0 0
  %3299 = vperm.xlu0 %3298, %v3100
  %v3300 = vpop.permute.xlu0 %3299
  %3303 = vset.pattern.permute.xlu0 0
  %3304 = vperm.xlu0 %3303, %v3101
  %v3305 = vpop.permute.xlu0 %3304
  %3308 = vset.pattern.permute.xlu0 0
  %3309 = vperm.xlu0 %3308, %v3102
  %v3310 = vpop.permute.xlu0 %3309
  %3313 = vset.pattern.permute.xlu0 0
  %3314 = vperm.xlu0 %3313, %v3103
  %v3315 = vpop.permute.xlu0 %3314
  %3318 = vset.pattern.permute.xlu0 0
  %3319 = vperm.xlu0 %3318, %v3104
  %v3320 = vpop.permute.xlu0 %3319
  %3323 = vset.pattern.permute.xlu0 0
  %3324 = vperm.xlu0 %3323, %v3105
  %v3325 = vpop.permute.xlu0 %3324
  %3328 = vset.pattern.permute.xlu0 0
  %3329 = vperm.xlu0 %3328, %v3106
  %v3330 = vpop.permute.xlu0 %3329
  %3333 = vset.pattern.permute.xlu0 0
  %3334 = vperm.xlu0 %3333, %v3107
  %v3335 = vpop.permute.xlu0 %3334
  %3338 = vset.pattern.permute.xlu0 0
  %3339 = vperm.xlu0 %3338, %v3108
  %v3340 = vpop.permute.xlu0 %3339
  %3343 = vset.pattern.permute.xlu0 0
  %3344 = vperm.xlu0 %3343, %v3109
  %v3345 = vpop.permute.xlu0 %3344
  %3348 = vset.pattern.permute.xlu0 0
  %3349 = vperm.xlu0 %3348, %v3110
  %v3350 = vpop.permute.xlu0 %3349
  %3353 = vset.pattern.permute.xlu0 0
  %3354 = vperm.xlu0 %3353, %v3111
  %v3355 = vpop.permute.xlu0 %3354
  %v3357 = vmul.f32 %v3014, %v3115
  %v3358 = vmul.f32 %v3062, %v3120
  %v3359 = vmul.f32 %v3061, %v3125
  %v3360 = vmul.f32 %v3060, %v3130
  %v3361 = vmul.f32 %v3059, %v3135
  %v3362 = vmul.f32 %v3058, %v3140
  %v3363 = vmul.f32 %v3057, %v3145
  %v3364 = vmul.f32 %v3056, %v3150
  %v3365 = vmul.f32 %v3055, %v3155
  %v3366 = vmul.f32 %v3054, %v3160
  %v3367 = vmul.f32 %v3053, %v3165
  %v3368 = vmul.f32 %v3052, %v3170
  %v3369 = vmul.f32 %v3051, %v3175
  %v3370 = vmul.f32 %v3050, %v3180
  %v3371 = vmul.f32 %v3049, %v3185
  %v3372 = vmul.f32 %v3048, %v3190
  %v3373 = vmul.f32 %v3047, %v3195
  %v3374 = vmul.f32 %v3046, %v3200
  %v3375 = vmul.f32 %v3045, %v3205
  %v3376 = vmul.f32 %v3044, %v3210
  %v3377 = vmul.f32 %v3043, %v3215
  %v3378 = vmul.f32 %v3042, %v3220
  %v3379 = vmul.f32 %v3041, %v3225
  %v3380 = vmul.f32 %v3040, %v3230
  %v3381 = vmul.f32 %v3039, %v3235
  %v3382 = vmul.f32 %v3038, %v3240
  %v3383 = vmul.f32 %v3037, %v3245
  %v3384 = vmul.f32 %v3036, %v3250
  %v3385 = vmul.f32 %v3035, %v3255
  %v3386 = vmul.f32 %v3034, %v3260
  %v3387 = vmul.f32 %v3033, %v3265
  %v3388 = vmul.f32 %v3032, %v3270
  %v3389 = vmul.f32 %v3031, %v3275
  %v3390 = vmul.f32 %v3030, %v3280
  %v3391 = vmul.f32 %v3029, %v3285
  %v3392 = vmul.f32 %v3028, %v3290
  %v3393 = vmul.f32 %v3027, %v3295
  %v3394 = vmul.f32 %v3026, %v3300
  %v3395 = vmul.f32 %v3025, %v3305
  %v3396 = vmul.f32 %v3024, %v3310
  %v3397 = vmul.f32 %v3023, %v3315
  %v3398 = vmul.f32 %v3022, %v3320
  %v3399 = vmul.f32 %v3021, %v3325
  %v3400 = vmul.f32 %v3020, %v3330
  %v3401 = vmul.f32 %v3019, %v3335
  %v3402 = vmul.f32 %v3018, %v3340
  %v3403 = vmul.f32 %v3017, %v3345
  %v3404 = vmul.f32 %v3016, %v3350
  %v3405 = vmul.f32 %v3015, %v3355
  %v3406 = vrot.slane %v2915, 6
  %v3407 = vrot.slane %v2916, 6
  %v3408 = vrot.slane %v2917, 6
  %v3409 = vrot.slane %v2918, 6
  %v3410 = vrot.slane %v2919, 6
  %v3411 = vrot.slane %v2920, 6
  %v3412 = vrot.slane %v2921, 6
  %v3413 = vrot.slane %v2922, 6
  %v3414 = vrot.slane %v2923, 6
  %v3415 = vrot.slane %v2924, 6
  %v3416 = vrot.slane %v2925, 6
  %v3417 = vrot.slane %v2926, 6
  %v3418 = vrot.slane %v2927, 6
  %v3419 = vrot.slane %v2928, 6
  %v3420 = vrot.slane %v2929, 6
  %v3421 = vrot.slane %v2930, 6
  %v3422 = vrot.slane %v2931, 6
  %v3423 = vrot.slane %v2932, 6
  %v3424 = vrot.slane %v2933, 6
  %v3425 = vrot.slane %v2934, 6
  %v3426 = vrot.slane %v2935, 6
  %v3427 = vrot.slane %v2936, 6
  %v3428 = vrot.slane %v2937, 6
  %v3429 = vrot.slane %v2938, 6
  %v3430 = vrot.slane %v2939, 6
  %v3431 = vrot.slane %v2940, 6
  %v3432 = vrot.slane %v2941, 6
  %v3433 = vrot.slane %v2942, 6
  %v3434 = vrot.slane %v2943, 6
  %v3435 = vrot.slane %v2944, 6
  %v3436 = vrot.slane %v2945, 6
  %v3437 = vrot.slane %v2946, 6
  %v3438 = vrot.slane %v2947, 6
  %v3439 = vrot.slane %v2948, 6
  %v3440 = vrot.slane %v2949, 6
  %v3441 = vrot.slane %v2950, 6
  %v3442 = vrot.slane %v2951, 6
  %v3443 = vrot.slane %v2952, 6
  %v3444 = vrot.slane %v2953, 6
  %v3445 = vrot.slane %v2954, 6
  %v3446 = vrot.slane %v2955, 6
  %v3447 = vrot.slane %v2956, 6
  %v3448 = vrot.slane %v2957, 6
  %v3449 = vrot.slane %v2958, 6
  %v3450 = vrot.slane %v2959, 6
  %v3451 = vrot.slane %v2960, 6
  %v3452 = vrot.slane %v2961, 6
  %v3453 = vrot.slane %v2962, 6
  %v3454 = vrot.slane %v2963, 6
  %vm3455 = vcmp.lt.s32.totalorder %v266, 2
  %v3456 = vsel %vm3455, %v3453, %v3454
  %v3457 = vsel %vm3455, %v3452, %v3453
  %v3458 = vsel %vm3455, %v3451, %v3452
  %v3459 = vsel %vm3455, %v3450, %v3451
  %v3460 = vsel %vm3455, %v3449, %v3450
  %v3461 = vsel %vm3455, %v3448, %v3449
  %v3462 = vsel %vm3455, %v3447, %v3448
  %v3463 = vsel %vm3455, %v3446, %v3447
  %v3464 = vsel %vm3455, %v3445, %v3446
  %v3465 = vsel %vm3455, %v3444, %v3445
  %v3466 = vsel %vm3455, %v3443, %v3444
  %v3467 = vsel %vm3455, %v3442, %v3443
  %v3468 = vsel %vm3455, %v3441, %v3442
  %v3469 = vsel %vm3455, %v3440, %v3441
  %v3470 = vsel %vm3455, %v3439, %v3440
  %v3471 = vsel %vm3455, %v3438, %v3439
  %v3472 = vsel %vm3455, %v3437, %v3438
  %v3473 = vsel %vm3455, %v3436, %v3437
  %v3474 = vsel %vm3455, %v3435, %v3436
  %v3475 = vsel %vm3455, %v3434, %v3435
  %v3476 = vsel %vm3455, %v3433, %v3434
  %v3477 = vsel %vm3455, %v3432, %v3433
  %v3478 = vsel %vm3455, %v3431, %v3432
  %v3479 = vsel %vm3455, %v3430, %v3431
  %v3480 = vsel %vm3455, %v3429, %v3430
  %v3481 = vsel %vm3455, %v3428, %v3429
  %v3482 = vsel %vm3455, %v3427, %v3428
  %v3483 = vsel %vm3455, %v3426, %v3427
  %v3484 = vsel %vm3455, %v3425, %v3426
  %v3485 = vsel %vm3455, %v3424, %v3425
  %v3486 = vsel %vm3455, %v3423, %v3424
  %v3487 = vsel %vm3455, %v3422, %v3423
  %v3488 = vsel %vm3455, %v3421, %v3422
  %v3489 = vsel %vm3455, %v3420, %v3421
  %v3490 = vsel %vm3455, %v3419, %v3420
  %v3491 = vsel %vm3455, %v3418, %v3419
  %v3492 = vsel %vm3455, %v3417, %v3418
  %v3493 = vsel %vm3455, %v3416, %v3417
  %v3494 = vsel %vm3455, %v3415, %v3416
  %v3495 = vsel %vm3455, %v3414, %v3415
  %v3496 = vsel %vm3455, %v3413, %v3414
  %v3497 = vsel %vm3455, %v3412, %v3413
  %v3498 = vsel %vm3455, %v3411, %v3412
  %v3499 = vsel %vm3455, %v3410, %v3411
  %v3500 = vsel %vm3455, %v3409, %v3410
  %v3501 = vsel %vm3455, %v3408, %v3409
  %v3502 = vsel %vm3455, %v3407, %v3408
  %v3503 = vsel %vm3455, %v3406, %v3407
  %v3504 = vsel %vm3455, %v3454, %v3406
  %3506 = vset.pattern.permute.xlu0 0
  %3507 = vperm.xlu0 %3506, %v167
  %v3508 = vpop.permute.xlu0 %3507
  %3511 = vset.pattern.permute.xlu0 0
  %3512 = vperm.xlu0 %3511, %v168
  %v3513 = vpop.permute.xlu0 %3512
  %3516 = vset.pattern.permute.xlu0 0
  %3517 = vperm.xlu0 %3516, %v169
  %v3518 = vpop.permute.xlu0 %3517
  %3521 = vset.pattern.permute.xlu0 0
  %3522 = vperm.xlu0 %3521, %v170
  %v3523 = vpop.permute.xlu0 %3522
  %3526 = vset.pattern.permute.xlu0 0
  %3527 = vperm.xlu0 %3526, %v171
  %v3528 = vpop.permute.xlu0 %3527
  %3531 = vset.pattern.permute.xlu0 0
  %3532 = vperm.xlu0 %3531, %v172
  %v3533 = vpop.permute.xlu0 %3532
  %3536 = vset.pattern.permute.xlu0 0
  %3537 = vperm.xlu0 %3536, %v173
  %v3538 = vpop.permute.xlu0 %3537
  %3541 = vset.pattern.permute.xlu0 0
  %3542 = vperm.xlu0 %3541, %v174
  %v3543 = vpop.permute.xlu0 %3542
  %3546 = vset.pattern.permute.xlu0 0
  %3547 = vperm.xlu0 %3546, %v175
  %v3548 = vpop.permute.xlu0 %3547
  %3551 = vset.pattern.permute.xlu0 0
  %3552 = vperm.xlu0 %3551, %v176
  %v3553 = vpop.permute.xlu0 %3552
  %3556 = vset.pattern.permute.xlu0 0
  %3557 = vperm.xlu0 %3556, %v177
  %v3558 = vpop.permute.xlu0 %3557
  %3561 = vset.pattern.permute.xlu0 0
  %3562 = vperm.xlu0 %3561, %v178
  %v3563 = vpop.permute.xlu0 %3562
  %3566 = vset.pattern.permute.xlu0 0
  %3567 = vperm.xlu0 %3566, %v179
  %v3568 = vpop.permute.xlu0 %3567
  %3571 = vset.pattern.permute.xlu0 0
  %3572 = vperm.xlu0 %3571, %v180
  %v3573 = vpop.permute.xlu0 %3572
  %3576 = vset.pattern.permute.xlu0 0
  %3577 = vperm.xlu0 %3576, %v181
  %v3578 = vpop.permute.xlu0 %3577
  %3581 = vset.pattern.permute.xlu0 0
  %3582 = vperm.xlu0 %3581, %v182
  %v3583 = vpop.permute.xlu0 %3582
  %3586 = vset.pattern.permute.xlu0 0
  %3587 = vperm.xlu0 %3586, %v183
  %v3588 = vpop.permute.xlu0 %3587
  %3591 = vset.pattern.permute.xlu0 0
  %3592 = vperm.xlu0 %3591, %v184
  %v3593 = vpop.permute.xlu0 %3592
  %3596 = vset.pattern.permute.xlu0 0
  %3597 = vperm.xlu0 %3596, %v185
  %v3598 = vpop.permute.xlu0 %3597
  %3601 = vset.pattern.permute.xlu0 0
  %3602 = vperm.xlu0 %3601, %v186
  %v3603 = vpop.permute.xlu0 %3602
  %3606 = vset.pattern.permute.xlu0 0
  %3607 = vperm.xlu0 %3606, %v187
  %v3608 = vpop.permute.xlu0 %3607
  %3611 = vset.pattern.permute.xlu0 0
  %3612 = vperm.xlu0 %3611, %v188
  %v3613 = vpop.permute.xlu0 %3612
  %3616 = vset.pattern.permute.xlu0 0
  %3617 = vperm.xlu0 %3616, %v189
  %v3618 = vpop.permute.xlu0 %3617
  %3621 = vset.pattern.permute.xlu0 0
  %3622 = vperm.xlu0 %3621, %v190
  %v3623 = vpop.permute.xlu0 %3622
  %3626 = vset.pattern.permute.xlu0 0
  %3627 = vperm.xlu0 %3626, %v191
  %v3628 = vpop.permute.xlu0 %3627
  %3631 = vset.pattern.permute.xlu0 0
  %3632 = vperm.xlu0 %3631, %v192
  %v3633 = vpop.permute.xlu0 %3632
  %3636 = vset.pattern.permute.xlu0 0
  %3637 = vperm.xlu0 %3636, %v193
  %v3638 = vpop.permute.xlu0 %3637
  %3641 = vset.pattern.permute.xlu0 0
  %3642 = vperm.xlu0 %3641, %v194
  %v3643 = vpop.permute.xlu0 %3642
  %3646 = vset.pattern.permute.xlu0 0
  %3647 = vperm.xlu0 %3646, %v195
  %v3648 = vpop.permute.xlu0 %3647
  %3651 = vset.pattern.permute.xlu0 0
  %3652 = vperm.xlu0 %3651, %v196
  %v3653 = vpop.permute.xlu0 %3652
  %3656 = vset.pattern.permute.xlu0 0
  %3657 = vperm.xlu0 %3656, %v197
  %v3658 = vpop.permute.xlu0 %3657
  %3661 = vset.pattern.permute.xlu0 0
  %3662 = vperm.xlu0 %3661, %v198
  %v3663 = vpop.permute.xlu0 %3662
  %3666 = vset.pattern.permute.xlu0 0
  %3667 = vperm.xlu0 %3666, %v199
  %v3668 = vpop.permute.xlu0 %3667
  %3671 = vset.pattern.permute.xlu0 0
  %3672 = vperm.xlu0 %3671, %v200
  %v3673 = vpop.permute.xlu0 %3672
  %3676 = vset.pattern.permute.xlu0 0
  %3677 = vperm.xlu0 %3676, %v201
  %v3678 = vpop.permute.xlu0 %3677
  %3681 = vset.pattern.permute.xlu0 0
  %3682 = vperm.xlu0 %3681, %v202
  %v3683 = vpop.permute.xlu0 %3682
  %3686 = vset.pattern.permute.xlu0 0
  %3687 = vperm.xlu0 %3686, %v203
  %v3688 = vpop.permute.xlu0 %3687
  %3691 = vset.pattern.permute.xlu0 0
  %3692 = vperm.xlu0 %3691, %v204
  %v3693 = vpop.permute.xlu0 %3692
  %3696 = vset.pattern.permute.xlu0 0
  %3697 = vperm.xlu0 %3696, %v205
  %v3698 = vpop.permute.xlu0 %3697
  %3701 = vset.pattern.permute.xlu0 0
  %3702 = vperm.xlu0 %3701, %v206
  %v3703 = vpop.permute.xlu0 %3702
  %3706 = vset.pattern.permute.xlu0 0
  %3707 = vperm.xlu0 %3706, %v207
  %v3708 = vpop.permute.xlu0 %3707
  %3711 = vset.pattern.permute.xlu0 0
  %3712 = vperm.xlu0 %3711, %v208
  %v3713 = vpop.permute.xlu0 %3712
  %3716 = vset.pattern.permute.xlu0 0
  %3717 = vperm.xlu0 %3716, %v209
  %v3718 = vpop.permute.xlu0 %3717
  %3721 = vset.pattern.permute.xlu0 0
  %3722 = vperm.xlu0 %3721, %v210
  %v3723 = vpop.permute.xlu0 %3722
  %3726 = vset.pattern.permute.xlu0 0
  %3727 = vperm.xlu0 %3726, %v211
  %v3728 = vpop.permute.xlu0 %3727
  %3731 = vset.pattern.permute.xlu0 0
  %3732 = vperm.xlu0 %3731, %v212
  %v3733 = vpop.permute.xlu0 %3732
  %3736 = vset.pattern.permute.xlu0 0
  %3737 = vperm.xlu0 %3736, %v213
  %v3738 = vpop.permute.xlu0 %3737
  %3741 = vset.pattern.permute.xlu0 0
  %3742 = vperm.xlu0 %3741, %v214
  %v3743 = vpop.permute.xlu0 %3742
  %3746 = vset.pattern.permute.xlu0 0
  %3747 = vperm.xlu0 %3746, %v215
  %v3748 = vpop.permute.xlu0 %3747
  %v3750 = vmul.f32 %v3481, %v3508
  %v3751 = vmul.f32 %v3480, %v3513
  %v3752 = vmul.f32 %v3479, %v3518
  %v3753 = vmul.f32 %v3478, %v3523
  %v3754 = vmul.f32 %v3477, %v3528
  %v3755 = vmul.f32 %v3476, %v3533
  %v3756 = vmul.f32 %v3475, %v3538
  %v3757 = vmul.f32 %v3474, %v3543
  %v3758 = vmul.f32 %v3473, %v3548
  %v3759 = vmul.f32 %v3472, %v3553
  %v3760 = vmul.f32 %v3471, %v3558
  %v3761 = vmul.f32 %v3470, %v3563
  %v3762 = vmul.f32 %v3469, %v3568
  %v3763 = vmul.f32 %v3468, %v3573
  %v3764 = vmul.f32 %v3467, %v3578
  %v3765 = vmul.f32 %v3466, %v3583
  %v3766 = vmul.f32 %v3465, %v3588
  %v3767 = vmul.f32 %v3464, %v3593
  %v3768 = vmul.f32 %v3463, %v3598
  %v3769 = vmul.f32 %v3462, %v3603
  %v3770 = vmul.f32 %v3461, %v3608
  %v3771 = vmul.f32 %v3460, %v3613
  %v3772 = vmul.f32 %v3459, %v3618
  %v3773 = vmul.f32 %v3458, %v3623
  %v3774 = vmul.f32 %v3457, %v3628
  %v3775 = vmul.f32 %v3456, %v3633
  %v3776 = vmul.f32 %v3504, %v3638
  %v3777 = vmul.f32 %v3503, %v3643
  %v3778 = vmul.f32 %v3502, %v3648
  %v3779 = vmul.f32 %v3501, %v3653
  %v3780 = vmul.f32 %v3500, %v3658
  %v3781 = vmul.f32 %v3499, %v3663
  %v3782 = vmul.f32 %v3498, %v3668
  %v3783 = vmul.f32 %v3497, %v3673
  %v3784 = vmul.f32 %v3496, %v3678
  %v3785 = vmul.f32 %v3495, %v3683
  %v3786 = vmul.f32 %v3494, %v3688
  %v3787 = vmul.f32 %v3493, %v3693
  %v3788 = vmul.f32 %v3492, %v3698
  %v3789 = vmul.f32 %v3491, %v3703
  %v3790 = vmul.f32 %v3490, %v3708
  %v3791 = vmul.f32 %v3489, %v3713
  %v3792 = vmul.f32 %v3488, %v3718
  %v3793 = vmul.f32 %v3487, %v3723
  %v3794 = vmul.f32 %v3486, %v3728
  %v3795 = vmul.f32 %v3485, %v3733
  %v3796 = vmul.f32 %v3484, %v3738
  %v3797 = vmul.f32 %v3483, %v3743
  %v3798 = vmul.f32 %v3482, %v3748
  %v3799 = vadd.f32 %v3357, %v3750
  %v3800 = vadd.f32 %v3358, %v3751
  %v3801 = vadd.f32 %v3359, %v3752
  %v3802 = vadd.f32 %v3360, %v3753
  %v3803 = vadd.f32 %v3361, %v3754
  %v3804 = vadd.f32 %v3362, %v3755
  %v3805 = vadd.f32 %v3363, %v3756
  %v3806 = vadd.f32 %v3364, %v3757
  %v3807 = vadd.f32 %v3365, %v3758
  %v3808 = vadd.f32 %v3366, %v3759
  %v3809 = vadd.f32 %v3367, %v3760
  %v3810 = vadd.f32 %v3368, %v3761
  %v3811 = vadd.f32 %v3369, %v3762
  %v3812 = vadd.f32 %v3370, %v3763
  %v3813 = vadd.f32 %v3371, %v3764
  %v3814 = vadd.f32 %v3372, %v3765
  %v3815 = vadd.f32 %v3373, %v3766
  %v3816 = vadd.f32 %v3374, %v3767
  %v3817 = vadd.f32 %v3375, %v3768
  %v3818 = vadd.f32 %v3376, %v3769
  %v3819 = vadd.f32 %v3377, %v3770
  %v3820 = vadd.f32 %v3378, %v3771
  %v3821 = vadd.f32 %v3379, %v3772
  %v3822 = vadd.f32 %v3380, %v3773
  %v3823 = vadd.f32 %v3381, %v3774
  %v3824 = vadd.f32 %v3382, %v3775
  %v3825 = vadd.f32 %v3383, %v3776
  %v3826 = vadd.f32 %v3384, %v3777
  %v3827 = vadd.f32 %v3385, %v3778
  %v3828 = vadd.f32 %v3386, %v3779
  %v3829 = vadd.f32 %v3387, %v3780
  %v3830 = vadd.f32 %v3388, %v3781
  %v3831 = vadd.f32 %v3389, %v3782
  %v3832 = vadd.f32 %v3390, %v3783
  %v3833 = vadd.f32 %v3391, %v3784
  %v3834 = vadd.f32 %v3392, %v3785
  %v3835 = vadd.f32 %v3393, %v3786
  %v3836 = vadd.f32 %v3394, %v3787
  %v3837 = vadd.f32 %v3395, %v3788
  %v3838 = vadd.f32 %v3396, %v3789
  %v3839 = vadd.f32 %v3397, %v3790
  %v3840 = vadd.f32 %v3398, %v3791
  %v3841 = vadd.f32 %v3399, %v3792
  %v3842 = vadd.f32 %v3400, %v3793
  %v3843 = vadd.f32 %v3401, %v3794
  %v3844 = vadd.f32 %v3402, %v3795
  %v3845 = vadd.f32 %v3403, %v3796
  %v3846 = vadd.f32 %v3404, %v3797
  %v3847 = vadd.f32 %v3405, %v3798
  %3848 = vst [vmem:[%s5] sm:$0xff] %v3799
  %3849 = vst [vmem:[%s5 + $0x8] sm:$0xff] %v3800
  %3850 = vst [vmem:[%s5 + $0x10] sm:$0xff] %v3801
  %3851 = vst [vmem:[%s5 + $0x18] sm:$0xff] %v3802
  %3852 = vst [vmem:[%s5 + $0x20] sm:$0xff] %v3803
  %3853 = vst [vmem:[%s5 + $0x28] sm:$0xff] %v3804
  %3854 = vst [vmem:[%s5 + $0x30] sm:$0xff] %v3805
  %3855 = vst [vmem:[%s5 + $0x38] sm:$0xff] %v3806
  %3856 = vst [vmem:[%s5 + $0x40] sm:$0xff] %v3807
  %3857 = vst [vmem:[%s5 + $0x48] sm:$0xff] %v3808
  %3858 = vst [vmem:[%s5 + $0x50] sm:$0xff] %v3809
  %3859 = vst [vmem:[%s5 + $0x58] sm:$0xff] %v3810
  %3860 = vst [vmem:[%s5 + $0x60] sm:$0xff] %v3811
  %3861 = vst [vmem:[%s5 + $0x68] sm:$0xff] %v3812
  %3862 = vst [vmem:[%s5 + $0x70] sm:$0xff] %v3813
  %3863 = vst [vmem:[%s5 + $0x78] sm:$0xff] %v3814
  %3864 = vst [vmem:[%s5 + $0x80] sm:$0xff] %v3815
  %3865 = vst [vmem:[%s5 + $0x88] sm:$0xff] %v3816
  %3866 = vst [vmem:[%s5 + $0x90] sm:$0xff] %v3817
  %3867 = vst [vmem:[%s5 + $0x98] sm:$0xff] %v3818
  %3868 = vst [vmem:[%s5 + $0xa0] sm:$0xff] %v3819
  %3869 = vst [vmem:[%s5 + $0xa8] sm:$0xff] %v3820
  %3870 = vst [vmem:[%s5 + $0xb0] sm:$0xff] %v3821
  %3871 = vst [vmem:[%s5 + $0xb8] sm:$0xff] %v3822
  %3872 = vst [vmem:[%s5 + $0xc0] sm:$0xff] %v3823
  %3873 = vst [vmem:[%s5 + $0xc8] sm:$0xff] %v3824
  %3874 = vst [vmem:[%s5 + $0xd0] sm:$0xff] %v3825
  %3875 = vst [vmem:[%s5 + $0xd8] sm:$0xff] %v3826
  %3876 = vst [vmem:[%s5 + $0xe0] sm:$0xff] %v3827
  %3877 = vst [vmem:[%s5 + $0xe8] sm:$0xff] %v3828
  %3878 = vst [vmem:[%s5 + $0xf0] sm:$0xff] %v3829
  %3879 = vst [vmem:[%s5 + $0xf8] sm:$0xff] %v3830
  %3880 = vst [vmem:[%s5 + $0x100] sm:$0xff] %v3831
  %3881 = vst [vmem:[%s5 + $0x108] sm:$0xff] %v3832
  %3882 = vst [vmem:[%s5 + $0x110] sm:$0xff] %v3833
  %3883 = vst [vmem:[%s5 + $0x118] sm:$0xff] %v3834
  %3884 = vst [vmem:[%s5 + $0x120] sm:$0xff] %v3835
  %3885 = vst [vmem:[%s5 + $0x128] sm:$0xff] %v3836
  %3886 = vst [vmem:[%s5 + $0x130] sm:$0xff] %v3837
  %3887 = vst [vmem:[%s5 + $0x138] sm:$0xff] %v3838
  %3888 = vst [vmem:[%s5 + $0x140] sm:$0xff] %v3839
  %3889 = vst [vmem:[%s5 + $0x148] sm:$0xff] %v3840
  %3890 = vst [vmem:[%s5 + $0x150] sm:$0xff] %v3841
  %3891 = vst [vmem:[%s5 + $0x158] sm:$0xff] %v3842
  %3892 = vst [vmem:[%s5 + $0x160] sm:$0xff] %v3843
  %3893 = vst [vmem:[%s5 + $0x168] sm:$0xff] %v3844
  %3894 = vst [vmem:[%s5 + $0x170] sm:$0xff] %v3845
  %3895 = vst [vmem:[%s5 + $0x178] sm:$0xff] %v3846
  %3896 = vst [vmem:[%s5 + $0x180] sm:$0xff] %v3847
  // Predicated region
  $region22: #{kernel_generated_4_forward.1} parent=0 // pred_check
    _
  $region23: #{kernel_generated_4_forward.1} parent=0 // pred_check_branch
    %3898 = sbr.rel (0) target = $region25
  $region24: #{kernel_generated_4_forward.1} parent=0 // pred_region
    _
  $region25: #{kernel_generated_4_forward.1} parent=0 // pred_fallthru
    _
  // Predicated region
  $region26: #{kernel_generated_4_forward.1} parent=0 // pred_check
    _
  $region27: #{kernel_generated_4_forward.1} parent=0 // pred_check_branch
    %3900 = sbr.rel (0) target = $region29
  $region28: #{kernel_generated_4_forward.1} parent=0 // pred_region
    _
  $region29: #{kernel_generated_4_forward.1} parent=0 // pred_fallthru
    _

</llo_original>
